<compile_context>
chip_gen: v6e
topology: v6e:2x2x1
jax: 0.10.0
libtpu: 0.0.40
codegen_flags: <defaults>
</compile_context>

<pallas_src>
import jax
import jax.numpy as jnp
from jax.experimental import pallas as pl
from jax.experimental.pallas import tpu as pltpu

# Flash-attention style "NT" contraction: contract the trailing dim of both
# operands -> out[m, n] = sum_k lhs[m, k] * rhs[n, k].
_NT_DIMS = (((1,), (1,)), ((), ()))


def _default_compute_dtype():
    """bf16 hidden compute on v6e/v7x (bf16 EUP/VPU); f32 on v5e and older."""
    try:
        kind = jax.devices()[0].device_kind.lower()
    except Exception:
        return jnp.float32
    if any(v in kind for v in ("v2", "v3", "v4", "v5")):
        return jnp.float32
    return jnp.bfloat16


def make_dnn_kernel(dim_in, n_node, dim_out, n_layer, compute_dtype):
    """Full MLP forward on one batch tile; batch on the lane axis.

    Ref order:
        x  (tm, dim_in)                 float32-castable input tile
        a0 (n_node, dim_in + 1)         [W0 * inv_range | fused b0], f32
        [wh (n_layer, n_node, n_node)   stacked hidden weights, compute_dtype
         bh (n_layer, n_node, 1)]       stacked hidden biases, f32
        al (n_node + 1, dim_out)        [W_last ; b_last], f32
        out (dim_out, tm)
    """

    def kernel(*refs):
        x_ref, a0_ref = refs[0], refs[1]
        al_ref, o_ref = refs[-2], refs[-1]
        wh_ref = refs[2] if n_layer >= 1 else None
        bh_ref = refs[3] if n_layer >= 1 else None

        x = x_ref[...].astype(jnp.float32)          # (tm, dim_in), batch on sublanes
        a0 = a0_ref[...]                            # (n_node, dim_in+1), f32

        # ---- layer 0 (input normalization pre-folded into a0) ----------------
        # The K=dim_in contraction doubles as the batch->lane re-orientation:
        # the result is (n_node, tm) with the batch on lanes.  K is tiny, but
        # this single MXU pass co-issues under the EUP/overhead-bound schedule
        # and avoids materializing a (tm, dim_in) transpose in the kernel.
        z = jax.lax.dot_general(a0[:, :dim_in], x, _NT_DIMS,
                                preferred_element_type=jnp.float32)
        z = z + a0[:, dim_in:dim_in + 1]            # (n_node, tm)
        h = jnp.tanh(z.astype(compute_dtype))       # bf16 tanh on v6e/v7x

        # ---- hidden layers (n_node x n_node matmuls, tanh) --------------------
        for li in range(n_layer):
            w = wh_ref[li]                          # (n_node, n_node), compute_dtype
            b = bh_ref[li]                          # (n_node, 1), f32
            z = jnp.dot(w, h, preferred_element_type=jnp.float32) + b
            h = jnp.tanh(z.astype(compute_dtype))

        # ---- final layer: tiny dim_out -> VPU multiply + XLU sublane-reduce ---
        # (instead of a 1-row MXU pass); no activation, kept in f32.
        al = al_ref[...]                            # (n_node+1, dim_out), f32
        hf = h.astype(jnp.float32)                  # (n_node, tm)
        cols = []
        for j in range(dim_out):
            wj = al[:n_node, j:j + 1]               # (n_node, 1)
            yj = jnp.sum(wj * hf, axis=0, keepdims=True) + al[n_node:, j:j + 1]
            cols.append(yj)                         # (1, tm)
        y = cols[0] if dim_out == 1 else jnp.concatenate(cols, axis=0)
        o_ref[...] = y.astype(o_ref.dtype)

    return kernel


def dnn_forward(x, lb, ub, weights, biases, *, tm=2048, compute_dtype=None):
    """Full MLP forward pass in a single Pallas kernel.

    x       : (N, dim_in) float32 collocation points (passed untransposed)
    lb, ub  : (dim_in,)   float32 bounds (folded into layer-0 params here)
    weights : list of (in_i, out_i) float32 arrays  (layer is h @ W + b)
    biases  : list of (out_i,)      float32 arrays
    tm      : batch tile (lane-axis tile), multiple of 128; swept parameter.
    compute_dtype : dtype for hidden matmuls/tanh; None -> picked from hardware.
    """
    N, dim_in = x.shape
    n_linear = len(weights)
    assert n_linear >= 2, "module always has first + n_layer hidden + last layers"
    n_layer = n_linear - 2
    n_node = weights[0].shape[1]
    dim_out = weights[-1].shape[1]

    if compute_dtype is None:
        compute_dtype = _default_compute_dtype()

    # Keep tm a multiple of 128 (lane-dense output stores) and don't exceed the
    # (128-rounded) batch.  Ragged last blocks are handled by Pallas masking.
    tm = max(128, (int(tm) // 128) * 128)
    tm = min(tm, pl.cdiv(N, 128) * 128)
    n_tiles = pl.cdiv(N, tm)

    lb = jnp.asarray(lb, jnp.float32).reshape(-1)
    ub = jnp.asarray(ub, jnp.float32).reshape(-1)
    inv_range = 1.0 / (ub - lb)

    # Fold the input normalization into layer 0:
    #   W0 @ ((x - lb) * inv_range) + b0 == (W0*inv_range) @ x + (b0 - (W0*inv_range) @ lb)
    w0 = jnp.asarray(weights[0], jnp.float32).T * inv_range[None, :]      # (n_node, dim_in)
    b0 = jnp.asarray(biases[0], jnp.float32).reshape(-1, 1) - w0 @ lb.reshape(-1, 1)
    a0 = jnp.concatenate([w0, b0], axis=1)                                # (n_node, dim_in+1)

    args = [x, a0]
    in_specs = [
        pl.BlockSpec((tm, dim_in), lambda i: (i, 0)),     # x tile (only tiled input)
        pl.BlockSpec(a0.shape, lambda i: (0, 0)),         # layer-0 slab (resident)
    ]

    if n_layer >= 1:
        wh = jnp.stack([jnp.asarray(w, jnp.float32).T
                        for w in weights[1:1 + n_layer]]).astype(compute_dtype)
        bh = jnp.stack([jnp.asarray(b, jnp.float32).reshape(-1, 1)
                        for b in biases[1:1 + n_layer]])
        args += [wh, bh]
        in_specs += [pl.BlockSpec(wh.shape, lambda i: (0, 0, 0)),
                     pl.BlockSpec(bh.shape, lambda i: (0, 0, 0))]

    wl = jnp.asarray(weights[-1], jnp.float32)                            # (n_node, dim_out)
    bl = jnp.asarray(biases[-1], jnp.float32).reshape(1, -1)              # (1, dim_out)
    al = jnp.concatenate([wl, bl], axis=0)                                # (n_node+1, dim_out)
    args += [al]
    in_specs += [pl.BlockSpec(al.shape, lambda i: (0, 0))]

    out_specs = pl.BlockSpec((dim_out, tm), lambda i: (0, i))

    out = pl.pallas_call(
        make_dnn_kernel(dim_in, n_node, dim_out, n_layer, compute_dtype),
        out_shape=jax.ShapeDtypeStruct((dim_out, n_tiles * tm), jnp.float32),
        grid=(n_tiles,),
        in_specs=in_specs,
        out_specs=out_specs,
        compiler_params=pltpu.CompilerParams(dimension_semantics=("parallel",)),
    )(*args)

    # (dim_out, n_tiles*tm) -> (N, dim_out); for dim_out == 1 the transpose is a
    # trivial reshape.  Columns >= N came from masked/ragged reads and are dropped.
    return out[:, :N].T.astype(x.dtype)


def xavier_uniform(key, fan_in, fan_out):
    # torch.nn.init.xavier_uniform_ : U(-a, a), a = sqrt(6 / (fan_in + fan_out))
    bound = (6.0 / (fan_in + fan_out)) ** 0.5
    return jax.random.uniform(key, (fan_in, fan_out), jnp.float32, -bound, bound)


def init_dnn_params(key, dim_in, dim_out, n_layer, n_node):
    """Deterministic parameter init matching DNN.__init__ shapes (weights as (in, out))."""
    dims = [dim_in] + [n_node] * (n_layer + 1) + [dim_out]
    weights, biases = [], []
    for fin, fout in zip(dims[:-1], dims[1:]):
        key, sub = jax.random.split(key)
        weights.append(xavier_uniform(sub, fin, fout))
        biases.append(jnp.zeros((fout,), jnp.float32))
    return weights, biases


def dnn_reference(x, lb, ub, weights, biases):
    """Plain-JAX reference mirroring the PyTorch forward."""
    h = (x - lb[None, :]) / (ub[None, :] - lb[None, :])
    n = len(weights)
    for i, (w, b) in enumerate(zip(weights, biases)):
        h = h @ w + b[None, :]
        if i < n - 1:
            h = jnp.tanh(h)
    return h


if __name__ == "__main__":
    # Shapes consistent with the module: dim_in=2 (x, t), dim_out=1,
    # n_layer=2 hidden layers of n_node=32.  8192 collocation points with
    # tm=2048 -> a 4-step "parallel" grid (feeds both TCs on v7x, amortizes
    # per-step overhead, still tiny data).
    dim_in, dim_out, n_layer, n_node = 2, 1, 2, 32
    batch, tm = 8192, 2048

    lb = jnp.array([-1.0, 0.0], dtype=jnp.float32)   # [x_min, t_min]
    ub = jnp.array([1.0, 1.0], dtype=jnp.float32)    # [x_max, t_max]

    key = jax.random.PRNGKey(0)
    key, kx = jax.random.split(key)
    x = jax.random.uniform(kx, (batch, dim_in), jnp.float32,
                           minval=lb.min(), maxval=ub.max())

    weights, biases = init_dnn_params(key, dim_in, dim_out, n_layer, n_node)

    ref = dnn_reference(x, lb, ub, weights, biases)

    # 1) float32 everywhere (checked on every TPU generation; tolerance covers
    #    differing f32-matmul pass strategies between Mosaic and XLA).
    out_f32 = jax.block_until_ready(
        dnn_forward(x, lb, ub, weights, biases, tm=tm, compute_dtype=jnp.float32))
    assert out_f32.shape == (batch, dim_out)
    assert jnp.allclose(out_f32, ref, atol=1e-2, rtol=1e-2), "f32 kernel mismatch"

    # 2) hardware-default compute dtype (bf16 hidden path on v6e/v7x, f32 on v5e).
    out_hw = jax.block_until_ready(dnn_forward(x, lb, ub, weights, biases, tm=tm))
    cdt = _default_compute_dtype()
    tol = 1e-2 if cdt == jnp.float32 else 5e-2
    assert out_hw.shape == (batch, dim_out)
    assert jnp.allclose(out_hw, ref, atol=tol, rtol=tol), "hw-dtype kernel mismatch"

    print("KERNEL_OK")
</pallas_src>

<mosaic_0001>
module attributes {stable_mosaic.version = 11 : i64} {
  func.func @kernel(%arg0: i32, %arg1: memref<2048x2xf32, #tpu.memory_space<vmem>>, %arg2: memref<32x3xf32, #tpu.memory_space<vmem>>, %arg3: memref<2x32x32xf32, #tpu.memory_space<vmem>>, %arg4: memref<2x32x1xf32, #tpu.memory_space<vmem>>, %arg5: memref<33x1xf32, #tpu.memory_space<vmem>>, %arg6: memref<1x2048xf32, #tpu.memory_space<vmem>>) attributes {dimension_semantics = [#tpu.dimension_semantics<parallel>], iteration_bounds = array<i64: 4>, scalar_prefetch = 0 : i64, scratch_operands = 0 : i64, tpu.core_type = #tpu.core_type<tc>, window_params = [{transform_indices = @transform_0, window_bounds = array<i64: 2048, 2>}, {pipeline_mode = #tpu.pipeline_mode<synchronous>, transform_indices = @transform_1, window_bounds = array<i64: 32, 3>}, {pipeline_mode = #tpu.pipeline_mode<synchronous>, transform_indices = @transform_2, window_bounds = array<i64: 2, 32, 32>}, {pipeline_mode = #tpu.pipeline_mode<synchronous>, transform_indices = @transform_3, window_bounds = array<i64: 2, 32, 1>}, {pipeline_mode = #tpu.pipeline_mode<synchronous>, transform_indices = @transform_4, window_bounds = array<i64: 33, 1>}, {transform_indices = @transform_5, window_bounds = array<i64: 1, 2048>}]} {
    %c0 = arith.constant 0 : index
    %c0_0 = arith.constant 0 : index
    %0 = vector.load %arg1[%c0, %c0_0] : memref<2048x2xf32, #tpu.memory_space<vmem>>, vector<2048x2xf32>
    %c0_1 = arith.constant 0 : index
    %c0_2 = arith.constant 0 : index
    %1 = vector.load %arg2[%c0_1, %c0_2] : memref<32x3xf32, #tpu.memory_space<vmem>>, vector<32x3xf32>
    %2 = vector.extract_strided_slice %1 {offsets = [0, 0], sizes = [32, 2], strides = [1, 1]} : vector<32x3xf32> to vector<32x2xf32>
    %cst = arith.constant dense<0.000000e+00> : vector<32x2048xf32>
    %3 = tpu.matmul %2, %0, %cst {dimension_numbers = #tpu.dot_dimension_numbers<[1], [1], [0], [0], [0, 0, 1, 0], [], []>} : vector<32x2xf32>, vector<2048x2xf32>, vector<32x2048xf32> -> vector<32x2048xf32>
    %4 = vector.extract_strided_slice %1 {offsets = [0, 2], sizes = [32, 1], strides = [1, 1]} : vector<32x3xf32> to vector<32x1xf32>
    %5 = vector.broadcast %4 : vector<32x1xf32> to vector<32x2048xf32>
    %6 = arith.addf %3, %5 : vector<32x2048xf32>
    %7 = math.tanh %6 : vector<32x2048xf32>
    %c0_3 = arith.constant 0 : index
    %c0_4 = arith.constant 0 : index
    %c0_5 = arith.constant 0 : index
    %8 = vector.load %arg3[%c0_3, %c0_4, %c0_5] : memref<2x32x32xf32, #tpu.memory_space<vmem>>, vector<1x32x32xf32>
    %9 = vector.shape_cast %8 : vector<1x32x32xf32> to vector<32x32xf32>
    %c0_6 = arith.constant 0 : index
    %c0_7 = arith.constant 0 : index
    %c0_8 = arith.constant 0 : index
    %10 = vector.load %arg4[%c0_6, %c0_7, %c0_8] : memref<2x32x1xf32, #tpu.memory_space<vmem>>, vector<1x32x1xf32>
    %11 = vector.shape_cast %10 : vector<1x32x1xf32> to vector<32x1xf32>
    %cst_9 = arith.constant dense<0.000000e+00> : vector<32x2048xf32>
    %12 = tpu.matmul %9, %7, %cst_9 {dimension_numbers = #tpu.dot_dimension_numbers<[1], [0], [0], [1], [0, 0, 1, 1], [], []>} : vector<32x32xf32>, vector<32x2048xf32>, vector<32x2048xf32> -> vector<32x2048xf32>
    %13 = vector.broadcast %11 : vector<32x1xf32> to vector<32x2048xf32>
    %14 = arith.addf %12, %13 : vector<32x2048xf32>
    %15 = math.tanh %14 : vector<32x2048xf32>
    %c1 = arith.constant 1 : index
    %c0_10 = arith.constant 0 : index
    %c0_11 = arith.constant 0 : index
    %16 = vector.load %arg3[%c1, %c0_10, %c0_11] : memref<2x32x32xf32, #tpu.memory_space<vmem>>, vector<1x32x32xf32>
    %17 = vector.shape_cast %16 : vector<1x32x32xf32> to vector<32x32xf32>
    %c1_12 = arith.constant 1 : index
    %c0_13 = arith.constant 0 : index
    %c0_14 = arith.constant 0 : index
    %18 = vector.load %arg4[%c1_12, %c0_13, %c0_14] : memref<2x32x1xf32, #tpu.memory_space<vmem>>, vector<1x32x1xf32>
    %19 = vector.shape_cast %18 : vector<1x32x1xf32> to vector<32x1xf32>
    %cst_15 = arith.constant dense<0.000000e+00> : vector<32x2048xf32>
    %20 = tpu.matmul %17, %15, %cst_15 {dimension_numbers = #tpu.dot_dimension_numbers<[1], [0], [0], [1], [0, 0, 1, 1], [], []>} : vector<32x32xf32>, vector<32x2048xf32>, vector<32x2048xf32> -> vector<32x2048xf32>
    %21 = vector.broadcast %19 : vector<32x1xf32> to vector<32x2048xf32>
    %22 = arith.addf %20, %21 : vector<32x2048xf32>
    %23 = math.tanh %22 : vector<32x2048xf32>
    %c0_16 = arith.constant 0 : index
    %c0_17 = arith.constant 0 : index
    %24 = vector.load %arg5[%c0_16, %c0_17] : memref<33x1xf32, #tpu.memory_space<vmem>>, vector<33x1xf32>
    %25 = vector.extract_strided_slice %24 {offsets = [0, 0], sizes = [32, 1], strides = [1, 1]} : vector<33x1xf32> to vector<32x1xf32>
    %26 = vector.broadcast %25 : vector<32x1xf32> to vector<32x2048xf32>
    %27 = arith.mulf %26, %23 : vector<32x2048xf32>
    %cst_18 = arith.constant dense<0.000000e+00> : vector<2048xf32>
    %28 = vector.multi_reduction <add>, %27, %cst_18 [0] : vector<32x2048xf32> to vector<2048xf32>
    %29 = vector.shape_cast %28 : vector<2048xf32> to vector<1x2048xf32>
    %30 = vector.extract_strided_slice %24 {offsets = [32, 0], sizes = [1, 1], strides = [1, 1]} : vector<33x1xf32> to vector<1x1xf32>
    %31 = vector.broadcast %30 : vector<1x1xf32> to vector<1x2048xf32>
    %32 = arith.addf %29, %31 : vector<1x2048xf32>
    %c0_19 = arith.constant 0 : index
    %c0_20 = arith.constant 0 : index
    %33 = vector.load %arg6[%c0_19, %c0_20] : memref<1x2048xf32, #tpu.memory_space<vmem>>, vector<1x2048xf32>
    tpu.vector_store %arg6[%c0_19, %c0_20], %32 {strides = array<i32>} : memref<1x2048xf32, #tpu.memory_space<vmem>>, vector<1x2048xf32>,
    return
  }
  func.func @transform_0(%arg0: i32) -> (i32, i32) {
    %c0_i32 = arith.constant 0 : i32
    %c0_i32_0 = arith.constant 0 : i32
    return %arg0, %c0_i32 : i32, i32
  }
  func.func @transform_1(%arg0: i32) -> (i32, i32) {
    %c0_i32 = arith.constant 0 : i32
    %c0_i32_0 = arith.constant 0 : i32
    %c0_i32_1 = arith.constant 0 : i32
    return %c0_i32, %c0_i32_0 : i32, i32
  }
  func.func @transform_2(%arg0: i32) -> (i32, i32, i32) {
    %c0_i32 = arith.constant 0 : i32
    %c0_i32_0 = arith.constant 0 : i32
    %c0_i32_1 = arith.constant 0 : i32
    %c0_i32_2 = arith.constant 0 : i32
    return %c0_i32, %c0_i32_0, %c0_i32_1 : i32, i32, i32
  }
  func.func @transform_3(%arg0: i32) -> (i32, i32, i32) {
    %c0_i32 = arith.constant 0 : i32
    %c0_i32_0 = arith.constant 0 : i32
    %c0_i32_1 = arith.constant 0 : i32
    %c0_i32_2 = arith.constant 0 : i32
    return %c0_i32, %c0_i32_0, %c0_i32_1 : i32, i32, i32
  }
  func.func @transform_4(%arg0: i32) -> (i32, i32) {
    %c0_i32 = arith.constant 0 : i32
    %c0_i32_0 = arith.constant 0 : i32
    %c0_i32_1 = arith.constant 0 : i32
    return %c0_i32, %c0_i32_0 : i32, i32
  }
  func.func @transform_5(%arg0: i32) -> (i32, i32) {
    %c0_i32 = arith.constant 0 : i32
    %c0_i32_0 = arith.constant 0 : i32
    return %c0_i32, %arg0 : i32, i32
  }
}

</mosaic_0001>

<llo_original>
// kernel: tpu_custom_call.1
$region0: #{tpu_custom_call.1}
  #allocation0 [shape = 'u32[]', space=smem, size = 0x4, offset = 0x4, fixed_abs, tag = 'smem constant byte address 0x4 - core index']
  #allocation1 [shape = 'u32[144,128]{1,0:T(1,128)}', space=vmem, size = 0x12000, scoped, tag = 'internal scratch']
  %s0 = inlined_call_operand.vmem [shape: f32[8192,2], index: 0, kind: input, shape index: {}]
  %s1 = inlined_call_operand.vmem [shape: f32[32,3], index: 1, kind: input, shape index: {}]
  %s2 = inlined_call_operand.vmem [shape: f32[2,32,32], index: 2, kind: input, shape index: {}]
  %s3 = inlined_call_operand.vmem [shape: f32[2,32,1], index: 3, kind: input, shape index: {}]
  %s4 = inlined_call_operand.vmem [shape: f32[33,1], index: 4, kind: input, shape index: {}]
  %s5 = inlined_call_operand.hbm [shape: f32[1,8192], index: 5, kind: output, shape index: {}]
  %s6 = sld [smem:[#allocation0]]
  $region53: #{tpu_custom_call.1} parent=0
    _
  %s8 = ssub.s32 1, %s6
  %s9 = scalar_select 0, %s8, %s6
  $region1: #{tpu_custom_call.1} parent=0
    #allocation2 [shape = 'u8[16384]{0}', space=vmem, size = 0x4000, scoped, tag = 'output window, operand 0']
    #allocation3 [shape = 's32[2]{0}', space=sflag, size = 0x8, scoped, tag = 'scoped memory for tpu_custom_call.1']
    %10 = vsyncpa [#allocation3], 0
    %s11 = scalar_lea.sflag [#allocation3], 1
    %12 = vsyncpa %s11, 0
    loop: start=0, step=1, limit=6
    $region2: #{tpu_custom_call.1} parent=1 // loop_pre_header
      _
    $region3: #{tpu_custom_call.1} parent=1 // loop_header
      %s14 = sphi 0, %s18
      %p15 = scmp.ge.s32.totalorder %s14, 6
      %s24 = sphi 0, %s26
      %s27 = sphi 0, %s24
      %s28 = sphi 0, %s27
      %s44 = sphi 0, %s28
      %s48 = sphi 0, %s48
      %s50 = sphi 0, %s48
      %s51 = sphi 0, %s50
      %s65 = sphi 0, %s51
      %s69 = sphi 0, %s69
      %s71 = sphi 0, %s69
      %s72 = sphi 0, %s71
      %s86 = sphi 0, %s72
      %s90 = sphi 0, %s90
      %s92 = sphi 0, %s90
      %s93 = sphi 0, %s92
      %s107 = sphi 0, %s93
      %s111 = sphi 0, %s111
      %s113 = sphi 0, %s111
      %s114 = sphi 0, %s113
      %s128 = sphi 0, %s114
      %s134 = sphi 0, %s136
      %s137 = sphi 0, %s134
      %s138 = sphi 0, %s137
      %s154 = sphi 0, %s138
    $region4: #{tpu_custom_call.1} parent=1 // loop_header_branch
      %17 = sbr.rel (%p15) target = $region8
    $region5: #{tpu_custom_call.1} parent=1 // loop_body
      %s19 = ssub.s32 %s14, 1
      %s20 = ssub.s32 %s14, 2
      %s21 = sadd.s32 %s14, 1
      %s22 = ssub.s32 %s14, %s21
      %p23 = scmp.eq.s32.totalorder %s22, 0
      %s25 = sadd.s32 %s24, 1
      %s26 = scalar_select %p23, %s24, %s25
      %p29 = pneg %p23
      %p30 = scmp.eq.s32.totalorder %s14, 3
      %p31 = por %p29, %p30
      %p32 = scmp.ne.s32.totalorder %s24, %s27
      %p33 = scmp.eq.s32.totalorder %s14, 0
      %p34 = por %p32, %p33
      %p35 = scmp.ne.s32.totalorder %s24, %s27
      %p36 = scmp.eq.s32.totalorder %s19, 3
      %p37 = por %p35, %p36
      %p38 = scmp.ne.s32.totalorder %s27, %s28
      %p39 = scmp.eq.s32.totalorder %s19, 0
      %p40 = por %p38, %p39
      %p41 = scmp.ne.s32.totalorder %s27, %s28
      %p42 = scmp.eq.s32.totalorder %s20, 3
      %p43 = por %p41, %p42
      %p45 = scmp.ne.s32.totalorder %s28, %s44
      %p46 = scmp.eq.s32.totalorder %s20, 0
      %p47 = por %p45, %p46
      %s49 = sadd.s32 %s48, 1
      %p52 = scmp.eq.s32.totalorder %s14, 3
      %p53 = scmp.ne.s32.totalorder %s48, %s50
      %p54 = scmp.eq.s32.totalorder %s14, 0
      %p55 = por %p53, %p54
      %p56 = scmp.ne.s32.totalorder %s48, %s50
      %p57 = scmp.eq.s32.totalorder %s19, 3
      %p58 = por %p56, %p57
      %p59 = scmp.ne.s32.totalorder %s50, %s51
      %p60 = scmp.eq.s32.totalorder %s19, 0
      %p61 = por %p59, %p60
      %p62 = scmp.ne.s32.totalorder %s50, %s51
      %p63 = scmp.eq.s32.totalorder %s20, 3
      %p64 = por %p62, %p63
      %p66 = scmp.ne.s32.totalorder %s51, %s65
      %p67 = scmp.eq.s32.totalorder %s20, 0
      %p68 = por %p66, %p67
      %s70 = sadd.s32 %s69, 1
      %p73 = scmp.eq.s32.totalorder %s14, 3
      %p74 = scmp.ne.s32.totalorder %s69, %s71
      %p75 = scmp.eq.s32.totalorder %s14, 0
      %p76 = por %p74, %p75
      %p77 = scmp.ne.s32.totalorder %s69, %s71
      %p78 = scmp.eq.s32.totalorder %s19, 3
      %p79 = por %p77, %p78
      %p80 = scmp.ne.s32.totalorder %s71, %s72
      %p81 = scmp.eq.s32.totalorder %s19, 0
      %p82 = por %p80, %p81
      %p83 = scmp.ne.s32.totalorder %s71, %s72
      %p84 = scmp.eq.s32.totalorder %s20, 3
      %p85 = por %p83, %p84
      %p87 = scmp.ne.s32.totalorder %s72, %s86
      %p88 = scmp.eq.s32.totalorder %s20, 0
      %p89 = por %p87, %p88
      %s91 = sadd.s32 %s90, 1
      %p94 = scmp.eq.s32.totalorder %s14, 3
      %p95 = scmp.ne.s32.totalorder %s90, %s92
      %p96 = scmp.eq.s32.totalorder %s14, 0
      %p97 = por %p95, %p96
      %p98 = scmp.ne.s32.totalorder %s90, %s92
      %p99 = scmp.eq.s32.totalorder %s19, 3
      %p100 = por %p98, %p99
      %p101 = scmp.ne.s32.totalorder %s92, %s93
      %p102 = scmp.eq.s32.totalorder %s19, 0
      %p103 = por %p101, %p102
      %p104 = scmp.ne.s32.totalorder %s92, %s93
      %p105 = scmp.eq.s32.totalorder %s20, 3
      %p106 = por %p104, %p105
      %p108 = scmp.ne.s32.totalorder %s93, %s107
      %p109 = scmp.eq.s32.totalorder %s20, 0
      %p110 = por %p108, %p109
      %s112 = sadd.s32 %s111, 1
      %p115 = scmp.eq.s32.totalorder %s14, 3
      %p116 = scmp.ne.s32.totalorder %s111, %s113
      %p117 = scmp.eq.s32.totalorder %s14, 0
      %p118 = por %p116, %p117
      %p119 = scmp.ne.s32.totalorder %s111, %s113
      %p120 = scmp.eq.s32.totalorder %s19, 3
      %p121 = por %p119, %p120
      %p122 = scmp.ne.s32.totalorder %s113, %s114
      %p123 = scmp.eq.s32.totalorder %s19, 0
      %p124 = por %p122, %p123
      %p125 = scmp.ne.s32.totalorder %s113, %s114
      %p126 = scmp.eq.s32.totalorder %s20, 3
      %p127 = por %p125, %p126
      %p129 = scmp.ne.s32.totalorder %s114, %s128
      %p130 = scmp.eq.s32.totalorder %s20, 0
      %p131 = por %p129, %p130
      %s132 = ssub.s32 %s14, %s21
      %p133 = scmp.eq.s32.totalorder %s132, 0
      %s135 = sadd.s32 %s134, 1
      %s136 = scalar_select %p133, %s134, %s135
      %p139 = pneg %p133
      %p140 = scmp.eq.s32.totalorder %s14, 3
      %p141 = por %p139, %p140
      %p142 = scmp.ne.s32.totalorder %s134, %s137
      %p143 = scmp.eq.s32.totalorder %s14, 0
      %p144 = por %p142, %p143
      %p145 = scmp.ne.s32.totalorder %s134, %s137
      %p146 = scmp.eq.s32.totalorder %s19, 3
      %p147 = por %p145, %p146
      %p148 = scmp.ne.s32.totalorder %s137, %s138
      %p149 = scmp.eq.s32.totalorder %s19, 0
      %p150 = por %p148, %p149
      %p151 = scmp.ne.s32.totalorder %s137, %s138
      %p152 = scmp.eq.s32.totalorder %s20, 3
      %p153 = por %p151, %p152
      %p155 = scmp.ne.s32.totalorder %s138, %s154
      %p156 = scmp.eq.s32.totalorder %s20, 0
      %p157 = por %p155, %p156
      %p158 = scmp.le.s32.totalorder 1, %s14
      %p159 = scmp.lt.s32.totalorder %s14, 5
      %p160 = pnand %p158, %p159
      %p161 = pneg %p160
      // Predicated region
      $region9: #{tpu_custom_call.1} parent=5 // pred_check
        _
      $region10: #{tpu_custom_call.1} parent=5 // pred_check_branch
        %163 = sbr.rel (%p160) target = $region12
      $region11: #{tpu_custom_call.1} parent=5 // pred_region
        %s164 = ssub.s32 %s14, 1
        // Predicated region
        $region13: #{tpu_custom_call.1} parent=11 // pred_check
          %p165 = pneg %p61
        $region14: #{tpu_custom_call.1} parent=11 // pred_check_branch
          %167 = sbr.rel (%p165) target = $region16
        $region15: #{tpu_custom_call.1} parent=11 // pred_region
          _
        $region16: #{tpu_custom_call.1} parent=11 // pred_fallthru
          _
        // Predicated region
        $region17: #{tpu_custom_call.1} parent=11 // pred_check
          %p168 = pneg %p82
        $region18: #{tpu_custom_call.1} parent=11 // pred_check_branch
          %170 = sbr.rel (%p168) target = $region20
        $region19: #{tpu_custom_call.1} parent=11 // pred_region
          _
        $region20: #{tpu_custom_call.1} parent=11 // pred_fallthru
          _
        // Predicated region
        $region21: #{tpu_custom_call.1} parent=11 // pred_check
          %p171 = pneg %p103
        $region22: #{tpu_custom_call.1} parent=11 // pred_check_branch
          %173 = sbr.rel (%p171) target = $region24
        $region23: #{tpu_custom_call.1} parent=11 // pred_region
          _
        $region24: #{tpu_custom_call.1} parent=11 // pred_fallthru
          _
        // Predicated region
        $region25: #{tpu_custom_call.1} parent=11 // pred_check
          %p174 = pneg %p124
        $region26: #{tpu_custom_call.1} parent=11 // pred_check_branch
          %176 = sbr.rel (%p174) target = $region28
        $region27: #{tpu_custom_call.1} parent=11 // pred_region
          _
        $region28: #{tpu_custom_call.1} parent=11 // pred_fallthru
          _
      $region12: #{tpu_custom_call.1} parent=5 // pred_fallthru
        _
      %p177 = scmp.lt.s32.totalorder %s14, 4
      // Predicated region
      $region29: #{tpu_custom_call.1} parent=5 // pred_check
        %p178 = pneg %p177
      $region30: #{tpu_custom_call.1} parent=5 // pred_check_branch
        %180 = sbr.rel (%p178) target = $region32
      $region31: #{tpu_custom_call.1} parent=5 // pred_region
        // Predicated region
        $region33: #{tpu_custom_call.1} parent=31 // pred_check
          %p181 = pneg %p34
        $region34: #{tpu_custom_call.1} parent=31 // pred_check_branch
          %183 = sbr.rel (%p181) target = $region36
        $region35: #{tpu_custom_call.1} parent=31 // pred_region
          %s184 = smul.u32 256, %s14
          %p185 = scmp.lt.s32.totalorder %s184, 1023
          %s186 = scalar_select %p185, %s184, 1023
          %s187 = smul.addr %s186, 8
          %s188 = scalar_lea.vmem %s0, %s187
          %s189 = smul.u32 256, %s14
        $region36: #{tpu_custom_call.1} parent=31 // pred_fallthru
          _
      $region32: #{tpu_custom_call.1} parent=5 // pred_fallthru
        _
      %p190 = scmp.le.s32.totalorder 1, %s14
      %p191 = scmp.lt.s32.totalorder %s14, 5
      %p192 = pnand %p190, %p191
      %p193 = pneg %p192
      // Predicated region
      $region37: #{tpu_custom_call.1} parent=5 // pred_check
        _
      $region38: #{tpu_custom_call.1} parent=5 // pred_check_branch
        %195 = sbr.rel (%p192) target = $region40
      $region39: #{tpu_custom_call.1} parent=5 // pred_region
        %s196 = ssub.s32 %s14, 1
        %s197 = smul.u32 256, %s19
        %p198 = scmp.lt.s32.totalorder %s197, 1023
        %s199 = scalar_select %p198, %s197, 1023
        %s200 = smul.addr %s199, 8
        %s201 = scalar_lea.vmem %s0, %s200
        %p202 = pneg %p40
        %p203 = pneg %p37
        %p204 = pneg %p61
        %p205 = pneg %p58
        %p206 = pneg %p82
        %p207 = pneg %p79
        %p208 = pneg %p103
        %p209 = pneg %p100
        %p210 = pneg %p124
        %p211 = pneg %p121
        %p212 = pneg %p150
        %p213 = pneg %p147
        %s214 = sand.u32 %s137, 1
        %s215 = scalar_lea.sflag [#allocation3], %s214
        %s216 = sand.u32 %s137, 1
        %s217 = smul.addr %s216, 16
        %s218 = scalar_lea.vmem [#allocation2], %s217
        %s219 = smul.u32 256, %s19
        %p220 = scmp.lt.s32.totalorder %s219, 1023
        %s221 = scalar_select %p220, %s219, 1023
        %s222 = smul.addr %s221, 8
        %s223 = scalar_lea.vmem %s0, %s222
        %s224 = smul.u32 256, %s19
        %s225 = smul.u32 16, %s19
        %v226 = vld [vmem:[%s223] sm:$0xff]
        %v227 = vld [vmem:[%s223 + $0x8] sm:$0xff]
        %v228 = vld [vmem:[%s223 + $0x10] sm:$0xff]
        %v229 = vld [vmem:[%s223 + $0x18] sm:$0xff]
        %v230 = vld [vmem:[%s223 + $0x20] sm:$0xff]
        %v231 = vld [vmem:[%s223 + $0x28] sm:$0xff]
        %v232 = vld [vmem:[%s223 + $0x30] sm:$0xff]
        %v233 = vld [vmem:[%s223 + $0x38] sm:$0xff]
        %v234 = vld [vmem:[%s223 + $0x40] sm:$0xff]
        %v235 = vld [vmem:[%s223 + $0x48] sm:$0xff]
        %v236 = vld [vmem:[%s223 + $0x50] sm:$0xff]
        %v237 = vld [vmem:[%s223 + $0x58] sm:$0xff]
        %v238 = vld [vmem:[%s223 + $0x60] sm:$0xff]
        %v239 = vld [vmem:[%s223 + $0x68] sm:$0xff]
        %v240 = vld [vmem:[%s223 + $0x70] sm:$0xff]
        %v241 = vld [vmem:[%s223 + $0x78] sm:$0xff]
        %v242 = vld [vmem:[%s223 + $0x80] sm:$0xff]
        %v243 = vld [vmem:[%s223 + $0x88] sm:$0xff]
        %v244 = vld [vmem:[%s223 + $0x90] sm:$0xff]
        %v245 = vld [vmem:[%s223 + $0x98] sm:$0xff]
        %v246 = vld [vmem:[%s223 + $0xa0] sm:$0xff]
        %v247 = vld [vmem:[%s223 + $0xa8] sm:$0xff]
        %v248 = vld [vmem:[%s223 + $0xb0] sm:$0xff]
        %v249 = vld [vmem:[%s223 + $0xb8] sm:$0xff]
        %v250 = vld [vmem:[%s223 + $0xc0] sm:$0xff]
        %v251 = vld [vmem:[%s223 + $0xc8] sm:$0xff]
        %v252 = vld [vmem:[%s223 + $0xd0] sm:$0xff]
        %v253 = vld [vmem:[%s223 + $0xd8] sm:$0xff]
        %v254 = vld [vmem:[%s223 + $0xe0] sm:$0xff]
        %v255 = vld [vmem:[%s223 + $0xe8] sm:$0xff]
        %v256 = vld [vmem:[%s223 + $0xf0] sm:$0xff]
        %v257 = vld [vmem:[%s223 + $0xf8] sm:$0xff]
        %v258 = vld [vmem:[%s223 + $0x100] sm:$0xff]
        %v259 = vld [vmem:[%s223 + $0x108] sm:$0xff]
        %v260 = vld [vmem:[%s223 + $0x110] sm:$0xff]
        %v261 = vld [vmem:[%s223 + $0x118] sm:$0xff]
        %v262 = vld [vmem:[%s223 + $0x120] sm:$0xff]
        %v263 = vld [vmem:[%s223 + $0x128] sm:$0xff]
        %v264 = vld [vmem:[%s223 + $0x130] sm:$0xff]
        %v265 = vld [vmem:[%s223 + $0x138] sm:$0xff]
        %v266 = vld [vmem:[%s223 + $0x140] sm:$0xff]
        %v267 = vld [vmem:[%s223 + $0x148] sm:$0xff]
        %v268 = vld [vmem:[%s223 + $0x150] sm:$0xff]
        %v269 = vld [vmem:[%s223 + $0x158] sm:$0xff]
        %v270 = vld [vmem:[%s223 + $0x160] sm:$0xff]
        %v271 = vld [vmem:[%s223 + $0x168] sm:$0xff]
        %v272 = vld [vmem:[%s223 + $0x170] sm:$0xff]
        %v273 = vld [vmem:[%s223 + $0x178] sm:$0xff]
        %v274 = vld [vmem:[%s223 + $0x180] sm:$0xff]
        %v275 = vld [vmem:[%s223 + $0x188] sm:$0xff]
        %v276 = vld [vmem:[%s223 + $0x190] sm:$0xff]
        %v277 = vld [vmem:[%s223 + $0x198] sm:$0xff]
        %v278 = vld [vmem:[%s223 + $0x1a0] sm:$0xff]
        %v279 = vld [vmem:[%s223 + $0x1a8] sm:$0xff]
        %v280 = vld [vmem:[%s223 + $0x1b0] sm:$0xff]
        %v281 = vld [vmem:[%s223 + $0x1b8] sm:$0xff]
        %v282 = vld [vmem:[%s223 + $0x1c0] sm:$0xff]
        %v283 = vld [vmem:[%s223 + $0x1c8] sm:$0xff]
        %v284 = vld [vmem:[%s223 + $0x1d0] sm:$0xff]
        %v285 = vld [vmem:[%s223 + $0x1d8] sm:$0xff]
        %v286 = vld [vmem:[%s223 + $0x1e0] sm:$0xff]
        %v287 = vld [vmem:[%s223 + $0x1e8] sm:$0xff]
        %v288 = vld [vmem:[%s223 + $0x1f0] sm:$0xff]
        %v289 = vld [vmem:[%s223 + $0x1f8] sm:$0xff]
        %v290 = vld [vmem:[%s223 + $0x200] sm:$0xff]
        %v291 = vld [vmem:[%s223 + $0x208] sm:$0xff]
        %v292 = vld [vmem:[%s223 + $0x210] sm:$0xff]
        %v293 = vld [vmem:[%s223 + $0x218] sm:$0xff]
        %v294 = vld [vmem:[%s223 + $0x220] sm:$0xff]
        %v295 = vld [vmem:[%s223 + $0x228] sm:$0xff]
        %v296 = vld [vmem:[%s223 + $0x230] sm:$0xff]
        %v297 = vld [vmem:[%s223 + $0x238] sm:$0xff]
        %v298 = vld [vmem:[%s223 + $0x240] sm:$0xff]
        %v299 = vld [vmem:[%s223 + $0x248] sm:$0xff]
        %v300 = vld [vmem:[%s223 + $0x250] sm:$0xff]
        %v301 = vld [vmem:[%s223 + $0x258] sm:$0xff]
        %v302 = vld [vmem:[%s223 + $0x260] sm:$0xff]
        %v303 = vld [vmem:[%s223 + $0x268] sm:$0xff]
        %v304 = vld [vmem:[%s223 + $0x270] sm:$0xff]
        %v305 = vld [vmem:[%s223 + $0x278] sm:$0xff]
        %v306 = vld [vmem:[%s223 + $0x280] sm:$0xff]
        %v307 = vld [vmem:[%s223 + $0x288] sm:$0xff]
        %v308 = vld [vmem:[%s223 + $0x290] sm:$0xff]
        %v309 = vld [vmem:[%s223 + $0x298] sm:$0xff]
        %v310 = vld [vmem:[%s223 + $0x2a0] sm:$0xff]
        %v311 = vld [vmem:[%s223 + $0x2a8] sm:$0xff]
        %v312 = vld [vmem:[%s223 + $0x2b0] sm:$0xff]
        %v313 = vld [vmem:[%s223 + $0x2b8] sm:$0xff]
        %v314 = vld [vmem:[%s223 + $0x2c0] sm:$0xff]
        %v315 = vld [vmem:[%s223 + $0x2c8] sm:$0xff]
        %v316 = vld [vmem:[%s223 + $0x2d0] sm:$0xff]
        %v317 = vld [vmem:[%s223 + $0x2d8] sm:$0xff]
        %v318 = vld [vmem:[%s223 + $0x2e0] sm:$0xff]
        %v319 = vld [vmem:[%s223 + $0x2e8] sm:$0xff]
        %v320 = vld [vmem:[%s223 + $0x2f0] sm:$0xff]
        %v321 = vld [vmem:[%s223 + $0x2f8] sm:$0xff]
        %v322 = vld [vmem:[%s223 + $0x300] sm:$0xff]
        %v323 = vld [vmem:[%s223 + $0x308] sm:$0xff]
        %v324 = vld [vmem:[%s223 + $0x310] sm:$0xff]
        %v325 = vld [vmem:[%s223 + $0x318] sm:$0xff]
        %v326 = vld [vmem:[%s223 + $0x320] sm:$0xff]
        %v327 = vld [vmem:[%s223 + $0x328] sm:$0xff]
        %v328 = vld [vmem:[%s223 + $0x330] sm:$0xff]
        %v329 = vld [vmem:[%s223 + $0x338] sm:$0xff]
        %v330 = vld [vmem:[%s223 + $0x340] sm:$0xff]
        %v331 = vld [vmem:[%s223 + $0x348] sm:$0xff]
        %v332 = vld [vmem:[%s223 + $0x350] sm:$0xff]
        %v333 = vld [vmem:[%s223 + $0x358] sm:$0xff]
        %v334 = vld [vmem:[%s223 + $0x360] sm:$0xff]
        %v335 = vld [vmem:[%s223 + $0x368] sm:$0xff]
        %v336 = vld [vmem:[%s223 + $0x370] sm:$0xff]
        %v337 = vld [vmem:[%s223 + $0x378] sm:$0xff]
        %v338 = vld [vmem:[%s223 + $0x380] sm:$0xff]
        %v339 = vld [vmem:[%s223 + $0x388] sm:$0xff]
        %v340 = vld [vmem:[%s223 + $0x390] sm:$0xff]
        %v341 = vld [vmem:[%s223 + $0x398] sm:$0xff]
        %v342 = vld [vmem:[%s223 + $0x3a0] sm:$0xff]
        %v343 = vld [vmem:[%s223 + $0x3a8] sm:$0xff]
        %v344 = vld [vmem:[%s223 + $0x3b0] sm:$0xff]
        %v345 = vld [vmem:[%s223 + $0x3b8] sm:$0xff]
        %v346 = vld [vmem:[%s223 + $0x3c0] sm:$0xff]
        %v347 = vld [vmem:[%s223 + $0x3c8] sm:$0xff]
        %v348 = vld [vmem:[%s223 + $0x3d0] sm:$0xff]
        %v349 = vld [vmem:[%s223 + $0x3d8] sm:$0xff]
        %v350 = vld [vmem:[%s223 + $0x3e0] sm:$0xff]
        %v351 = vld [vmem:[%s223 + $0x3e8] sm:$0xff]
        %v352 = vld [vmem:[%s223 + $0x3f0] sm:$0xff]
        %v353 = vld [vmem:[%s223 + $0x3f8] sm:$0xff]
        %v354 = vld [vmem:[%s223 + $0x400] sm:$0xff]
        %v355 = vld [vmem:[%s223 + $0x408] sm:$0xff]
        %v356 = vld [vmem:[%s223 + $0x410] sm:$0xff]
        %v357 = vld [vmem:[%s223 + $0x418] sm:$0xff]
        %v358 = vld [vmem:[%s223 + $0x420] sm:$0xff]
        %v359 = vld [vmem:[%s223 + $0x428] sm:$0xff]
        %v360 = vld [vmem:[%s223 + $0x430] sm:$0xff]
        %v361 = vld [vmem:[%s223 + $0x438] sm:$0xff]
        %v362 = vld [vmem:[%s223 + $0x440] sm:$0xff]
        %v363 = vld [vmem:[%s223 + $0x448] sm:$0xff]
        %v364 = vld [vmem:[%s223 + $0x450] sm:$0xff]
        %v365 = vld [vmem:[%s223 + $0x458] sm:$0xff]
        %v366 = vld [vmem:[%s223 + $0x460] sm:$0xff]
        %v367 = vld [vmem:[%s223 + $0x468] sm:$0xff]
        %v368 = vld [vmem:[%s223 + $0x470] sm:$0xff]
        %v369 = vld [vmem:[%s223 + $0x478] sm:$0xff]
        %v370 = vld [vmem:[%s223 + $0x480] sm:$0xff]
        %v371 = vld [vmem:[%s223 + $0x488] sm:$0xff]
        %v372 = vld [vmem:[%s223 + $0x490] sm:$0xff]
        %v373 = vld [vmem:[%s223 + $0x498] sm:$0xff]
        %v374 = vld [vmem:[%s223 + $0x4a0] sm:$0xff]
        %v375 = vld [vmem:[%s223 + $0x4a8] sm:$0xff]
        %v376 = vld [vmem:[%s223 + $0x4b0] sm:$0xff]
        %v377 = vld [vmem:[%s223 + $0x4b8] sm:$0xff]
        %v378 = vld [vmem:[%s223 + $0x4c0] sm:$0xff]
        %v379 = vld [vmem:[%s223 + $0x4c8] sm:$0xff]
        %v380 = vld [vmem:[%s223 + $0x4d0] sm:$0xff]
        %v381 = vld [vmem:[%s223 + $0x4d8] sm:$0xff]
        %v382 = vld [vmem:[%s223 + $0x4e0] sm:$0xff]
        %v383 = vld [vmem:[%s223 + $0x4e8] sm:$0xff]
        %v384 = vld [vmem:[%s223 + $0x4f0] sm:$0xff]
        %v385 = vld [vmem:[%s223 + $0x4f8] sm:$0xff]
        %v386 = vld [vmem:[%s223 + $0x500] sm:$0xff]
        %v387 = vld [vmem:[%s223 + $0x508] sm:$0xff]
        %v388 = vld [vmem:[%s223 + $0x510] sm:$0xff]
        %v389 = vld [vmem:[%s223 + $0x518] sm:$0xff]
        %v390 = vld [vmem:[%s223 + $0x520] sm:$0xff]
        %v391 = vld [vmem:[%s223 + $0x528] sm:$0xff]
        %v392 = vld [vmem:[%s223 + $0x530] sm:$0xff]
        %v393 = vld [vmem:[%s223 + $0x538] sm:$0xff]
        %v394 = vld [vmem:[%s223 + $0x540] sm:$0xff]
        %v395 = vld [vmem:[%s223 + $0x548] sm:$0xff]
        %v396 = vld [vmem:[%s223 + $0x550] sm:$0xff]
        %v397 = vld [vmem:[%s223 + $0x558] sm:$0xff]
        %v398 = vld [vmem:[%s223 + $0x560] sm:$0xff]
        %v399 = vld [vmem:[%s223 + $0x568] sm:$0xff]
        %v400 = vld [vmem:[%s223 + $0x570] sm:$0xff]
        %v401 = vld [vmem:[%s223 + $0x578] sm:$0xff]
        %v402 = vld [vmem:[%s223 + $0x580] sm:$0xff]
        %v403 = vld [vmem:[%s223 + $0x588] sm:$0xff]
        %v404 = vld [vmem:[%s223 + $0x590] sm:$0xff]
        %v405 = vld [vmem:[%s223 + $0x598] sm:$0xff]
        %v406 = vld [vmem:[%s223 + $0x5a0] sm:$0xff]
        %v407 = vld [vmem:[%s223 + $0x5a8] sm:$0xff]
        %v408 = vld [vmem:[%s223 + $0x5b0] sm:$0xff]
        %v409 = vld [vmem:[%s223 + $0x5b8] sm:$0xff]
        %v410 = vld [vmem:[%s223 + $0x5c0] sm:$0xff]
        %v411 = vld [vmem:[%s223 + $0x5c8] sm:$0xff]
        %v412 = vld [vmem:[%s223 + $0x5d0] sm:$0xff]
        %v413 = vld [vmem:[%s223 + $0x5d8] sm:$0xff]
        %v414 = vld [vmem:[%s223 + $0x5e0] sm:$0xff]
        %v415 = vld [vmem:[%s223 + $0x5e8] sm:$0xff]
        %v416 = vld [vmem:[%s223 + $0x5f0] sm:$0xff]
        %v417 = vld [vmem:[%s223 + $0x5f8] sm:$0xff]
        %v418 = vld [vmem:[%s223 + $0x600] sm:$0xff]
        %v419 = vld [vmem:[%s223 + $0x608] sm:$0xff]
        %v420 = vld [vmem:[%s223 + $0x610] sm:$0xff]
        %v421 = vld [vmem:[%s223 + $0x618] sm:$0xff]
        %v422 = vld [vmem:[%s223 + $0x620] sm:$0xff]
        %v423 = vld [vmem:[%s223 + $0x628] sm:$0xff]
        %v424 = vld [vmem:[%s223 + $0x630] sm:$0xff]
        %v425 = vld [vmem:[%s223 + $0x638] sm:$0xff]
        %v426 = vld [vmem:[%s223 + $0x640] sm:$0xff]
        %v427 = vld [vmem:[%s223 + $0x648] sm:$0xff]
        %v428 = vld [vmem:[%s223 + $0x650] sm:$0xff]
        %v429 = vld [vmem:[%s223 + $0x658] sm:$0xff]
        %v430 = vld [vmem:[%s223 + $0x660] sm:$0xff]
        %v431 = vld [vmem:[%s223 + $0x668] sm:$0xff]
        %v432 = vld [vmem:[%s223 + $0x670] sm:$0xff]
        %v433 = vld [vmem:[%s223 + $0x678] sm:$0xff]
        %v434 = vld [vmem:[%s223 + $0x680] sm:$0xff]
        %v435 = vld [vmem:[%s223 + $0x688] sm:$0xff]
        %v436 = vld [vmem:[%s223 + $0x690] sm:$0xff]
        %v437 = vld [vmem:[%s223 + $0x698] sm:$0xff]
        %v438 = vld [vmem:[%s223 + $0x6a0] sm:$0xff]
        %v439 = vld [vmem:[%s223 + $0x6a8] sm:$0xff]
        %v440 = vld [vmem:[%s223 + $0x6b0] sm:$0xff]
        %v441 = vld [vmem:[%s223 + $0x6b8] sm:$0xff]
        %v442 = vld [vmem:[%s223 + $0x6c0] sm:$0xff]
        %v443 = vld [vmem:[%s223 + $0x6c8] sm:$0xff]
        %v444 = vld [vmem:[%s223 + $0x6d0] sm:$0xff]
        %v445 = vld [vmem:[%s223 + $0x6d8] sm:$0xff]
        %v446 = vld [vmem:[%s223 + $0x6e0] sm:$0xff]
        %v447 = vld [vmem:[%s223 + $0x6e8] sm:$0xff]
        %v448 = vld [vmem:[%s223 + $0x6f0] sm:$0xff]
        %v449 = vld [vmem:[%s223 + $0x6f8] sm:$0xff]
        %v450 = vld [vmem:[%s223 + $0x700] sm:$0xff]
        %v451 = vld [vmem:[%s223 + $0x708] sm:$0xff]
        %v452 = vld [vmem:[%s223 + $0x710] sm:$0xff]
        %v453 = vld [vmem:[%s223 + $0x718] sm:$0xff]
        %v454 = vld [vmem:[%s223 + $0x720] sm:$0xff]
        %v455 = vld [vmem:[%s223 + $0x728] sm:$0xff]
        %v456 = vld [vmem:[%s223 + $0x730] sm:$0xff]
        %v457 = vld [vmem:[%s223 + $0x738] sm:$0xff]
        %v458 = vld [vmem:[%s223 + $0x740] sm:$0xff]
        %v459 = vld [vmem:[%s223 + $0x748] sm:$0xff]
        %v460 = vld [vmem:[%s223 + $0x750] sm:$0xff]
        %v461 = vld [vmem:[%s223 + $0x758] sm:$0xff]
        %v462 = vld [vmem:[%s223 + $0x760] sm:$0xff]
        %v463 = vld [vmem:[%s223 + $0x768] sm:$0xff]
        %v464 = vld [vmem:[%s223 + $0x770] sm:$0xff]
        %v465 = vld [vmem:[%s223 + $0x778] sm:$0xff]
        %v466 = vld [vmem:[%s223 + $0x780] sm:$0xff]
        %v467 = vld [vmem:[%s223 + $0x788] sm:$0xff]
        %v468 = vld [vmem:[%s223 + $0x790] sm:$0xff]
        %v469 = vld [vmem:[%s223 + $0x798] sm:$0xff]
        %v470 = vld [vmem:[%s223 + $0x7a0] sm:$0xff]
        %v471 = vld [vmem:[%s223 + $0x7a8] sm:$0xff]
        %v472 = vld [vmem:[%s223 + $0x7b0] sm:$0xff]
        %v473 = vld [vmem:[%s223 + $0x7b8] sm:$0xff]
        %v474 = vld [vmem:[%s223 + $0x7c0] sm:$0xff]
        %v475 = vld [vmem:[%s223 + $0x7c8] sm:$0xff]
        %v476 = vld [vmem:[%s223 + $0x7d0] sm:$0xff]
        %v477 = vld [vmem:[%s223 + $0x7d8] sm:$0xff]
        %v478 = vld [vmem:[%s223 + $0x7e0] sm:$0xff]
        %v479 = vld [vmem:[%s223 + $0x7e8] sm:$0xff]
        %v480 = vld [vmem:[%s223 + $0x7f0] sm:$0xff]
        %v481 = vld [vmem:[%s223 + $0x7f8] sm:$0xff]
        %v482 = vld [vmem:[%s1] sm:$0xff]
        %v483 = vld [vmem:[%s1 + $0x8] sm:$0xff]
        %v484 = vld [vmem:[%s1 + $0x10] sm:$0xff]
        %v485 = vld [vmem:[%s1 + $0x18] sm:$0xff]
        %487 = vset.pattern.permute.xlu0 2
        %488 = vperm.xlu0 %487, %v482
        %v489 = vpop.permute.xlu0 %488
        %492 = vset.pattern.permute.xlu0 2
        %493 = vperm.xlu0 %492, %v483
        %v494 = vpop.permute.xlu0 %493
        %497 = vset.pattern.permute.xlu0 2
        %498 = vperm.xlu0 %497, %v484
        %v499 = vpop.permute.xlu0 %498
        %502 = vset.pattern.permute.xlu0 2
        %503 = vperm.xlu0 %502, %v485
        %v504 = vpop.permute.xlu0 %503
        %vm506 = vcmask 15360
        %v507 = vsel %vm506, %v482, 0
        %v509 = vsel %vm506, %v483, 0
        %v511 = vsel %vm506, %v484, 0
        %v513 = vsel %vm506, %v485, 0
        %v516 = vsel %vm506, %v226, 0
        %v519 = vsel %vm506, %v227, 0
        %v522 = vsel %vm506, %v228, 0
        %v525 = vsel %vm506, %v229, 0
        %v528 = vsel %vm506, %v230, 0
        %v531 = vsel %vm506, %v231, 0
        %v534 = vsel %vm506, %v232, 0
        %v537 = vsel %vm506, %v233, 0
        %v540 = vsel %vm506, %v234, 0
        %v543 = vsel %vm506, %v235, 0
        %v546 = vsel %vm506, %v236, 0
        %v549 = vsel %vm506, %v237, 0
        %v552 = vsel %vm506, %v238, 0
        %v555 = vsel %vm506, %v239, 0
        %v558 = vsel %vm506, %v240, 0
        %v561 = vsel %vm506, %v241, 0
        %v564 = vsel %vm506, %v242, 0
        %v567 = vsel %vm506, %v243, 0
        %v570 = vsel %vm506, %v244, 0
        %v573 = vsel %vm506, %v245, 0
        %v576 = vsel %vm506, %v246, 0
        %v579 = vsel %vm506, %v247, 0
        %v582 = vsel %vm506, %v248, 0
        %v585 = vsel %vm506, %v249, 0
        %v588 = vsel %vm506, %v250, 0
        %v591 = vsel %vm506, %v251, 0
        %v594 = vsel %vm506, %v252, 0
        %v597 = vsel %vm506, %v253, 0
        %v600 = vsel %vm506, %v254, 0
        %v603 = vsel %vm506, %v255, 0
        %v606 = vsel %vm506, %v256, 0
        %v609 = vsel %vm506, %v257, 0
        %v612 = vsel %vm506, %v258, 0
        %v615 = vsel %vm506, %v259, 0
        %v618 = vsel %vm506, %v260, 0
        %v621 = vsel %vm506, %v261, 0
        %v624 = vsel %vm506, %v262, 0
        %v627 = vsel %vm506, %v263, 0
        %v630 = vsel %vm506, %v264, 0
        %v633 = vsel %vm506, %v265, 0
        %v636 = vsel %vm506, %v266, 0
        %v639 = vsel %vm506, %v267, 0
        %v642 = vsel %vm506, %v268, 0
        %v645 = vsel %vm506, %v269, 0
        %v648 = vsel %vm506, %v270, 0
        %v651 = vsel %vm506, %v271, 0
        %v654 = vsel %vm506, %v272, 0
        %v657 = vsel %vm506, %v273, 0
        %v660 = vsel %vm506, %v274, 0
        %v663 = vsel %vm506, %v275, 0
        %v666 = vsel %vm506, %v276, 0
        %v669 = vsel %vm506, %v277, 0
        %v672 = vsel %vm506, %v278, 0
        %v675 = vsel %vm506, %v279, 0
        %v678 = vsel %vm506, %v280, 0
        %v681 = vsel %vm506, %v281, 0
        %v684 = vsel %vm506, %v282, 0
        %v687 = vsel %vm506, %v283, 0
        %v690 = vsel %vm506, %v284, 0
        %v693 = vsel %vm506, %v285, 0
        %v696 = vsel %vm506, %v286, 0
        %v699 = vsel %vm506, %v287, 0
        %v702 = vsel %vm506, %v288, 0
        %v705 = vsel %vm506, %v289, 0
        %v708 = vsel %vm506, %v290, 0
        %v711 = vsel %vm506, %v291, 0
        %v714 = vsel %vm506, %v292, 0
        %v717 = vsel %vm506, %v293, 0
        %v720 = vsel %vm506, %v294, 0
        %v723 = vsel %vm506, %v295, 0
        %v726 = vsel %vm506, %v296, 0
        %v729 = vsel %vm506, %v297, 0
        %v732 = vsel %vm506, %v298, 0
        %v735 = vsel %vm506, %v299, 0
        %v738 = vsel %vm506, %v300, 0
        %v741 = vsel %vm506, %v301, 0
        %v744 = vsel %vm506, %v302, 0
        %v747 = vsel %vm506, %v303, 0
        %v750 = vsel %vm506, %v304, 0
        %v753 = vsel %vm506, %v305, 0
        %v756 = vsel %vm506, %v306, 0
        %v759 = vsel %vm506, %v307, 0
        %v762 = vsel %vm506, %v308, 0
        %v765 = vsel %vm506, %v309, 0
        %v768 = vsel %vm506, %v310, 0
        %v771 = vsel %vm506, %v311, 0
        %v774 = vsel %vm506, %v312, 0
        %v777 = vsel %vm506, %v313, 0
        %v780 = vsel %vm506, %v314, 0
        %v783 = vsel %vm506, %v315, 0
        %v786 = vsel %vm506, %v316, 0
        %v789 = vsel %vm506, %v317, 0
        %v792 = vsel %vm506, %v318, 0
        %v795 = vsel %vm506, %v319, 0
        %v798 = vsel %vm506, %v320, 0
        %v801 = vsel %vm506, %v321, 0
        %v804 = vsel %vm506, %v322, 0
        %v807 = vsel %vm506, %v323, 0
        %v810 = vsel %vm506, %v324, 0
        %v813 = vsel %vm506, %v325, 0
        %v816 = vsel %vm506, %v326, 0
        %v819 = vsel %vm506, %v327, 0
        %v822 = vsel %vm506, %v328, 0
        %v825 = vsel %vm506, %v329, 0
        %v828 = vsel %vm506, %v330, 0
        %v831 = vsel %vm506, %v331, 0
        %v834 = vsel %vm506, %v332, 0
        %v837 = vsel %vm506, %v333, 0
        %v840 = vsel %vm506, %v334, 0
        %v843 = vsel %vm506, %v335, 0
        %v846 = vsel %vm506, %v336, 0
        %v849 = vsel %vm506, %v337, 0
        %v852 = vsel %vm506, %v338, 0
        %v855 = vsel %vm506, %v339, 0
        %v858 = vsel %vm506, %v340, 0
        %v861 = vsel %vm506, %v341, 0
        %v864 = vsel %vm506, %v342, 0
        %v867 = vsel %vm506, %v343, 0
        %v870 = vsel %vm506, %v344, 0
        %v873 = vsel %vm506, %v345, 0
        %v876 = vsel %vm506, %v346, 0
        %v879 = vsel %vm506, %v347, 0
        %v882 = vsel %vm506, %v348, 0
        %v885 = vsel %vm506, %v349, 0
        %v888 = vsel %vm506, %v350, 0
        %v891 = vsel %vm506, %v351, 0
        %v894 = vsel %vm506, %v352, 0
        %v897 = vsel %vm506, %v353, 0
        %v900 = vsel %vm506, %v354, 0
        %v903 = vsel %vm506, %v355, 0
        %v906 = vsel %vm506, %v356, 0
        %v909 = vsel %vm506, %v357, 0
        %v912 = vsel %vm506, %v358, 0
        %v915 = vsel %vm506, %v359, 0
        %v918 = vsel %vm506, %v360, 0
        %v921 = vsel %vm506, %v361, 0
        %v924 = vsel %vm506, %v362, 0
        %v927 = vsel %vm506, %v363, 0
        %v930 = vsel %vm506, %v364, 0
        %v933 = vsel %vm506, %v365, 0
        %v936 = vsel %vm506, %v366, 0
        %v939 = vsel %vm506, %v367, 0
        %v942 = vsel %vm506, %v368, 0
        %v945 = vsel %vm506, %v369, 0
        %v948 = vsel %vm506, %v370, 0
        %v951 = vsel %vm506, %v371, 0
        %v954 = vsel %vm506, %v372, 0
        %v957 = vsel %vm506, %v373, 0
        %v960 = vsel %vm506, %v374, 0
        %v963 = vsel %vm506, %v375, 0
        %v966 = vsel %vm506, %v376, 0
        %v969 = vsel %vm506, %v377, 0
        %v972 = vsel %vm506, %v378, 0
        %v975 = vsel %vm506, %v379, 0
        %v978 = vsel %vm506, %v380, 0
        %v981 = vsel %vm506, %v381, 0
        %v984 = vsel %vm506, %v382, 0
        %v987 = vsel %vm506, %v383, 0
        %v990 = vsel %vm506, %v384, 0
        %v993 = vsel %vm506, %v385, 0
        %v996 = vsel %vm506, %v386, 0
        %v999 = vsel %vm506, %v387, 0
        %v1002 = vsel %vm506, %v388, 0
        %v1005 = vsel %vm506, %v389, 0
        %v1008 = vsel %vm506, %v390, 0
        %v1011 = vsel %vm506, %v391, 0
        %v1014 = vsel %vm506, %v392, 0
        %v1017 = vsel %vm506, %v393, 0
        %v1020 = vsel %vm506, %v394, 0
        %v1023 = vsel %vm506, %v395, 0
        %v1026 = vsel %vm506, %v396, 0
        %v1029 = vsel %vm506, %v397, 0
        %v1032 = vsel %vm506, %v398, 0
        %v1035 = vsel %vm506, %v399, 0
        %v1038 = vsel %vm506, %v400, 0
        %v1041 = vsel %vm506, %v401, 0
        %v1044 = vsel %vm506, %v402, 0
        %v1047 = vsel %vm506, %v403, 0
        %v1050 = vsel %vm506, %v404, 0
        %v1053 = vsel %vm506, %v405, 0
        %v1056 = vsel %vm506, %v406, 0
        %v1059 = vsel %vm506, %v407, 0
        %v1062 = vsel %vm506, %v408, 0
        %v1065 = vsel %vm506, %v409, 0
        %v1068 = vsel %vm506, %v410, 0
        %v1071 = vsel %vm506, %v411, 0
        %v1074 = vsel %vm506, %v412, 0
        %v1077 = vsel %vm506, %v413, 0
        %v1080 = vsel %vm506, %v414, 0
        %v1083 = vsel %vm506, %v415, 0
        %v1086 = vsel %vm506, %v416, 0
        %v1089 = vsel %vm506, %v417, 0
        %v1092 = vsel %vm506, %v418, 0
        %v1095 = vsel %vm506, %v419, 0
        %v1098 = vsel %vm506, %v420, 0
        %v1101 = vsel %vm506, %v421, 0
        %v1104 = vsel %vm506, %v422, 0
        %v1107 = vsel %vm506, %v423, 0
        %v1110 = vsel %vm506, %v424, 0
        %v1113 = vsel %vm506, %v425, 0
        %v1116 = vsel %vm506, %v426, 0
        %v1119 = vsel %vm506, %v427, 0
        %v1122 = vsel %vm506, %v428, 0
        %v1125 = vsel %vm506, %v429, 0
        %v1128 = vsel %vm506, %v430, 0
        %v1131 = vsel %vm506, %v431, 0
        %v1134 = vsel %vm506, %v432, 0
        %v1137 = vsel %vm506, %v433, 0
        %v1140 = vsel %vm506, %v434, 0
        %v1143 = vsel %vm506, %v435, 0
        %v1146 = vsel %vm506, %v436, 0
        %v1149 = vsel %vm506, %v437, 0
        %v1152 = vsel %vm506, %v438, 0
        %v1155 = vsel %vm506, %v439, 0
        %v1158 = vsel %vm506, %v440, 0
        %v1161 = vsel %vm506, %v441, 0
        %v1164 = vsel %vm506, %v442, 0
        %v1167 = vsel %vm506, %v443, 0
        %v1170 = vsel %vm506, %v444, 0
        %v1173 = vsel %vm506, %v445, 0
        %v1176 = vsel %vm506, %v446, 0
        %v1179 = vsel %vm506, %v447, 0
        %v1182 = vsel %vm506, %v448, 0
        %v1185 = vsel %vm506, %v449, 0
        %v1188 = vsel %vm506, %v450, 0
        %v1191 = vsel %vm506, %v451, 0
        %v1194 = vsel %vm506, %v452, 0
        %v1197 = vsel %vm506, %v453, 0
        %v1200 = vsel %vm506, %v454, 0
        %v1203 = vsel %vm506, %v455, 0
        %v1206 = vsel %vm506, %v456, 0
        %v1209 = vsel %vm506, %v457, 0
        %v1212 = vsel %vm506, %v458, 0
        %v1215 = vsel %vm506, %v459, 0
        %v1218 = vsel %vm506, %v460, 0
        %v1221 = vsel %vm506, %v461, 0
        %v1224 = vsel %vm506, %v462, 0
        %v1227 = vsel %vm506, %v463, 0
        %v1230 = vsel %vm506, %v464, 0
        %v1233 = vsel %vm506, %v465, 0
        %v1236 = vsel %vm506, %v466, 0
        %v1239 = vsel %vm506, %v467, 0
        %v1242 = vsel %vm506, %v468, 0
        %v1245 = vsel %vm506, %v469, 0
        %v1248 = vsel %vm506, %v470, 0
        %v1251 = vsel %vm506, %v471, 0
        %v1254 = vsel %vm506, %v472, 0
        %v1257 = vsel %vm506, %v473, 0
        %v1260 = vsel %vm506, %v474, 0
        %v1263 = vsel %vm506, %v475, 0
        %v1266 = vsel %vm506, %v476, 0
        %v1269 = vsel %vm506, %v477, 0
        %v1272 = vsel %vm506, %v478, 0
        %v1275 = vsel %vm506, %v479, 0
        %v1278 = vsel %vm506, %v480, 0
        %v1281 = vsel %vm506, %v481, 0
        %1283 = vmatprep.subr.mxu0 0.0
        %1284 = vmatpush1.xpose.msra.mxu0 %v561
        %1285 = vmatprep.subr.mxu0 0.0
        %1286 = vmatpush1.xpose.msra.mxu0 %v558
        %1287 = vmatprep.subr.mxu0 0.0
        %1288 = vmatpush1.xpose.msra.mxu0 %v555
        %1289 = vmatprep.subr.mxu0 0.0
        %1290 = vmatpush1.xpose.msra.mxu0 %v552
        %1291 = vmatprep.subr.mxu0 0.0
        %1292 = vmatpush1.xpose.msra.mxu0 %v549
        %1293 = vmatprep.subr.mxu0 0.0
        %1294 = vmatpush1.xpose.msra.mxu0 %v546
        %1295 = vmatprep.subr.mxu0 0.0
        %1296 = vmatpush1.xpose.msra.mxu0 %v543
        %1297 = vmatprep.subr.mxu0 0.0
        %1298 = vmatpush1.xpose.msra.mxu0 %v540
        %1299 = vmatprep.subr.mxu0 0.0
        %1300 = vmatpush1.xpose.msra.mxu0 %v537
        %1301 = vmatprep.subr.mxu0 0.0
        %1302 = vmatpush1.xpose.msra.mxu0 %v534
        %1303 = vmatprep.subr.mxu0 0.0
        %1304 = vmatpush1.xpose.msra.mxu0 %v531
        %1305 = vmatprep.subr.mxu0 0.0
        %1306 = vmatpush1.xpose.msra.mxu0 %v528
        %1307 = vmatprep.subr.mxu0 0.0
        %1308 = vmatpush1.xpose.msra.mxu0 %v525
        %1309 = vmatprep.subr.mxu0 0.0
        %1310 = vmatpush1.xpose.msra.mxu0 %v522
        %1311 = vmatprep.subr.mxu0 0.0
        %1312 = vmatpush1.xpose.msra.mxu0 %v519
        %1313 = vmatprep.subr.mxu0 0.0
        %1314 = vmatpush1.xpose.msra.mxu0 %v516
        %1315 = vmatprep.subr.mxu0 0.0
        %1316 = vmatpush2.xpose.msra.mxu0 %v609
        %1317 = vmatprep.subr.mxu0 0.0
        %1318 = vmatpush2.xpose.msra.mxu0 %v606
        %1319 = vmatprep.subr.mxu0 0.0
        %1320 = vmatpush2.xpose.msra.mxu0 %v603
        %1321 = vmatprep.subr.mxu0 0.0
        %1322 = vmatpush2.xpose.msra.mxu0 %v600
        %1323 = vmatprep.subr.mxu0 0.0
        %1324 = vmatpush2.xpose.msra.mxu0 %v597
        %1325 = vmatprep.subr.mxu0 0.0
        %1326 = vmatpush2.xpose.msra.mxu0 %v594
        %1327 = vmatprep.subr.mxu0 0.0
        %1328 = vmatpush2.xpose.msra.mxu0 %v591
        %1329 = vmatprep.subr.mxu0 0.0
        %1330 = vmatpush2.xpose.msra.mxu0 %v588
        %1331 = vmatprep.subr.mxu0 0.0
        %1332 = vmatpush2.xpose.msra.mxu0 %v585
        %1333 = vmatprep.subr.mxu0 0.0
        %1334 = vmatpush2.xpose.msra.mxu0 %v582
        %1335 = vmatprep.subr.mxu0 0.0
        %1336 = vmatpush2.xpose.msra.mxu0 %v579
        %1337 = vmatprep.subr.mxu0 0.0
        %1338 = vmatpush2.xpose.msra.mxu0 %v576
        %1339 = vmatprep.subr.mxu0 0.0
        %1340 = vmatpush2.xpose.msra.mxu0 %v573
        %1341 = vmatprep.subr.mxu0 0.0
        %1342 = vmatpush2.xpose.msra.mxu0 %v570
        %1343 = vmatprep.subr.mxu0 0.0
        %1344 = vmatpush2.xpose.msra.mxu0 %v567
        %1345 = vmatprep.subr.mxu0 0.0
        %1346 = vmatpush2.xpose.msra.mxu0 %v564
        %1347 = vmatprep.mubr.f32.mxu0 0.0
        %1348 = vmatmul.mubr.f32.gmra.mxu0 %v507
        %v1349 = vpop.f32.mrf.mxu0
        %v1350 = vadd.f32 %v489, %v1349
        %v1351 = vpop.f32.mrf.mxu0
        %v1352 = vadd.f32 %v489, %v1351
        %1353 = vmatprep.mubr.f32.mxu0 0.0
        %1354 = vmatmul.mubr.f32.gmra.mxu0 %v509
        %v1355 = vpop.f32.mrf.mxu0
        %v1356 = vadd.f32 %v494, %v1355
        %v1357 = vpop.f32.mrf.mxu0
        %v1358 = vadd.f32 %v494, %v1357
        %1359 = vmatprep.mubr.f32.mxu0 0.0
        %1360 = vmatmul.mubr.f32.gmra.mxu0 %v511
        %v1361 = vpop.f32.mrf.mxu0
        %v1362 = vadd.f32 %v499, %v1361
        %v1363 = vpop.f32.mrf.mxu0
        %v1364 = vadd.f32 %v499, %v1363
        %1365 = vmatprep.mubr.f32.mxu0 0.0
        %1366 = vmatmul.mubr.f32.gmra.mxu0 %v513
        %v1367 = vpop.f32.mrf.mxu0
        %v1368 = vadd.f32 %v504, %v1367
        %v1369 = vpop.f32.mrf.mxu0
        %v1370 = vadd.f32 %v504, %v1369
        %1371 = vdwg.mxu0
        %1372 = vmatprep.subr.mxu0 0.0
        %1373 = vmatpush1.xpose.msra.mxu0 %v657
        %1374 = vmatprep.subr.mxu0 0.0
        %1375 = vmatpush1.xpose.msra.mxu0 %v654
        %1376 = vmatprep.subr.mxu0 0.0
        %1377 = vmatpush1.xpose.msra.mxu0 %v651
        %1378 = vmatprep.subr.mxu0 0.0
        %1379 = vmatpush1.xpose.msra.mxu0 %v648
        %1380 = vmatprep.subr.mxu0 0.0
        %1381 = vmatpush1.xpose.msra.mxu0 %v645
        %1382 = vmatprep.subr.mxu0 0.0
        %1383 = vmatpush1.xpose.msra.mxu0 %v642
        %1384 = vmatprep.subr.mxu0 0.0
        %1385 = vmatpush1.xpose.msra.mxu0 %v639
        %1386 = vmatprep.subr.mxu0 0.0
        %1387 = vmatpush1.xpose.msra.mxu0 %v636
        %1388 = vmatprep.subr.mxu0 0.0
        %1389 = vmatpush1.xpose.msra.mxu0 %v633
        %1390 = vmatprep.subr.mxu0 0.0
        %1391 = vmatpush1.xpose.msra.mxu0 %v630
        %1392 = vmatprep.subr.mxu0 0.0
        %1393 = vmatpush1.xpose.msra.mxu0 %v627
        %1394 = vmatprep.subr.mxu0 0.0
        %1395 = vmatpush1.xpose.msra.mxu0 %v624
        %1396 = vmatprep.subr.mxu0 0.0
        %1397 = vmatpush1.xpose.msra.mxu0 %v621
        %1398 = vmatprep.subr.mxu0 0.0
        %1399 = vmatpush1.xpose.msra.mxu0 %v618
        %1400 = vmatprep.subr.mxu0 0.0
        %1401 = vmatpush1.xpose.msra.mxu0 %v615
        %1402 = vmatprep.subr.mxu0 0.0
        %1403 = vmatpush1.xpose.msra.mxu0 %v612
        %1404 = vmatprep.subr.mxu0 0.0
        %1405 = vmatpush2.xpose.msra.mxu0 %v705
        %1406 = vmatprep.subr.mxu0 0.0
        %1407 = vmatpush2.xpose.msra.mxu0 %v702
        %1408 = vmatprep.subr.mxu0 0.0
        %1409 = vmatpush2.xpose.msra.mxu0 %v699
        %1410 = vmatprep.subr.mxu0 0.0
        %1411 = vmatpush2.xpose.msra.mxu0 %v696
        %1412 = vmatprep.subr.mxu0 0.0
        %1413 = vmatpush2.xpose.msra.mxu0 %v693
        %1414 = vmatprep.subr.mxu0 0.0
        %1415 = vmatpush2.xpose.msra.mxu0 %v690
        %1416 = vmatprep.subr.mxu0 0.0
        %1417 = vmatpush2.xpose.msra.mxu0 %v687
        %1418 = vmatprep.subr.mxu0 0.0
        %1419 = vmatpush2.xpose.msra.mxu0 %v684
        %1420 = vmatprep.subr.mxu0 0.0
        %1421 = vmatpush2.xpose.msra.mxu0 %v681
        %1422 = vmatprep.subr.mxu0 0.0
        %1423 = vmatpush2.xpose.msra.mxu0 %v678
        %1424 = vmatprep.subr.mxu0 0.0
        %1425 = vmatpush2.xpose.msra.mxu0 %v675
        %1426 = vmatprep.subr.mxu0 0.0
        %1427 = vmatpush2.xpose.msra.mxu0 %v672
        %1428 = vmatprep.subr.mxu0 0.0
        %1429 = vmatpush2.xpose.msra.mxu0 %v669
        %1430 = vmatprep.subr.mxu0 0.0
        %1431 = vmatpush2.xpose.msra.mxu0 %v666
        %1432 = vmatprep.subr.mxu0 0.0
        %1433 = vmatpush2.xpose.msra.mxu0 %v663
        %1434 = vmatprep.subr.mxu0 0.0
        %1435 = vmatpush2.xpose.msra.mxu0 %v660
        %1436 = vmatprep.mubr.f32.mxu0 0.0
        %1437 = vmatmul.mubr.f32.gmra.mxu0 %v507
        %v1438 = vpop.f32.mrf.mxu0
        %v1439 = vadd.f32 %v489, %v1438
        %v1440 = vpop.f32.mrf.mxu0
        %v1441 = vadd.f32 %v489, %v1440
        %1442 = vmatprep.mubr.f32.mxu0 0.0
        %1443 = vmatmul.mubr.f32.gmra.mxu0 %v509
        %v1444 = vpop.f32.mrf.mxu0
        %v1445 = vadd.f32 %v494, %v1444
        %v1446 = vpop.f32.mrf.mxu0
        %v1447 = vadd.f32 %v494, %v1446
        %1448 = vmatprep.mubr.f32.mxu0 0.0
        %1449 = vmatmul.mubr.f32.gmra.mxu0 %v511
        %v1450 = vpop.f32.mrf.mxu0
        %v1451 = vadd.f32 %v499, %v1450
        %v1452 = vpop.f32.mrf.mxu0
        %v1453 = vadd.f32 %v499, %v1452
        %1454 = vmatprep.mubr.f32.mxu0 0.0
        %1455 = vmatmul.mubr.f32.gmra.mxu0 %v513
        %v1456 = vpop.f32.mrf.mxu0
        %v1457 = vadd.f32 %v504, %v1456
        %v1458 = vpop.f32.mrf.mxu0
        %v1459 = vadd.f32 %v504, %v1458
        %1460 = vdwg.mxu0
        %1461 = vmatprep.subr.mxu0 0.0
        %1462 = vmatpush1.xpose.msra.mxu0 %v753
        %1463 = vmatprep.subr.mxu0 0.0
        %1464 = vmatpush1.xpose.msra.mxu0 %v750
        %1465 = vmatprep.subr.mxu0 0.0
        %1466 = vmatpush1.xpose.msra.mxu0 %v747
        %1467 = vmatprep.subr.mxu0 0.0
        %1468 = vmatpush1.xpose.msra.mxu0 %v744
        %1469 = vmatprep.subr.mxu0 0.0
        %1470 = vmatpush1.xpose.msra.mxu0 %v741
        %1471 = vmatprep.subr.mxu0 0.0
        %1472 = vmatpush1.xpose.msra.mxu0 %v738
        %1473 = vmatprep.subr.mxu0 0.0
        %1474 = vmatpush1.xpose.msra.mxu0 %v735
        %1475 = vmatprep.subr.mxu0 0.0
        %1476 = vmatpush1.xpose.msra.mxu0 %v732
        %1477 = vmatprep.subr.mxu0 0.0
        %1478 = vmatpush1.xpose.msra.mxu0 %v729
        %1479 = vmatprep.subr.mxu0 0.0
        %1480 = vmatpush1.xpose.msra.mxu0 %v726
        %1481 = vmatprep.subr.mxu0 0.0
        %1482 = vmatpush1.xpose.msra.mxu0 %v723
        %1483 = vmatprep.subr.mxu0 0.0
        %1484 = vmatpush1.xpose.msra.mxu0 %v720
        %1485 = vmatprep.subr.mxu0 0.0
        %1486 = vmatpush1.xpose.msra.mxu0 %v717
        %1487 = vmatprep.subr.mxu0 0.0
        %1488 = vmatpush1.xpose.msra.mxu0 %v714
        %1489 = vmatprep.subr.mxu0 0.0
        %1490 = vmatpush1.xpose.msra.mxu0 %v711
        %1491 = vmatprep.subr.mxu0 0.0
        %1492 = vmatpush1.xpose.msra.mxu0 %v708
        %1493 = vmatprep.subr.mxu0 0.0
        %1494 = vmatpush2.xpose.msra.mxu0 %v801
        %1495 = vmatprep.subr.mxu0 0.0
        %1496 = vmatpush2.xpose.msra.mxu0 %v798
        %1497 = vmatprep.subr.mxu0 0.0
        %1498 = vmatpush2.xpose.msra.mxu0 %v795
        %1499 = vmatprep.subr.mxu0 0.0
        %1500 = vmatpush2.xpose.msra.mxu0 %v792
        %1501 = vmatprep.subr.mxu0 0.0
        %1502 = vmatpush2.xpose.msra.mxu0 %v789
        %1503 = vmatprep.subr.mxu0 0.0
        %1504 = vmatpush2.xpose.msra.mxu0 %v786
        %1505 = vmatprep.subr.mxu0 0.0
        %1506 = vmatpush2.xpose.msra.mxu0 %v783
        %1507 = vmatprep.subr.mxu0 0.0
        %1508 = vmatpush2.xpose.msra.mxu0 %v780
        %1509 = vmatprep.subr.mxu0 0.0
        %1510 = vmatpush2.xpose.msra.mxu0 %v777
        %1511 = vmatprep.subr.mxu0 0.0
        %1512 = vmatpush2.xpose.msra.mxu0 %v774
        %1513 = vmatprep.subr.mxu0 0.0
        %1514 = vmatpush2.xpose.msra.mxu0 %v771
        %1515 = vmatprep.subr.mxu0 0.0
        %1516 = vmatpush2.xpose.msra.mxu0 %v768
        %1517 = vmatprep.subr.mxu0 0.0
        %1518 = vmatpush2.xpose.msra.mxu0 %v765
        %1519 = vmatprep.subr.mxu0 0.0
        %1520 = vmatpush2.xpose.msra.mxu0 %v762
        %1521 = vmatprep.subr.mxu0 0.0
        %1522 = vmatpush2.xpose.msra.mxu0 %v759
        %1523 = vmatprep.subr.mxu0 0.0
        %1524 = vmatpush2.xpose.msra.mxu0 %v756
        %1525 = vmatprep.mubr.f32.mxu0 0.0
        %1526 = vmatmul.mubr.f32.gmra.mxu0 %v507
        %v1527 = vpop.f32.mrf.mxu0
        %v1528 = vadd.f32 %v489, %v1527
        %v1529 = vpop.f32.mrf.mxu0
        %v1530 = vadd.f32 %v489, %v1529
        %1531 = vmatprep.mubr.f32.mxu0 0.0
        %1532 = vmatmul.mubr.f32.gmra.mxu0 %v509
        %v1533 = vpop.f32.mrf.mxu0
        %v1534 = vadd.f32 %v494, %v1533
        %v1535 = vpop.f32.mrf.mxu0
        %v1536 = vadd.f32 %v494, %v1535
        %1537 = vmatprep.mubr.f32.mxu0 0.0
        %1538 = vmatmul.mubr.f32.gmra.mxu0 %v511
        %v1539 = vpop.f32.mrf.mxu0
        %v1540 = vadd.f32 %v499, %v1539
        %v1541 = vpop.f32.mrf.mxu0
        %v1542 = vadd.f32 %v499, %v1541
        %1543 = vmatprep.mubr.f32.mxu0 0.0
        %1544 = vmatmul.mubr.f32.gmra.mxu0 %v513
        %v1545 = vpop.f32.mrf.mxu0
        %v1546 = vadd.f32 %v504, %v1545
        %v1547 = vpop.f32.mrf.mxu0
        %v1548 = vadd.f32 %v504, %v1547
        %1549 = vdwg.mxu0
        %1550 = vmatprep.subr.mxu0 0.0
        %1551 = vmatpush1.xpose.msra.mxu0 %v849
        %1552 = vmatprep.subr.mxu0 0.0
        %1553 = vmatpush1.xpose.msra.mxu0 %v846
        %1554 = vmatprep.subr.mxu0 0.0
        %1555 = vmatpush1.xpose.msra.mxu0 %v843
        %1556 = vmatprep.subr.mxu0 0.0
        %1557 = vmatpush1.xpose.msra.mxu0 %v840
        %1558 = vmatprep.subr.mxu0 0.0
        %1559 = vmatpush1.xpose.msra.mxu0 %v837
        %1560 = vmatprep.subr.mxu0 0.0
        %1561 = vmatpush1.xpose.msra.mxu0 %v834
        %1562 = vmatprep.subr.mxu0 0.0
        %1563 = vmatpush1.xpose.msra.mxu0 %v831
        %1564 = vmatprep.subr.mxu0 0.0
        %1565 = vmatpush1.xpose.msra.mxu0 %v828
        %1566 = vmatprep.subr.mxu0 0.0
        %1567 = vmatpush1.xpose.msra.mxu0 %v825
        %1568 = vmatprep.subr.mxu0 0.0
        %1569 = vmatpush1.xpose.msra.mxu0 %v822
        %1570 = vmatprep.subr.mxu0 0.0
        %1571 = vmatpush1.xpose.msra.mxu0 %v819
        %1572 = vmatprep.subr.mxu0 0.0
        %1573 = vmatpush1.xpose.msra.mxu0 %v816
        %1574 = vmatprep.subr.mxu0 0.0
        %1575 = vmatpush1.xpose.msra.mxu0 %v813
        %1576 = vmatprep.subr.mxu0 0.0
        %1577 = vmatpush1.xpose.msra.mxu0 %v810
        %1578 = vmatprep.subr.mxu0 0.0
        %1579 = vmatpush1.xpose.msra.mxu0 %v807
        %1580 = vmatprep.subr.mxu0 0.0
        %1581 = vmatpush1.xpose.msra.mxu0 %v804
        %1582 = vmatprep.subr.mxu0 0.0
        %1583 = vmatpush2.xpose.msra.mxu0 %v897
        %1584 = vmatprep.subr.mxu0 0.0
        %1585 = vmatpush2.xpose.msra.mxu0 %v894
        %1586 = vmatprep.subr.mxu0 0.0
        %1587 = vmatpush2.xpose.msra.mxu0 %v891
        %1588 = vmatprep.subr.mxu0 0.0
        %1589 = vmatpush2.xpose.msra.mxu0 %v888
        %1590 = vmatprep.subr.mxu0 0.0
        %1591 = vmatpush2.xpose.msra.mxu0 %v885
        %1592 = vmatprep.subr.mxu0 0.0
        %1593 = vmatpush2.xpose.msra.mxu0 %v882
        %1594 = vmatprep.subr.mxu0 0.0
        %1595 = vmatpush2.xpose.msra.mxu0 %v879
        %1596 = vmatprep.subr.mxu0 0.0
        %1597 = vmatpush2.xpose.msra.mxu0 %v876
        %1598 = vmatprep.subr.mxu0 0.0
        %1599 = vmatpush2.xpose.msra.mxu0 %v873
        %1600 = vmatprep.subr.mxu0 0.0
        %1601 = vmatpush2.xpose.msra.mxu0 %v870
        %1602 = vmatprep.subr.mxu0 0.0
        %1603 = vmatpush2.xpose.msra.mxu0 %v867
        %1604 = vmatprep.subr.mxu0 0.0
        %1605 = vmatpush2.xpose.msra.mxu0 %v864
        %1606 = vmatprep.subr.mxu0 0.0
        %1607 = vmatpush2.xpose.msra.mxu0 %v861
        %1608 = vmatprep.subr.mxu0 0.0
        %1609 = vmatpush2.xpose.msra.mxu0 %v858
        %1610 = vmatprep.subr.mxu0 0.0
        %1611 = vmatpush2.xpose.msra.mxu0 %v855
        %1612 = vmatprep.subr.mxu0 0.0
        %1613 = vmatpush2.xpose.msra.mxu0 %v852
        %1614 = vmatprep.mubr.f32.mxu0 0.0
        %1615 = vmatmul.mubr.f32.gmra.mxu0 %v507
        %v1616 = vpop.f32.mrf.mxu0
        %v1617 = vadd.f32 %v489, %v1616
        %v1618 = vpop.f32.mrf.mxu0
        %v1619 = vadd.f32 %v489, %v1618
        %1620 = vmatprep.mubr.f32.mxu0 0.0
        %1621 = vmatmul.mubr.f32.gmra.mxu0 %v509
        %v1622 = vpop.f32.mrf.mxu0
        %v1623 = vadd.f32 %v494, %v1622
        %v1624 = vpop.f32.mrf.mxu0
        %v1625 = vadd.f32 %v494, %v1624
        %1626 = vmatprep.mubr.f32.mxu0 0.0
        %1627 = vmatmul.mubr.f32.gmra.mxu0 %v511
        %v1628 = vpop.f32.mrf.mxu0
        %v1629 = vadd.f32 %v499, %v1628
        %v1630 = vpop.f32.mrf.mxu0
        %v1631 = vadd.f32 %v499, %v1630
        %1632 = vmatprep.mubr.f32.mxu0 0.0
        %1633 = vmatmul.mubr.f32.gmra.mxu0 %v513
        %v1634 = vpop.f32.mrf.mxu0
        %v1635 = vadd.f32 %v504, %v1634
        %v1636 = vpop.f32.mrf.mxu0
        %v1637 = vadd.f32 %v504, %v1636
        %1638 = vdwg.mxu0
        %1639 = vmatprep.subr.mxu0 0.0
        %1640 = vmatpush1.xpose.msra.mxu0 %v945
        %1641 = vmatprep.subr.mxu0 0.0
        %1642 = vmatpush1.xpose.msra.mxu0 %v942
        %1643 = vmatprep.subr.mxu0 0.0
        %1644 = vmatpush1.xpose.msra.mxu0 %v939
        %1645 = vmatprep.subr.mxu0 0.0
        %1646 = vmatpush1.xpose.msra.mxu0 %v936
        %1647 = vmatprep.subr.mxu0 0.0
        %1648 = vmatpush1.xpose.msra.mxu0 %v933
        %1649 = vmatprep.subr.mxu0 0.0
        %1650 = vmatpush1.xpose.msra.mxu0 %v930
        %1651 = vmatprep.subr.mxu0 0.0
        %1652 = vmatpush1.xpose.msra.mxu0 %v927
        %1653 = vmatprep.subr.mxu0 0.0
        %1654 = vmatpush1.xpose.msra.mxu0 %v924
        %1655 = vmatprep.subr.mxu0 0.0
        %1656 = vmatpush1.xpose.msra.mxu0 %v921
        %1657 = vmatprep.subr.mxu0 0.0
        %1658 = vmatpush1.xpose.msra.mxu0 %v918
        %1659 = vmatprep.subr.mxu0 0.0
        %1660 = vmatpush1.xpose.msra.mxu0 %v915
        %1661 = vmatprep.subr.mxu0 0.0
        %1662 = vmatpush1.xpose.msra.mxu0 %v912
        %1663 = vmatprep.subr.mxu0 0.0
        %1664 = vmatpush1.xpose.msra.mxu0 %v909
        %1665 = vmatprep.subr.mxu0 0.0
        %1666 = vmatpush1.xpose.msra.mxu0 %v906
        %1667 = vmatprep.subr.mxu0 0.0
        %1668 = vmatpush1.xpose.msra.mxu0 %v903
        %1669 = vmatprep.subr.mxu0 0.0
        %1670 = vmatpush1.xpose.msra.mxu0 %v900
        %1671 = vmatprep.subr.mxu0 0.0
        %1672 = vmatpush2.xpose.msra.mxu0 %v993
        %1673 = vmatprep.subr.mxu0 0.0
        %1674 = vmatpush2.xpose.msra.mxu0 %v990
        %1675 = vmatprep.subr.mxu0 0.0
        %1676 = vmatpush2.xpose.msra.mxu0 %v987
        %1677 = vmatprep.subr.mxu0 0.0
        %1678 = vmatpush2.xpose.msra.mxu0 %v984
        %1679 = vmatprep.subr.mxu0 0.0
        %1680 = vmatpush2.xpose.msra.mxu0 %v981
        %1681 = vmatprep.subr.mxu0 0.0
        %1682 = vmatpush2.xpose.msra.mxu0 %v978
        %1683 = vmatprep.subr.mxu0 0.0
        %1684 = vmatpush2.xpose.msra.mxu0 %v975
        %1685 = vmatprep.subr.mxu0 0.0
        %1686 = vmatpush2.xpose.msra.mxu0 %v972
        %1687 = vmatprep.subr.mxu0 0.0
        %1688 = vmatpush2.xpose.msra.mxu0 %v969
        %1689 = vmatprep.subr.mxu0 0.0
        %1690 = vmatpush2.xpose.msra.mxu0 %v966
        %1691 = vmatprep.subr.mxu0 0.0
        %1692 = vmatpush2.xpose.msra.mxu0 %v963
        %1693 = vmatprep.subr.mxu0 0.0
        %1694 = vmatpush2.xpose.msra.mxu0 %v960
        %1695 = vmatprep.subr.mxu0 0.0
        %1696 = vmatpush2.xpose.msra.mxu0 %v957
        %1697 = vmatprep.subr.mxu0 0.0
        %1698 = vmatpush2.xpose.msra.mxu0 %v954
        %1699 = vmatprep.subr.mxu0 0.0
        %1700 = vmatpush2.xpose.msra.mxu0 %v951
        %1701 = vmatprep.subr.mxu0 0.0
        %1702 = vmatpush2.xpose.msra.mxu0 %v948
        %1703 = vmatprep.mubr.f32.mxu0 0.0
        %1704 = vmatmul.mubr.f32.gmra.mxu0 %v507
        %v1705 = vpop.f32.mrf.mxu0
        %v1706 = vadd.f32 %v489, %v1705
        %v1707 = vpop.f32.mrf.mxu0
        %v1708 = vadd.f32 %v489, %v1707
        %1709 = vmatprep.mubr.f32.mxu0 0.0
        %1710 = vmatmul.mubr.f32.gmra.mxu0 %v509
        %v1711 = vpop.f32.mrf.mxu0
        %v1712 = vadd.f32 %v494, %v1711
        %v1713 = vpop.f32.mrf.mxu0
        %v1714 = vadd.f32 %v494, %v1713
        %1715 = vmatprep.mubr.f32.mxu0 0.0
        %1716 = vmatmul.mubr.f32.gmra.mxu0 %v511
        %v1717 = vpop.f32.mrf.mxu0
        %v1718 = vadd.f32 %v499, %v1717
        %v1719 = vpop.f32.mrf.mxu0
        %v1720 = vadd.f32 %v499, %v1719
        %1721 = vmatprep.mubr.f32.mxu0 0.0
        %1722 = vmatmul.mubr.f32.gmra.mxu0 %v513
        %v1723 = vpop.f32.mrf.mxu0
        %v1724 = vadd.f32 %v504, %v1723
        %v1725 = vpop.f32.mrf.mxu0
        %v1726 = vadd.f32 %v504, %v1725
        %1727 = vdwg.mxu0
        %1728 = vmatprep.subr.mxu0 0.0
        %1729 = vmatpush1.xpose.msra.mxu0 %v1041
        %1730 = vmatprep.subr.mxu0 0.0
        %1731 = vmatpush1.xpose.msra.mxu0 %v1038
        %1732 = vmatprep.subr.mxu0 0.0
        %1733 = vmatpush1.xpose.msra.mxu0 %v1035
        %1734 = vmatprep.subr.mxu0 0.0
        %1735 = vmatpush1.xpose.msra.mxu0 %v1032
        %1736 = vmatprep.subr.mxu0 0.0
        %1737 = vmatpush1.xpose.msra.mxu0 %v1029
        %1738 = vmatprep.subr.mxu0 0.0
        %1739 = vmatpush1.xpose.msra.mxu0 %v1026
        %1740 = vmatprep.subr.mxu0 0.0
        %1741 = vmatpush1.xpose.msra.mxu0 %v1023
        %1742 = vmatprep.subr.mxu0 0.0
        %1743 = vmatpush1.xpose.msra.mxu0 %v1020
        %1744 = vmatprep.subr.mxu0 0.0
        %1745 = vmatpush1.xpose.msra.mxu0 %v1017
        %1746 = vmatprep.subr.mxu0 0.0
        %1747 = vmatpush1.xpose.msra.mxu0 %v1014
        %1748 = vmatprep.subr.mxu0 0.0
        %1749 = vmatpush1.xpose.msra.mxu0 %v1011
        %1750 = vmatprep.subr.mxu0 0.0
        %1751 = vmatpush1.xpose.msra.mxu0 %v1008
        %1752 = vmatprep.subr.mxu0 0.0
        %1753 = vmatpush1.xpose.msra.mxu0 %v1005
        %1754 = vmatprep.subr.mxu0 0.0
        %1755 = vmatpush1.xpose.msra.mxu0 %v1002
        %1756 = vmatprep.subr.mxu0 0.0
        %1757 = vmatpush1.xpose.msra.mxu0 %v999
        %1758 = vmatprep.subr.mxu0 0.0
        %1759 = vmatpush1.xpose.msra.mxu0 %v996
        %1760 = vmatprep.subr.mxu0 0.0
        %1761 = vmatpush2.xpose.msra.mxu0 %v1089
        %1762 = vmatprep.subr.mxu0 0.0
        %1763 = vmatpush2.xpose.msra.mxu0 %v1086
        %1764 = vmatprep.subr.mxu0 0.0
        %1765 = vmatpush2.xpose.msra.mxu0 %v1083
        %1766 = vmatprep.subr.mxu0 0.0
        %1767 = vmatpush2.xpose.msra.mxu0 %v1080
        %1768 = vmatprep.subr.mxu0 0.0
        %1769 = vmatpush2.xpose.msra.mxu0 %v1077
        %1770 = vmatprep.subr.mxu0 0.0
        %1771 = vmatpush2.xpose.msra.mxu0 %v1074
        %1772 = vmatprep.subr.mxu0 0.0
        %1773 = vmatpush2.xpose.msra.mxu0 %v1071
        %1774 = vmatprep.subr.mxu0 0.0
        %1775 = vmatpush2.xpose.msra.mxu0 %v1068
        %1776 = vmatprep.subr.mxu0 0.0
        %1777 = vmatpush2.xpose.msra.mxu0 %v1065
        %1778 = vmatprep.subr.mxu0 0.0
        %1779 = vmatpush2.xpose.msra.mxu0 %v1062
        %1780 = vmatprep.subr.mxu0 0.0
        %1781 = vmatpush2.xpose.msra.mxu0 %v1059
        %1782 = vmatprep.subr.mxu0 0.0
        %1783 = vmatpush2.xpose.msra.mxu0 %v1056
        %1784 = vmatprep.subr.mxu0 0.0
        %1785 = vmatpush2.xpose.msra.mxu0 %v1053
        %1786 = vmatprep.subr.mxu0 0.0
        %1787 = vmatpush2.xpose.msra.mxu0 %v1050
        %1788 = vmatprep.subr.mxu0 0.0
        %1789 = vmatpush2.xpose.msra.mxu0 %v1047
        %1790 = vmatprep.subr.mxu0 0.0
        %1791 = vmatpush2.xpose.msra.mxu0 %v1044
        %1792 = vmatprep.mubr.f32.mxu0 0.0
        %1793 = vmatmul.mubr.f32.gmra.mxu0 %v507
        %v1794 = vpop.f32.mrf.mxu0
        %v1795 = vadd.f32 %v489, %v1794
        %v1796 = vpop.f32.mrf.mxu0
        %v1797 = vadd.f32 %v489, %v1796
        %1798 = vmatprep.mubr.f32.mxu0 0.0
        %1799 = vmatmul.mubr.f32.gmra.mxu0 %v509
        %v1800 = vpop.f32.mrf.mxu0
        %v1801 = vadd.f32 %v494, %v1800
        %v1802 = vpop.f32.mrf.mxu0
        %v1803 = vadd.f32 %v494, %v1802
        %1804 = vmatprep.mubr.f32.mxu0 0.0
        %1805 = vmatmul.mubr.f32.gmra.mxu0 %v511
        %v1806 = vpop.f32.mrf.mxu0
        %v1807 = vadd.f32 %v499, %v1806
        %v1808 = vpop.f32.mrf.mxu0
        %v1809 = vadd.f32 %v499, %v1808
        %1810 = vmatprep.mubr.f32.mxu0 0.0
        %1811 = vmatmul.mubr.f32.gmra.mxu0 %v513
        %v1812 = vpop.f32.mrf.mxu0
        %v1813 = vadd.f32 %v504, %v1812
        %v1814 = vpop.f32.mrf.mxu0
        %v1815 = vadd.f32 %v504, %v1814
        %1816 = vdwg.mxu0
        %1817 = vmatprep.subr.mxu0 0.0
        %1818 = vmatpush1.xpose.msra.mxu0 %v1137
        %1819 = vmatprep.subr.mxu0 0.0
        %1820 = vmatpush1.xpose.msra.mxu0 %v1134
        %1821 = vmatprep.subr.mxu0 0.0
        %1822 = vmatpush1.xpose.msra.mxu0 %v1131
        %1823 = vmatprep.subr.mxu0 0.0
        %1824 = vmatpush1.xpose.msra.mxu0 %v1128
        %1825 = vmatprep.subr.mxu0 0.0
        %1826 = vmatpush1.xpose.msra.mxu0 %v1125
        %1827 = vmatprep.subr.mxu0 0.0
        %1828 = vmatpush1.xpose.msra.mxu0 %v1122
        %1829 = vmatprep.subr.mxu0 0.0
        %1830 = vmatpush1.xpose.msra.mxu0 %v1119
        %1831 = vmatprep.subr.mxu0 0.0
        %1832 = vmatpush1.xpose.msra.mxu0 %v1116
        %1833 = vmatprep.subr.mxu0 0.0
        %1834 = vmatpush1.xpose.msra.mxu0 %v1113
        %1835 = vmatprep.subr.mxu0 0.0
        %1836 = vmatpush1.xpose.msra.mxu0 %v1110
        %1837 = vmatprep.subr.mxu0 0.0
        %1838 = vmatpush1.xpose.msra.mxu0 %v1107
        %1839 = vmatprep.subr.mxu0 0.0
        %1840 = vmatpush1.xpose.msra.mxu0 %v1104
        %1841 = vmatprep.subr.mxu0 0.0
        %1842 = vmatpush1.xpose.msra.mxu0 %v1101
        %1843 = vmatprep.subr.mxu0 0.0
        %1844 = vmatpush1.xpose.msra.mxu0 %v1098
        %1845 = vmatprep.subr.mxu0 0.0
        %1846 = vmatpush1.xpose.msra.mxu0 %v1095
        %1847 = vmatprep.subr.mxu0 0.0
        %1848 = vmatpush1.xpose.msra.mxu0 %v1092
        %1849 = vmatprep.subr.mxu0 0.0
        %1850 = vmatpush2.xpose.msra.mxu0 %v1185
        %1851 = vmatprep.subr.mxu0 0.0
        %1852 = vmatpush2.xpose.msra.mxu0 %v1182
        %1853 = vmatprep.subr.mxu0 0.0
        %1854 = vmatpush2.xpose.msra.mxu0 %v1179
        %1855 = vmatprep.subr.mxu0 0.0
        %1856 = vmatpush2.xpose.msra.mxu0 %v1176
        %1857 = vmatprep.subr.mxu0 0.0
        %1858 = vmatpush2.xpose.msra.mxu0 %v1173
        %1859 = vmatprep.subr.mxu0 0.0
        %1860 = vmatpush2.xpose.msra.mxu0 %v1170
        %1861 = vmatprep.subr.mxu0 0.0
        %1862 = vmatpush2.xpose.msra.mxu0 %v1167
        %1863 = vmatprep.subr.mxu0 0.0
        %1864 = vmatpush2.xpose.msra.mxu0 %v1164
        %1865 = vmatprep.subr.mxu0 0.0
        %1866 = vmatpush2.xpose.msra.mxu0 %v1161
        %1867 = vmatprep.subr.mxu0 0.0
        %1868 = vmatpush2.xpose.msra.mxu0 %v1158
        %1869 = vmatprep.subr.mxu0 0.0
        %1870 = vmatpush2.xpose.msra.mxu0 %v1155
        %1871 = vmatprep.subr.mxu0 0.0
        %1872 = vmatpush2.xpose.msra.mxu0 %v1152
        %1873 = vmatprep.subr.mxu0 0.0
        %1874 = vmatpush2.xpose.msra.mxu0 %v1149
        %1875 = vmatprep.subr.mxu0 0.0
        %1876 = vmatpush2.xpose.msra.mxu0 %v1146
        %1877 = vmatprep.subr.mxu0 0.0
        %1878 = vmatpush2.xpose.msra.mxu0 %v1143
        %1879 = vmatprep.subr.mxu0 0.0
        %1880 = vmatpush2.xpose.msra.mxu0 %v1140
        %1881 = vmatprep.mubr.f32.mxu0 0.0
        %1882 = vmatmul.mubr.f32.gmra.mxu0 %v507
        %v1883 = vpop.f32.mrf.mxu0
        %v1884 = vadd.f32 %v489, %v1883
        %v1885 = vpop.f32.mrf.mxu0
        %v1886 = vadd.f32 %v489, %v1885
        %1887 = vmatprep.mubr.f32.mxu0 0.0
        %1888 = vmatmul.mubr.f32.gmra.mxu0 %v509
        %v1889 = vpop.f32.mrf.mxu0
        %v1890 = vadd.f32 %v494, %v1889
        %v1891 = vpop.f32.mrf.mxu0
        %v1892 = vadd.f32 %v494, %v1891
        %1893 = vmatprep.mubr.f32.mxu0 0.0
        %1894 = vmatmul.mubr.f32.gmra.mxu0 %v511
        %v1895 = vpop.f32.mrf.mxu0
        %v1896 = vadd.f32 %v499, %v1895
        %v1897 = vpop.f32.mrf.mxu0
        %v1898 = vadd.f32 %v499, %v1897
        %1899 = vmatprep.mubr.f32.mxu0 0.0
        %1900 = vmatmul.mubr.f32.gmra.mxu0 %v513
        %v1901 = vpop.f32.mrf.mxu0
        %v1902 = vadd.f32 %v504, %v1901
        %v1903 = vpop.f32.mrf.mxu0
        %v1904 = vadd.f32 %v504, %v1903
        %1905 = vdwg.mxu0
        %1906 = vmatprep.subr.mxu0 0.0
        %1907 = vmatpush1.xpose.msra.mxu0 %v1233
        %1908 = vmatprep.subr.mxu0 0.0
        %1909 = vmatpush1.xpose.msra.mxu0 %v1230
        %1910 = vmatprep.subr.mxu0 0.0
        %1911 = vmatpush1.xpose.msra.mxu0 %v1227
        %1912 = vmatprep.subr.mxu0 0.0
        %1913 = vmatpush1.xpose.msra.mxu0 %v1224
        %1914 = vmatprep.subr.mxu0 0.0
        %1915 = vmatpush1.xpose.msra.mxu0 %v1221
        %1916 = vmatprep.subr.mxu0 0.0
        %1917 = vmatpush1.xpose.msra.mxu0 %v1218
        %1918 = vmatprep.subr.mxu0 0.0
        %1919 = vmatpush1.xpose.msra.mxu0 %v1215
        %1920 = vmatprep.subr.mxu0 0.0
        %1921 = vmatpush1.xpose.msra.mxu0 %v1212
        %1922 = vmatprep.subr.mxu0 0.0
        %1923 = vmatpush1.xpose.msra.mxu0 %v1209
        %1924 = vmatprep.subr.mxu0 0.0
        %1925 = vmatpush1.xpose.msra.mxu0 %v1206
        %1926 = vmatprep.subr.mxu0 0.0
        %1927 = vmatpush1.xpose.msra.mxu0 %v1203
        %1928 = vmatprep.subr.mxu0 0.0
        %1929 = vmatpush1.xpose.msra.mxu0 %v1200
        %1930 = vmatprep.subr.mxu0 0.0
        %1931 = vmatpush1.xpose.msra.mxu0 %v1197
        %1932 = vmatprep.subr.mxu0 0.0
        %1933 = vmatpush1.xpose.msra.mxu0 %v1194
        %1934 = vmatprep.subr.mxu0 0.0
        %1935 = vmatpush1.xpose.msra.mxu0 %v1191
        %1936 = vmatprep.subr.mxu0 0.0
        %1937 = vmatpush1.xpose.msra.mxu0 %v1188
        %1938 = vmatprep.subr.mxu0 0.0
        %1939 = vmatpush2.xpose.msra.mxu0 %v1281
        %1940 = vmatprep.subr.mxu0 0.0
        %1941 = vmatpush2.xpose.msra.mxu0 %v1278
        %1942 = vmatprep.subr.mxu0 0.0
        %1943 = vmatpush2.xpose.msra.mxu0 %v1275
        %1944 = vmatprep.subr.mxu0 0.0
        %1945 = vmatpush2.xpose.msra.mxu0 %v1272
        %1946 = vmatprep.subr.mxu0 0.0
        %1947 = vmatpush2.xpose.msra.mxu0 %v1269
        %1948 = vmatprep.subr.mxu0 0.0
        %1949 = vmatpush2.xpose.msra.mxu0 %v1266
        %1950 = vmatprep.subr.mxu0 0.0
        %1951 = vmatpush2.xpose.msra.mxu0 %v1263
        %1952 = vmatprep.subr.mxu0 0.0
        %1953 = vmatpush2.xpose.msra.mxu0 %v1260
        %1954 = vmatprep.subr.mxu0 0.0
        %1955 = vmatpush2.xpose.msra.mxu0 %v1257
        %1956 = vmatprep.subr.mxu0 0.0
        %1957 = vmatpush2.xpose.msra.mxu0 %v1254
        %1958 = vmatprep.subr.mxu0 0.0
        %1959 = vmatpush2.xpose.msra.mxu0 %v1251
        %1960 = vmatprep.subr.mxu0 0.0
        %1961 = vmatpush2.xpose.msra.mxu0 %v1248
        %1962 = vmatprep.subr.mxu0 0.0
        %1963 = vmatpush2.xpose.msra.mxu0 %v1245
        %1964 = vmatprep.subr.mxu0 0.0
        %1965 = vmatpush2.xpose.msra.mxu0 %v1242
        %1966 = vmatprep.subr.mxu0 0.0
        %1967 = vmatpush2.xpose.msra.mxu0 %v1239
        %1968 = vmatprep.subr.mxu0 0.0
        %1969 = vmatpush2.xpose.msra.mxu0 %v1236
        %1970 = vmatprep.mubr.f32.mxu0 0.0
        %1971 = vmatmul.mubr.f32.gmra.mxu0 %v507
        %v1972 = vpop.f32.mrf.mxu0
        %v1973 = vadd.f32 %v489, %v1972
        %v1974 = vpop.f32.mrf.mxu0
        %v1975 = vadd.f32 %v489, %v1974
        %1976 = vmatprep.mubr.f32.mxu0 0.0
        %1977 = vmatmul.mubr.f32.gmra.mxu0 %v509
        %v1978 = vpop.f32.mrf.mxu0
        %v1979 = vadd.f32 %v494, %v1978
        %v1980 = vpop.f32.mrf.mxu0
        %v1981 = vadd.f32 %v494, %v1980
        %1982 = vmatprep.mubr.f32.mxu0 0.0
        %1983 = vmatmul.mubr.f32.gmra.mxu0 %v511
        %v1984 = vpop.f32.mrf.mxu0
        %v1985 = vadd.f32 %v499, %v1984
        %v1986 = vpop.f32.mrf.mxu0
        %v1987 = vadd.f32 %v499, %v1986
        %1988 = vmatprep.mubr.f32.mxu0 0.0
        %1989 = vmatmul.mubr.f32.gmra.mxu0 %v513
        %v1990 = vpop.f32.mrf.mxu0
        %v1991 = vadd.f32 %v504, %v1990
        %v1992 = vpop.f32.mrf.mxu0
        %v1993 = vadd.f32 %v504, %v1992
        %1994 = vdwg.mxu0
        %v1995 = vtanh.pop %v1350
        %v1996 = vtanh.pop %v1352
        %v1997 = vtanh.pop %v1439
        %v1998 = vtanh.pop %v1441
        %v1999 = vtanh.pop %v1528
        %v2000 = vtanh.pop %v1530
        %v2001 = vtanh.pop %v1617
        %v2002 = vtanh.pop %v1619
        %v2003 = vtanh.pop %v1706
        %v2004 = vtanh.pop %v1708
        %v2005 = vtanh.pop %v1795
        %v2006 = vtanh.pop %v1797
        %v2007 = vtanh.pop %v1884
        %v2008 = vtanh.pop %v1886
        %v2009 = vtanh.pop %v1973
        %v2010 = vtanh.pop %v1975
        %v2011 = vtanh.pop %v1356
        %v2012 = vtanh.pop %v1358
        %v2013 = vtanh.pop %v1445
        %v2014 = vtanh.pop %v1447
        %v2015 = vtanh.pop %v1534
        %v2016 = vtanh.pop %v1536
        %v2017 = vtanh.pop %v1623
        %v2018 = vtanh.pop %v1625
        %v2019 = vtanh.pop %v1712
        %v2020 = vtanh.pop %v1714
        %v2021 = vtanh.pop %v1801
        %v2022 = vtanh.pop %v1803
        %v2023 = vtanh.pop %v1890
        %v2024 = vtanh.pop %v1892
        %v2025 = vtanh.pop %v1979
        %v2026 = vtanh.pop %v1981
        %v2027 = vtanh.pop %v1362
        %v2028 = vtanh.pop %v1364
        %v2029 = vtanh.pop %v1451
        %v2030 = vtanh.pop %v1453
        %v2031 = vtanh.pop %v1540
        %v2032 = vtanh.pop %v1542
        %v2033 = vtanh.pop %v1629
        %v2034 = vtanh.pop %v1631
        %v2035 = vtanh.pop %v1718
        %v2036 = vtanh.pop %v1720
        %v2037 = vtanh.pop %v1807
        %v2038 = vtanh.pop %v1809
        %v2039 = vtanh.pop %v1896
        %v2040 = vtanh.pop %v1898
        %v2041 = vtanh.pop %v1985
        %v2042 = vtanh.pop %v1987
        %v2043 = vtanh.pop %v1368
        %v2044 = vtanh.pop %v1370
        %v2045 = vtanh.pop %v1457
        %v2046 = vtanh.pop %v1459
        %v2047 = vtanh.pop %v1546
        %v2048 = vtanh.pop %v1548
        %v2049 = vtanh.pop %v1635
        %v2050 = vtanh.pop %v1637
        %v2051 = vtanh.pop %v1724
        %v2052 = vtanh.pop %v1726
        %v2053 = vtanh.pop %v1813
        %v2054 = vtanh.pop %v1815
        %v2055 = vtanh.pop %v1902
        %v2056 = vtanh.pop %v1904
        %v2057 = vtanh.pop %v1991
        %v2058 = vtanh.pop %v1993
        %v2059 = vld [vmem:[%s2] sm:$0xff]
        %v2060 = vld [vmem:[%s2 + $0x8] sm:$0xff]
        %v2061 = vld [vmem:[%s2 + $0x10] sm:$0xff]
        %v2062 = vld [vmem:[%s2 + $0x18] sm:$0xff]
        %v2063 = vld [vmem:[%s3] sm:$0xff]
        %v2064 = vld [vmem:[%s3 + $0x8] sm:$0xff]
        %v2065 = vld [vmem:[%s3 + $0x10] sm:$0xff]
        %v2066 = vld [vmem:[%s3 + $0x18] sm:$0xff]
        %2068 = vset.pattern.permute.xlu0 0
        %2069 = vperm.xlu0 %2068, %v2063
        %v2070 = vpop.permute.xlu0 %2069
        %2073 = vset.pattern.permute.xlu0 0
        %2074 = vperm.xlu0 %2073, %v2064
        %v2075 = vpop.permute.xlu0 %2074
        %2078 = vset.pattern.permute.xlu0 0
        %2079 = vperm.xlu0 %2078, %v2065
        %v2080 = vpop.permute.xlu0 %2079
        %2083 = vset.pattern.permute.xlu0 0
        %2084 = vperm.xlu0 %2083, %v2066
        %v2085 = vpop.permute.xlu0 %2084
        %vm2087 = vcmask 261120
        %v2089 = vsel %vm2087, %v2059, 0
        %v2092 = vsel %vm2087, %v2060, 0
        %v2095 = vsel %vm2087, %v2061, 0
        %v2098 = vsel %vm2087, %v2062, 0
        %2100 = vmatprep.subr.mxu0 0.0
        %2101 = vmatpush1.msra.mxu0 0.0
        %2102 = vmatprep.subr.mxu0 0.0
        %2103 = vmatpush1.msra.mxu0 0.0
        %2104 = vmatprep.subr.mxu0 0.0
        %2105 = vmatpush1.msra.mxu0 0.0
        %2106 = vmatprep.subr.mxu0 0.0
        %2107 = vmatpush1.msra.mxu0 0.0
        %2108 = vmatprep.subr.mxu0 0.0
        %2109 = vmatpush1.msra.mxu0 0.0
        %2110 = vmatprep.subr.mxu0 0.0
        %2111 = vmatpush1.msra.mxu0 0.0
        %2112 = vmatprep.subr.mxu0 0.0
        %2113 = vmatpush1.msra.mxu0 0.0
        %2114 = vmatprep.subr.mxu0 0.0
        %2115 = vmatpush1.msra.mxu0 0.0
        %2116 = vmatprep.subr.mxu0 0.0
        %2117 = vmatpush1.msra.mxu0 0.0
        %2118 = vmatprep.subr.mxu0 0.0
        %2119 = vmatpush1.msra.mxu0 0.0
        %2120 = vmatprep.subr.mxu0 0.0
        %2121 = vmatpush1.msra.mxu0 0.0
        %2122 = vmatprep.subr.mxu0 0.0
        %2123 = vmatpush1.msra.mxu0 0.0
        %2124 = vmatprep.subr.mxu0 %v2044
        %2125 = vmatpush1.msra.mxu0 %v2043
        %2126 = vmatprep.subr.mxu0 %v2028
        %2127 = vmatpush1.msra.mxu0 %v2027
        %2128 = vmatprep.subr.mxu0 %v2012
        %2129 = vmatpush1.msra.mxu0 %v2011
        %2130 = vmatprep.subr.mxu0 %v1996
        %2131 = vmatpush1.msra.mxu0 %v1995
        %2132 = vmatprep.subr.mxu0 0.0
        %2133 = vmatpush2.msra.mxu0 0.0
        %2134 = vmatprep.subr.mxu0 0.0
        %2135 = vmatpush2.msra.mxu0 0.0
        %2136 = vmatprep.subr.mxu0 0.0
        %2137 = vmatpush2.msra.mxu0 0.0
        %2138 = vmatprep.subr.mxu0 0.0
        %2139 = vmatpush2.msra.mxu0 0.0
        %2140 = vmatprep.subr.mxu0 0.0
        %2141 = vmatpush2.msra.mxu0 0.0
        %2142 = vmatprep.subr.mxu0 0.0
        %2143 = vmatpush2.msra.mxu0 0.0
        %2144 = vmatprep.subr.mxu0 0.0
        %2145 = vmatpush2.msra.mxu0 0.0
        %2146 = vmatprep.subr.mxu0 0.0
        %2147 = vmatpush2.msra.mxu0 0.0
        %2148 = vmatprep.subr.mxu0 0.0
        %2149 = vmatpush2.msra.mxu0 0.0
        %2150 = vmatprep.subr.mxu0 0.0
        %2151 = vmatpush2.msra.mxu0 0.0
        %2152 = vmatprep.subr.mxu0 0.0
        %2153 = vmatpush2.msra.mxu0 0.0
        %2154 = vmatprep.subr.mxu0 0.0
        %2155 = vmatpush2.msra.mxu0 0.0
        %2156 = vmatprep.subr.mxu0 0.0
        %2157 = vmatpush2.msra.mxu0 0.0
        %2158 = vmatprep.subr.mxu0 0.0
        %2159 = vmatpush2.msra.mxu0 0.0
        %2160 = vmatprep.subr.mxu0 0.0
        %2161 = vmatpush2.msra.mxu0 0.0
        %2162 = vmatprep.subr.mxu0 0.0
        %2163 = vmatpush2.msra.mxu0 0.0
        %2164 = vmatprep.mubr.f32.mxu0 0.0
        %2165 = vmatmul.mubr.f32.gmra.mxu0 %v2089
        %v2166 = vpop.f32.mrf.mxu0
        %v2167 = vadd.f32 %v2070, %v2166
        %v2168 = vpop.f32.mrf.mxu0
        %v2169 = vadd.f32 %v2070, %v2168
        %2170 = vmatprep.mubr.f32.mxu0 0.0
        %2171 = vmatmul.mubr.f32.gmra.mxu0 %v2092
        %v2172 = vpop.f32.mrf.mxu0
        %v2173 = vadd.f32 %v2075, %v2172
        %v2174 = vpop.f32.mrf.mxu0
        %v2175 = vadd.f32 %v2075, %v2174
        %2176 = vmatprep.mubr.f32.mxu0 0.0
        %2177 = vmatmul.mubr.f32.gmra.mxu0 %v2095
        %v2178 = vpop.f32.mrf.mxu0
        %v2179 = vadd.f32 %v2080, %v2178
        %v2180 = vpop.f32.mrf.mxu0
        %v2181 = vadd.f32 %v2080, %v2180
        %2182 = vmatprep.mubr.f32.mxu0 0.0
        %2183 = vmatmul.mubr.f32.gmra.mxu0 %v2098
        %v2184 = vpop.f32.mrf.mxu0
        %v2185 = vadd.f32 %v2085, %v2184
        %v2186 = vpop.f32.mrf.mxu0
        %v2187 = vadd.f32 %v2085, %v2186
        %2188 = vdwg.mxu0
        %2189 = vmatprep.subr.mxu0 0.0
        %2190 = vmatpush1.msra.mxu0 0.0
        %2191 = vmatprep.subr.mxu0 0.0
        %2192 = vmatpush1.msra.mxu0 0.0
        %2193 = vmatprep.subr.mxu0 0.0
        %2194 = vmatpush1.msra.mxu0 0.0
        %2195 = vmatprep.subr.mxu0 0.0
        %2196 = vmatpush1.msra.mxu0 0.0
        %2197 = vmatprep.subr.mxu0 0.0
        %2198 = vmatpush1.msra.mxu0 0.0
        %2199 = vmatprep.subr.mxu0 0.0
        %2200 = vmatpush1.msra.mxu0 0.0
        %2201 = vmatprep.subr.mxu0 0.0
        %2202 = vmatpush1.msra.mxu0 0.0
        %2203 = vmatprep.subr.mxu0 0.0
        %2204 = vmatpush1.msra.mxu0 0.0
        %2205 = vmatprep.subr.mxu0 0.0
        %2206 = vmatpush1.msra.mxu0 0.0
        %2207 = vmatprep.subr.mxu0 0.0
        %2208 = vmatpush1.msra.mxu0 0.0
        %2209 = vmatprep.subr.mxu0 0.0
        %2210 = vmatpush1.msra.mxu0 0.0
        %2211 = vmatprep.subr.mxu0 0.0
        %2212 = vmatpush1.msra.mxu0 0.0
        %2213 = vmatprep.subr.mxu0 %v2046
        %2214 = vmatpush1.msra.mxu0 %v2045
        %2215 = vmatprep.subr.mxu0 %v2030
        %2216 = vmatpush1.msra.mxu0 %v2029
        %2217 = vmatprep.subr.mxu0 %v2014
        %2218 = vmatpush1.msra.mxu0 %v2013
        %2219 = vmatprep.subr.mxu0 %v1998
        %2220 = vmatpush1.msra.mxu0 %v1997
        %2221 = vmatprep.subr.mxu0 0.0
        %2222 = vmatpush2.msra.mxu0 0.0
        %2223 = vmatprep.subr.mxu0 0.0
        %2224 = vmatpush2.msra.mxu0 0.0
        %2225 = vmatprep.subr.mxu0 0.0
        %2226 = vmatpush2.msra.mxu0 0.0
        %2227 = vmatprep.subr.mxu0 0.0
        %2228 = vmatpush2.msra.mxu0 0.0
        %2229 = vmatprep.subr.mxu0 0.0
        %2230 = vmatpush2.msra.mxu0 0.0
        %2231 = vmatprep.subr.mxu0 0.0
        %2232 = vmatpush2.msra.mxu0 0.0
        %2233 = vmatprep.subr.mxu0 0.0
        %2234 = vmatpush2.msra.mxu0 0.0
        %2235 = vmatprep.subr.mxu0 0.0
        %2236 = vmatpush2.msra.mxu0 0.0
        %2237 = vmatprep.subr.mxu0 0.0
        %2238 = vmatpush2.msra.mxu0 0.0
        %2239 = vmatprep.subr.mxu0 0.0
        %2240 = vmatpush2.msra.mxu0 0.0
        %2241 = vmatprep.subr.mxu0 0.0
        %2242 = vmatpush2.msra.mxu0 0.0
        %2243 = vmatprep.subr.mxu0 0.0
        %2244 = vmatpush2.msra.mxu0 0.0
        %2245 = vmatprep.subr.mxu0 0.0
        %2246 = vmatpush2.msra.mxu0 0.0
        %2247 = vmatprep.subr.mxu0 0.0
        %2248 = vmatpush2.msra.mxu0 0.0
        %2249 = vmatprep.subr.mxu0 0.0
        %2250 = vmatpush2.msra.mxu0 0.0
        %2251 = vmatprep.subr.mxu0 0.0
        %2252 = vmatpush2.msra.mxu0 0.0
        %2253 = vmatprep.mubr.f32.mxu0 0.0
        %2254 = vmatmul.mubr.f32.gmra.mxu0 %v2089
        %v2255 = vpop.f32.mrf.mxu0
        %v2256 = vadd.f32 %v2070, %v2255
        %v2257 = vpop.f32.mrf.mxu0
        %v2258 = vadd.f32 %v2070, %v2257
        %2259 = vmatprep.mubr.f32.mxu0 0.0
        %2260 = vmatmul.mubr.f32.gmra.mxu0 %v2092
        %v2261 = vpop.f32.mrf.mxu0
        %v2262 = vadd.f32 %v2075, %v2261
        %v2263 = vpop.f32.mrf.mxu0
        %v2264 = vadd.f32 %v2075, %v2263
        %2265 = vmatprep.mubr.f32.mxu0 0.0
        %2266 = vmatmul.mubr.f32.gmra.mxu0 %v2095
        %v2267 = vpop.f32.mrf.mxu0
        %v2268 = vadd.f32 %v2080, %v2267
        %v2269 = vpop.f32.mrf.mxu0
        %v2270 = vadd.f32 %v2080, %v2269
        %2271 = vmatprep.mubr.f32.mxu0 0.0
        %2272 = vmatmul.mubr.f32.gmra.mxu0 %v2098
        %v2273 = vpop.f32.mrf.mxu0
        %v2274 = vadd.f32 %v2085, %v2273
        %v2275 = vpop.f32.mrf.mxu0
        %v2276 = vadd.f32 %v2085, %v2275
        %2277 = vdwg.mxu0
        %2278 = vmatprep.subr.mxu0 0.0
        %2279 = vmatpush1.msra.mxu0 0.0
        %2280 = vmatprep.subr.mxu0 0.0
        %2281 = vmatpush1.msra.mxu0 0.0
        %2282 = vmatprep.subr.mxu0 0.0
        %2283 = vmatpush1.msra.mxu0 0.0
        %2284 = vmatprep.subr.mxu0 0.0
        %2285 = vmatpush1.msra.mxu0 0.0
        %2286 = vmatprep.subr.mxu0 0.0
        %2287 = vmatpush1.msra.mxu0 0.0
        %2288 = vmatprep.subr.mxu0 0.0
        %2289 = vmatpush1.msra.mxu0 0.0
        %2290 = vmatprep.subr.mxu0 0.0
        %2291 = vmatpush1.msra.mxu0 0.0
        %2292 = vmatprep.subr.mxu0 0.0
        %2293 = vmatpush1.msra.mxu0 0.0
        %2294 = vmatprep.subr.mxu0 0.0
        %2295 = vmatpush1.msra.mxu0 0.0
        %2296 = vmatprep.subr.mxu0 0.0
        %2297 = vmatpush1.msra.mxu0 0.0
        %2298 = vmatprep.subr.mxu0 0.0
        %2299 = vmatpush1.msra.mxu0 0.0
        %2300 = vmatprep.subr.mxu0 0.0
        %2301 = vmatpush1.msra.mxu0 0.0
        %2302 = vmatprep.subr.mxu0 %v2048
        %2303 = vmatpush1.msra.mxu0 %v2047
        %2304 = vmatprep.subr.mxu0 %v2032
        %2305 = vmatpush1.msra.mxu0 %v2031
        %2306 = vmatprep.subr.mxu0 %v2016
        %2307 = vmatpush1.msra.mxu0 %v2015
        %2308 = vmatprep.subr.mxu0 %v2000
        %2309 = vmatpush1.msra.mxu0 %v1999
        %2310 = vmatprep.subr.mxu0 0.0
        %2311 = vmatpush2.msra.mxu0 0.0
        %2312 = vmatprep.subr.mxu0 0.0
        %2313 = vmatpush2.msra.mxu0 0.0
        %2314 = vmatprep.subr.mxu0 0.0
        %2315 = vmatpush2.msra.mxu0 0.0
        %2316 = vmatprep.subr.mxu0 0.0
        %2317 = vmatpush2.msra.mxu0 0.0
        %2318 = vmatprep.subr.mxu0 0.0
        %2319 = vmatpush2.msra.mxu0 0.0
        %2320 = vmatprep.subr.mxu0 0.0
        %2321 = vmatpush2.msra.mxu0 0.0
        %2322 = vmatprep.subr.mxu0 0.0
        %2323 = vmatpush2.msra.mxu0 0.0
        %2324 = vmatprep.subr.mxu0 0.0
        %2325 = vmatpush2.msra.mxu0 0.0
        %2326 = vmatprep.subr.mxu0 0.0
        %2327 = vmatpush2.msra.mxu0 0.0
        %2328 = vmatprep.subr.mxu0 0.0
        %2329 = vmatpush2.msra.mxu0 0.0
        %2330 = vmatprep.subr.mxu0 0.0
        %2331 = vmatpush2.msra.mxu0 0.0
        %2332 = vmatprep.subr.mxu0 0.0
        %2333 = vmatpush2.msra.mxu0 0.0
        %2334 = vmatprep.subr.mxu0 0.0
        %2335 = vmatpush2.msra.mxu0 0.0
        %2336 = vmatprep.subr.mxu0 0.0
        %2337 = vmatpush2.msra.mxu0 0.0
        %2338 = vmatprep.subr.mxu0 0.0
        %2339 = vmatpush2.msra.mxu0 0.0
        %2340 = vmatprep.subr.mxu0 0.0
        %2341 = vmatpush2.msra.mxu0 0.0
        %2342 = vmatprep.mubr.f32.mxu0 0.0
        %2343 = vmatmul.mubr.f32.gmra.mxu0 %v2089
        %v2344 = vpop.f32.mrf.mxu0
        %v2345 = vadd.f32 %v2070, %v2344
        %v2346 = vpop.f32.mrf.mxu0
        %v2347 = vadd.f32 %v2070, %v2346
        %2348 = vmatprep.mubr.f32.mxu0 0.0
        %2349 = vmatmul.mubr.f32.gmra.mxu0 %v2092
        %v2350 = vpop.f32.mrf.mxu0
        %v2351 = vadd.f32 %v2075, %v2350
        %v2352 = vpop.f32.mrf.mxu0
        %v2353 = vadd.f32 %v2075, %v2352
        %2354 = vmatprep.mubr.f32.mxu0 0.0
        %2355 = vmatmul.mubr.f32.gmra.mxu0 %v2095
        %v2356 = vpop.f32.mrf.mxu0
        %v2357 = vadd.f32 %v2080, %v2356
        %v2358 = vpop.f32.mrf.mxu0
        %v2359 = vadd.f32 %v2080, %v2358
        %2360 = vmatprep.mubr.f32.mxu0 0.0
        %2361 = vmatmul.mubr.f32.gmra.mxu0 %v2098
        %v2362 = vpop.f32.mrf.mxu0
        %v2363 = vadd.f32 %v2085, %v2362
        %v2364 = vpop.f32.mrf.mxu0
        %v2365 = vadd.f32 %v2085, %v2364
        %2366 = vdwg.mxu0
        %2367 = vmatprep.subr.mxu0 0.0
        %2368 = vmatpush1.msra.mxu0 0.0
        %2369 = vmatprep.subr.mxu0 0.0
        %2370 = vmatpush1.msra.mxu0 0.0
        %2371 = vmatprep.subr.mxu0 0.0
        %2372 = vmatpush1.msra.mxu0 0.0
        %2373 = vmatprep.subr.mxu0 0.0
        %2374 = vmatpush1.msra.mxu0 0.0
        %2375 = vmatprep.subr.mxu0 0.0
        %2376 = vmatpush1.msra.mxu0 0.0
        %2377 = vmatprep.subr.mxu0 0.0
        %2378 = vmatpush1.msra.mxu0 0.0
        %2379 = vmatprep.subr.mxu0 0.0
        %2380 = vmatpush1.msra.mxu0 0.0
        %2381 = vmatprep.subr.mxu0 0.0
        %2382 = vmatpush1.msra.mxu0 0.0
        %2383 = vmatprep.subr.mxu0 0.0
        %2384 = vmatpush1.msra.mxu0 0.0
        %2385 = vmatprep.subr.mxu0 0.0
        %2386 = vmatpush1.msra.mxu0 0.0
        %2387 = vmatprep.subr.mxu0 0.0
        %2388 = vmatpush1.msra.mxu0 0.0
        %2389 = vmatprep.subr.mxu0 0.0
        %2390 = vmatpush1.msra.mxu0 0.0
        %2391 = vmatprep.subr.mxu0 %v2050
        %2392 = vmatpush1.msra.mxu0 %v2049
        %2393 = vmatprep.subr.mxu0 %v2034
        %2394 = vmatpush1.msra.mxu0 %v2033
        %2395 = vmatprep.subr.mxu0 %v2018
        %2396 = vmatpush1.msra.mxu0 %v2017
        %2397 = vmatprep.subr.mxu0 %v2002
        %2398 = vmatpush1.msra.mxu0 %v2001
        %2399 = vmatprep.subr.mxu0 0.0
        %2400 = vmatpush2.msra.mxu0 0.0
        %2401 = vmatprep.subr.mxu0 0.0
        %2402 = vmatpush2.msra.mxu0 0.0
        %2403 = vmatprep.subr.mxu0 0.0
        %2404 = vmatpush2.msra.mxu0 0.0
        %2405 = vmatprep.subr.mxu0 0.0
        %2406 = vmatpush2.msra.mxu0 0.0
        %2407 = vmatprep.subr.mxu0 0.0
        %2408 = vmatpush2.msra.mxu0 0.0
        %2409 = vmatprep.subr.mxu0 0.0
        %2410 = vmatpush2.msra.mxu0 0.0
        %2411 = vmatprep.subr.mxu0 0.0
        %2412 = vmatpush2.msra.mxu0 0.0
        %2413 = vmatprep.subr.mxu0 0.0
        %2414 = vmatpush2.msra.mxu0 0.0
        %2415 = vmatprep.subr.mxu0 0.0
        %2416 = vmatpush2.msra.mxu0 0.0
        %2417 = vmatprep.subr.mxu0 0.0
        %2418 = vmatpush2.msra.mxu0 0.0
        %2419 = vmatprep.subr.mxu0 0.0
        %2420 = vmatpush2.msra.mxu0 0.0
        %2421 = vmatprep.subr.mxu0 0.0
        %2422 = vmatpush2.msra.mxu0 0.0
        %2423 = vmatprep.subr.mxu0 0.0
        %2424 = vmatpush2.msra.mxu0 0.0
        %2425 = vmatprep.subr.mxu0 0.0
        %2426 = vmatpush2.msra.mxu0 0.0
        %2427 = vmatprep.subr.mxu0 0.0
        %2428 = vmatpush2.msra.mxu0 0.0
        %2429 = vmatprep.subr.mxu0 0.0
        %2430 = vmatpush2.msra.mxu0 0.0
        %2431 = vmatprep.mubr.f32.mxu0 0.0
        %2432 = vmatmul.mubr.f32.gmra.mxu0 %v2089
        %v2433 = vpop.f32.mrf.mxu0
        %v2434 = vadd.f32 %v2070, %v2433
        %v2435 = vpop.f32.mrf.mxu0
        %v2436 = vadd.f32 %v2070, %v2435
        %2437 = vmatprep.mubr.f32.mxu0 0.0
        %2438 = vmatmul.mubr.f32.gmra.mxu0 %v2092
        %v2439 = vpop.f32.mrf.mxu0
        %v2440 = vadd.f32 %v2075, %v2439
        %v2441 = vpop.f32.mrf.mxu0
        %v2442 = vadd.f32 %v2075, %v2441
        %2443 = vmatprep.mubr.f32.mxu0 0.0
        %2444 = vmatmul.mubr.f32.gmra.mxu0 %v2095
        %v2445 = vpop.f32.mrf.mxu0
        %v2446 = vadd.f32 %v2080, %v2445
        %v2447 = vpop.f32.mrf.mxu0
        %v2448 = vadd.f32 %v2080, %v2447
        %2449 = vmatprep.mubr.f32.mxu0 0.0
        %2450 = vmatmul.mubr.f32.gmra.mxu0 %v2098
        %v2451 = vpop.f32.mrf.mxu0
        %v2452 = vadd.f32 %v2085, %v2451
        %v2453 = vpop.f32.mrf.mxu0
        %v2454 = vadd.f32 %v2085, %v2453
        %2455 = vdwg.mxu0
        %2456 = vmatprep.subr.mxu0 0.0
        %2457 = vmatpush1.msra.mxu0 0.0
        %2458 = vmatprep.subr.mxu0 0.0
        %2459 = vmatpush1.msra.mxu0 0.0
        %2460 = vmatprep.subr.mxu0 0.0
        %2461 = vmatpush1.msra.mxu0 0.0
        %2462 = vmatprep.subr.mxu0 0.0
        %2463 = vmatpush1.msra.mxu0 0.0
        %2464 = vmatprep.subr.mxu0 0.0
        %2465 = vmatpush1.msra.mxu0 0.0
        %2466 = vmatprep.subr.mxu0 0.0
        %2467 = vmatpush1.msra.mxu0 0.0
        %2468 = vmatprep.subr.mxu0 0.0
        %2469 = vmatpush1.msra.mxu0 0.0
        %2470 = vmatprep.subr.mxu0 0.0
        %2471 = vmatpush1.msra.mxu0 0.0
        %2472 = vmatprep.subr.mxu0 0.0
        %2473 = vmatpush1.msra.mxu0 0.0
        %2474 = vmatprep.subr.mxu0 0.0
        %2475 = vmatpush1.msra.mxu0 0.0
        %2476 = vmatprep.subr.mxu0 0.0
        %2477 = vmatpush1.msra.mxu0 0.0
        %2478 = vmatprep.subr.mxu0 0.0
        %2479 = vmatpush1.msra.mxu0 0.0
        %2480 = vmatprep.subr.mxu0 %v2052
        %2481 = vmatpush1.msra.mxu0 %v2051
        %2482 = vmatprep.subr.mxu0 %v2036
        %2483 = vmatpush1.msra.mxu0 %v2035
        %2484 = vmatprep.subr.mxu0 %v2020
        %2485 = vmatpush1.msra.mxu0 %v2019
        %2486 = vmatprep.subr.mxu0 %v2004
        %2487 = vmatpush1.msra.mxu0 %v2003
        %2488 = vmatprep.subr.mxu0 0.0
        %2489 = vmatpush2.msra.mxu0 0.0
        %2490 = vmatprep.subr.mxu0 0.0
        %2491 = vmatpush2.msra.mxu0 0.0
        %2492 = vmatprep.subr.mxu0 0.0
        %2493 = vmatpush2.msra.mxu0 0.0
        %2494 = vmatprep.subr.mxu0 0.0
        %2495 = vmatpush2.msra.mxu0 0.0
        %2496 = vmatprep.subr.mxu0 0.0
        %2497 = vmatpush2.msra.mxu0 0.0
        %2498 = vmatprep.subr.mxu0 0.0
        %2499 = vmatpush2.msra.mxu0 0.0
        %2500 = vmatprep.subr.mxu0 0.0
        %2501 = vmatpush2.msra.mxu0 0.0
        %2502 = vmatprep.subr.mxu0 0.0
        %2503 = vmatpush2.msra.mxu0 0.0
        %2504 = vmatprep.subr.mxu0 0.0
        %2505 = vmatpush2.msra.mxu0 0.0
        %2506 = vmatprep.subr.mxu0 0.0
        %2507 = vmatpush2.msra.mxu0 0.0
        %2508 = vmatprep.subr.mxu0 0.0
        %2509 = vmatpush2.msra.mxu0 0.0
        %2510 = vmatprep.subr.mxu0 0.0
        %2511 = vmatpush2.msra.mxu0 0.0
        %2512 = vmatprep.subr.mxu0 0.0
        %2513 = vmatpush2.msra.mxu0 0.0
        %2514 = vmatprep.subr.mxu0 0.0
        %2515 = vmatpush2.msra.mxu0 0.0
        %2516 = vmatprep.subr.mxu0 0.0
        %2517 = vmatpush2.msra.mxu0 0.0
        %2518 = vmatprep.subr.mxu0 0.0
        %2519 = vmatpush2.msra.mxu0 0.0
        %2520 = vmatprep.mubr.f32.mxu0 0.0
        %2521 = vmatmul.mubr.f32.gmra.mxu0 %v2089
        %v2522 = vpop.f32.mrf.mxu0
        %v2523 = vadd.f32 %v2070, %v2522
        %v2524 = vpop.f32.mrf.mxu0
        %v2525 = vadd.f32 %v2070, %v2524
        %2526 = vmatprep.mubr.f32.mxu0 0.0
        %2527 = vmatmul.mubr.f32.gmra.mxu0 %v2092
        %v2528 = vpop.f32.mrf.mxu0
        %v2529 = vadd.f32 %v2075, %v2528
        %v2530 = vpop.f32.mrf.mxu0
        %v2531 = vadd.f32 %v2075, %v2530
        %2532 = vmatprep.mubr.f32.mxu0 0.0
        %2533 = vmatmul.mubr.f32.gmra.mxu0 %v2095
        %v2534 = vpop.f32.mrf.mxu0
        %v2535 = vadd.f32 %v2080, %v2534
        %v2536 = vpop.f32.mrf.mxu0
        %v2537 = vadd.f32 %v2080, %v2536
        %2538 = vmatprep.mubr.f32.mxu0 0.0
        %2539 = vmatmul.mubr.f32.gmra.mxu0 %v2098
        %v2540 = vpop.f32.mrf.mxu0
        %v2541 = vadd.f32 %v2085, %v2540
        %v2542 = vpop.f32.mrf.mxu0
        %v2543 = vadd.f32 %v2085, %v2542
        %2544 = vdwg.mxu0
        %2545 = vmatprep.subr.mxu0 0.0
        %2546 = vmatpush1.msra.mxu0 0.0
        %2547 = vmatprep.subr.mxu0 0.0
        %2548 = vmatpush1.msra.mxu0 0.0
        %2549 = vmatprep.subr.mxu0 0.0
        %2550 = vmatpush1.msra.mxu0 0.0
        %2551 = vmatprep.subr.mxu0 0.0
        %2552 = vmatpush1.msra.mxu0 0.0
        %2553 = vmatprep.subr.mxu0 0.0
        %2554 = vmatpush1.msra.mxu0 0.0
        %2555 = vmatprep.subr.mxu0 0.0
        %2556 = vmatpush1.msra.mxu0 0.0
        %2557 = vmatprep.subr.mxu0 0.0
        %2558 = vmatpush1.msra.mxu0 0.0
        %2559 = vmatprep.subr.mxu0 0.0
        %2560 = vmatpush1.msra.mxu0 0.0
        %2561 = vmatprep.subr.mxu0 0.0
        %2562 = vmatpush1.msra.mxu0 0.0
        %2563 = vmatprep.subr.mxu0 0.0
        %2564 = vmatpush1.msra.mxu0 0.0
        %2565 = vmatprep.subr.mxu0 0.0
        %2566 = vmatpush1.msra.mxu0 0.0
        %2567 = vmatprep.subr.mxu0 0.0
        %2568 = vmatpush1.msra.mxu0 0.0
        %2569 = vmatprep.subr.mxu0 %v2054
        %2570 = vmatpush1.msra.mxu0 %v2053
        %2571 = vmatprep.subr.mxu0 %v2038
        %2572 = vmatpush1.msra.mxu0 %v2037
        %2573 = vmatprep.subr.mxu0 %v2022
        %2574 = vmatpush1.msra.mxu0 %v2021
        %2575 = vmatprep.subr.mxu0 %v2006
        %2576 = vmatpush1.msra.mxu0 %v2005
        %2577 = vmatprep.subr.mxu0 0.0
        %2578 = vmatpush2.msra.mxu0 0.0
        %2579 = vmatprep.subr.mxu0 0.0
        %2580 = vmatpush2.msra.mxu0 0.0
        %2581 = vmatprep.subr.mxu0 0.0
        %2582 = vmatpush2.msra.mxu0 0.0
        %2583 = vmatprep.subr.mxu0 0.0
        %2584 = vmatpush2.msra.mxu0 0.0
        %2585 = vmatprep.subr.mxu0 0.0
        %2586 = vmatpush2.msra.mxu0 0.0
        %2587 = vmatprep.subr.mxu0 0.0
        %2588 = vmatpush2.msra.mxu0 0.0
        %2589 = vmatprep.subr.mxu0 0.0
        %2590 = vmatpush2.msra.mxu0 0.0
        %2591 = vmatprep.subr.mxu0 0.0
        %2592 = vmatpush2.msra.mxu0 0.0
        %2593 = vmatprep.subr.mxu0 0.0
        %2594 = vmatpush2.msra.mxu0 0.0
        %2595 = vmatprep.subr.mxu0 0.0
        %2596 = vmatpush2.msra.mxu0 0.0
        %2597 = vmatprep.subr.mxu0 0.0
        %2598 = vmatpush2.msra.mxu0 0.0
        %2599 = vmatprep.subr.mxu0 0.0
        %2600 = vmatpush2.msra.mxu0 0.0
        %2601 = vmatprep.subr.mxu0 0.0
        %2602 = vmatpush2.msra.mxu0 0.0
        %2603 = vmatprep.subr.mxu0 0.0
        %2604 = vmatpush2.msra.mxu0 0.0
        %2605 = vmatprep.subr.mxu0 0.0
        %2606 = vmatpush2.msra.mxu0 0.0
        %2607 = vmatprep.subr.mxu0 0.0
        %2608 = vmatpush2.msra.mxu0 0.0
        %2609 = vmatprep.mubr.f32.mxu0 0.0
        %2610 = vmatmul.mubr.f32.gmra.mxu0 %v2089
        %v2611 = vpop.f32.mrf.mxu0
        %v2612 = vadd.f32 %v2070, %v2611
        %v2613 = vpop.f32.mrf.mxu0
        %v2614 = vadd.f32 %v2070, %v2613
        %2615 = vmatprep.mubr.f32.mxu0 0.0
        %2616 = vmatmul.mubr.f32.gmra.mxu0 %v2092
        %v2617 = vpop.f32.mrf.mxu0
        %v2618 = vadd.f32 %v2075, %v2617
        %v2619 = vpop.f32.mrf.mxu0
        %v2620 = vadd.f32 %v2075, %v2619
        %2621 = vmatprep.mubr.f32.mxu0 0.0
        %2622 = vmatmul.mubr.f32.gmra.mxu0 %v2095
        %v2623 = vpop.f32.mrf.mxu0
        %v2624 = vadd.f32 %v2080, %v2623
        %v2625 = vpop.f32.mrf.mxu0
        %v2626 = vadd.f32 %v2080, %v2625
        %2627 = vmatprep.mubr.f32.mxu0 0.0
        %2628 = vmatmul.mubr.f32.gmra.mxu0 %v2098
        %v2629 = vpop.f32.mrf.mxu0
        %v2630 = vadd.f32 %v2085, %v2629
        %v2631 = vpop.f32.mrf.mxu0
        %v2632 = vadd.f32 %v2085, %v2631
        %2633 = vdwg.mxu0
        %2634 = vmatprep.subr.mxu0 0.0
        %2635 = vmatpush1.msra.mxu0 0.0
        %2636 = vmatprep.subr.mxu0 0.0
        %2637 = vmatpush1.msra.mxu0 0.0
        %2638 = vmatprep.subr.mxu0 0.0
        %2639 = vmatpush1.msra.mxu0 0.0
        %2640 = vmatprep.subr.mxu0 0.0
        %2641 = vmatpush1.msra.mxu0 0.0
        %2642 = vmatprep.subr.mxu0 0.0
        %2643 = vmatpush1.msra.mxu0 0.0
        %2644 = vmatprep.subr.mxu0 0.0
        %2645 = vmatpush1.msra.mxu0 0.0
        %2646 = vmatprep.subr.mxu0 0.0
        %2647 = vmatpush1.msra.mxu0 0.0
        %2648 = vmatprep.subr.mxu0 0.0
        %2649 = vmatpush1.msra.mxu0 0.0
        %2650 = vmatprep.subr.mxu0 0.0
        %2651 = vmatpush1.msra.mxu0 0.0
        %2652 = vmatprep.subr.mxu0 0.0
        %2653 = vmatpush1.msra.mxu0 0.0
        %2654 = vmatprep.subr.mxu0 0.0
        %2655 = vmatpush1.msra.mxu0 0.0
        %2656 = vmatprep.subr.mxu0 0.0
        %2657 = vmatpush1.msra.mxu0 0.0
        %2658 = vmatprep.subr.mxu0 %v2056
        %2659 = vmatpush1.msra.mxu0 %v2055
        %2660 = vmatprep.subr.mxu0 %v2040
        %2661 = vmatpush1.msra.mxu0 %v2039
        %2662 = vmatprep.subr.mxu0 %v2024
        %2663 = vmatpush1.msra.mxu0 %v2023
        %2664 = vmatprep.subr.mxu0 %v2008
        %2665 = vmatpush1.msra.mxu0 %v2007
        %2666 = vmatprep.subr.mxu0 0.0
        %2667 = vmatpush2.msra.mxu0 0.0
        %2668 = vmatprep.subr.mxu0 0.0
        %2669 = vmatpush2.msra.mxu0 0.0
        %2670 = vmatprep.subr.mxu0 0.0
        %2671 = vmatpush2.msra.mxu0 0.0
        %2672 = vmatprep.subr.mxu0 0.0
        %2673 = vmatpush2.msra.mxu0 0.0
        %2674 = vmatprep.subr.mxu0 0.0
        %2675 = vmatpush2.msra.mxu0 0.0
        %2676 = vmatprep.subr.mxu0 0.0
        %2677 = vmatpush2.msra.mxu0 0.0
        %2678 = vmatprep.subr.mxu0 0.0
        %2679 = vmatpush2.msra.mxu0 0.0
        %2680 = vmatprep.subr.mxu0 0.0
        %2681 = vmatpush2.msra.mxu0 0.0
        %2682 = vmatprep.subr.mxu0 0.0
        %2683 = vmatpush2.msra.mxu0 0.0
        %2684 = vmatprep.subr.mxu0 0.0
        %2685 = vmatpush2.msra.mxu0 0.0
        %2686 = vmatprep.subr.mxu0 0.0
        %2687 = vmatpush2.msra.mxu0 0.0
        %2688 = vmatprep.subr.mxu0 0.0
        %2689 = vmatpush2.msra.mxu0 0.0
        %2690 = vmatprep.subr.mxu0 0.0
        %2691 = vmatpush2.msra.mxu0 0.0
        %2692 = vmatprep.subr.mxu0 0.0
        %2693 = vmatpush2.msra.mxu0 0.0
        %2694 = vmatprep.subr.mxu0 0.0
        %2695 = vmatpush2.msra.mxu0 0.0
        %2696 = vmatprep.subr.mxu0 0.0
        %2697 = vmatpush2.msra.mxu0 0.0
        %2698 = vmatprep.mubr.f32.mxu0 0.0
        %2699 = vmatmul.mubr.f32.gmra.mxu0 %v2089
        %v2700 = vpop.f32.mrf.mxu0
        %v2701 = vadd.f32 %v2070, %v2700
        %v2702 = vpop.f32.mrf.mxu0
        %v2703 = vadd.f32 %v2070, %v2702
        %2704 = vmatprep.mubr.f32.mxu0 0.0
        %2705 = vmatmul.mubr.f32.gmra.mxu0 %v2092
        %v2706 = vpop.f32.mrf.mxu0
        %v2707 = vadd.f32 %v2075, %v2706
        %v2708 = vpop.f32.mrf.mxu0
        %v2709 = vadd.f32 %v2075, %v2708
        %2710 = vmatprep.mubr.f32.mxu0 0.0
        %2711 = vmatmul.mubr.f32.gmra.mxu0 %v2095
        %v2712 = vpop.f32.mrf.mxu0
        %v2713 = vadd.f32 %v2080, %v2712
        %v2714 = vpop.f32.mrf.mxu0
        %v2715 = vadd.f32 %v2080, %v2714
        %2716 = vmatprep.mubr.f32.mxu0 0.0
        %2717 = vmatmul.mubr.f32.gmra.mxu0 %v2098
        %v2718 = vpop.f32.mrf.mxu0
        %v2719 = vadd.f32 %v2085, %v2718
        %v2720 = vpop.f32.mrf.mxu0
        %v2721 = vadd.f32 %v2085, %v2720
        %2722 = vdwg.mxu0
        %2723 = vmatprep.subr.mxu0 0.0
        %2724 = vmatpush1.msra.mxu0 0.0
        %2725 = vmatprep.subr.mxu0 0.0
        %2726 = vmatpush1.msra.mxu0 0.0
        %2727 = vmatprep.subr.mxu0 0.0
        %2728 = vmatpush1.msra.mxu0 0.0
        %2729 = vmatprep.subr.mxu0 0.0
        %2730 = vmatpush1.msra.mxu0 0.0
        %2731 = vmatprep.subr.mxu0 0.0
        %2732 = vmatpush1.msra.mxu0 0.0
        %2733 = vmatprep.subr.mxu0 0.0
        %2734 = vmatpush1.msra.mxu0 0.0
        %2735 = vmatprep.subr.mxu0 0.0
        %2736 = vmatpush1.msra.mxu0 0.0
        %2737 = vmatprep.subr.mxu0 0.0
        %2738 = vmatpush1.msra.mxu0 0.0
        %2739 = vmatprep.subr.mxu0 0.0
        %2740 = vmatpush1.msra.mxu0 0.0
        %2741 = vmatprep.subr.mxu0 0.0
        %2742 = vmatpush1.msra.mxu0 0.0
        %2743 = vmatprep.subr.mxu0 0.0
        %2744 = vmatpush1.msra.mxu0 0.0
        %2745 = vmatprep.subr.mxu0 0.0
        %2746 = vmatpush1.msra.mxu0 0.0
        %2747 = vmatprep.subr.mxu0 %v2058
        %2748 = vmatpush1.msra.mxu0 %v2057
        %2749 = vmatprep.subr.mxu0 %v2042
        %2750 = vmatpush1.msra.mxu0 %v2041
        %2751 = vmatprep.subr.mxu0 %v2026
        %2752 = vmatpush1.msra.mxu0 %v2025
        %2753 = vmatprep.subr.mxu0 %v2010
        %2754 = vmatpush1.msra.mxu0 %v2009
        %2755 = vmatprep.subr.mxu0 0.0
        %2756 = vmatpush2.msra.mxu0 0.0
        %2757 = vmatprep.subr.mxu0 0.0
        %2758 = vmatpush2.msra.mxu0 0.0
        %2759 = vmatprep.subr.mxu0 0.0
        %2760 = vmatpush2.msra.mxu0 0.0
        %2761 = vmatprep.subr.mxu0 0.0
        %2762 = vmatpush2.msra.mxu0 0.0
        %2763 = vmatprep.subr.mxu0 0.0
        %2764 = vmatpush2.msra.mxu0 0.0
        %2765 = vmatprep.subr.mxu0 0.0
        %2766 = vmatpush2.msra.mxu0 0.0
        %2767 = vmatprep.subr.mxu0 0.0
        %2768 = vmatpush2.msra.mxu0 0.0
        %2769 = vmatprep.subr.mxu0 0.0
        %2770 = vmatpush2.msra.mxu0 0.0
        %2771 = vmatprep.subr.mxu0 0.0
        %2772 = vmatpush2.msra.mxu0 0.0
        %2773 = vmatprep.subr.mxu0 0.0
        %2774 = vmatpush2.msra.mxu0 0.0
        %2775 = vmatprep.subr.mxu0 0.0
        %2776 = vmatpush2.msra.mxu0 0.0
        %2777 = vmatprep.subr.mxu0 0.0
        %2778 = vmatpush2.msra.mxu0 0.0
        %2779 = vmatprep.subr.mxu0 0.0
        %2780 = vmatpush2.msra.mxu0 0.0
        %2781 = vmatprep.subr.mxu0 0.0
        %2782 = vmatpush2.msra.mxu0 0.0
        %2783 = vmatprep.subr.mxu0 0.0
        %2784 = vmatpush2.msra.mxu0 0.0
        %2785 = vmatprep.subr.mxu0 0.0
        %2786 = vmatpush2.msra.mxu0 0.0
        %2787 = vmatprep.mubr.f32.mxu0 0.0
        %2788 = vmatmul.mubr.f32.gmra.mxu0 %v2089
        %v2789 = vpop.f32.mrf.mxu0
        %v2790 = vadd.f32 %v2070, %v2789
        %v2791 = vpop.f32.mrf.mxu0
        %v2792 = vadd.f32 %v2070, %v2791
        %2793 = vmatprep.mubr.f32.mxu0 0.0
        %2794 = vmatmul.mubr.f32.gmra.mxu0 %v2092
        %v2795 = vpop.f32.mrf.mxu0
        %v2796 = vadd.f32 %v2075, %v2795
        %v2797 = vpop.f32.mrf.mxu0
        %v2798 = vadd.f32 %v2075, %v2797
        %2799 = vmatprep.mubr.f32.mxu0 0.0
        %2800 = vmatmul.mubr.f32.gmra.mxu0 %v2095
        %v2801 = vpop.f32.mrf.mxu0
        %v2802 = vadd.f32 %v2080, %v2801
        %v2803 = vpop.f32.mrf.mxu0
        %v2804 = vadd.f32 %v2080, %v2803
        %2805 = vmatprep.mubr.f32.mxu0 0.0
        %2806 = vmatmul.mubr.f32.gmra.mxu0 %v2098
        %v2807 = vpop.f32.mrf.mxu0
        %v2808 = vadd.f32 %v2085, %v2807
        %v2809 = vpop.f32.mrf.mxu0
        %v2810 = vadd.f32 %v2085, %v2809
        %2811 = vdwg.mxu0
        %v2812 = vtanh.pop %v2167
        %v2813 = vtanh.pop %v2169
        %v2814 = vtanh.pop %v2256
        %v2815 = vtanh.pop %v2258
        %v2816 = vtanh.pop %v2345
        %v2817 = vtanh.pop %v2347
        %v2818 = vtanh.pop %v2434
        %v2819 = vtanh.pop %v2436
        %v2820 = vtanh.pop %v2523
        %v2821 = vtanh.pop %v2525
        %v2822 = vtanh.pop %v2612
        %v2823 = vtanh.pop %v2614
        %v2824 = vtanh.pop %v2701
        %v2825 = vtanh.pop %v2703
        %v2826 = vtanh.pop %v2790
        %v2827 = vtanh.pop %v2792
        %v2828 = vtanh.pop %v2173
        %v2829 = vtanh.pop %v2175
        %v2830 = vtanh.pop %v2262
        %v2831 = vtanh.pop %v2264
        %v2832 = vtanh.pop %v2351
        %v2833 = vtanh.pop %v2353
        %v2834 = vtanh.pop %v2440
        %v2835 = vtanh.pop %v2442
        %v2836 = vtanh.pop %v2529
        %v2837 = vtanh.pop %v2531
        %v2838 = vtanh.pop %v2618
        %v2839 = vtanh.pop %v2620
        %v2840 = vtanh.pop %v2707
        %v2841 = vtanh.pop %v2709
        %v2842 = vtanh.pop %v2796
        %v2843 = vtanh.pop %v2798
        %v2844 = vtanh.pop %v2179
        %v2845 = vtanh.pop %v2181
        %v2846 = vtanh.pop %v2268
        %v2847 = vtanh.pop %v2270
        %v2848 = vtanh.pop %v2357
        %v2849 = vtanh.pop %v2359
        %v2850 = vtanh.pop %v2446
        %v2851 = vtanh.pop %v2448
        %v2852 = vtanh.pop %v2535
        %v2853 = vtanh.pop %v2537
        %v2854 = vtanh.pop %v2624
        %v2855 = vtanh.pop %v2626
        %v2856 = vtanh.pop %v2713
        %v2857 = vtanh.pop %v2715
        %v2858 = vtanh.pop %v2802
        %v2859 = vtanh.pop %v2804
        %v2860 = vtanh.pop %v2185
        %v2861 = vtanh.pop %v2187
        %v2862 = vtanh.pop %v2274
        %v2863 = vtanh.pop %v2276
        %v2864 = vtanh.pop %v2363
        %v2865 = vtanh.pop %v2365
        %v2866 = vtanh.pop %v2452
        %v2867 = vtanh.pop %v2454
        %v2868 = vtanh.pop %v2541
        %v2869 = vtanh.pop %v2543
        %v2870 = vtanh.pop %v2630
        %v2871 = vtanh.pop %v2632
        %v2872 = vtanh.pop %v2719
        %v2873 = vtanh.pop %v2721
        %v2874 = vtanh.pop %v2808
        %v2875 = vtanh.pop %v2810
        %s2876 = scalar_lea.vmem %s2, 32
        %v2877 = vld [vmem:[%s2876] sm:$0xff]
        %v2878 = vld [vmem:[%s2876 + $0x8] sm:$0xff]
        %v2879 = vld [vmem:[%s2876 + $0x10] sm:$0xff]
        %v2880 = vld [vmem:[%s2876 + $0x18] sm:$0xff]
        %s2881 = scalar_lea.vmem %s3, 32
        %v2882 = vld [vmem:[%s2881] sm:$0xff]
        %v2883 = vld [vmem:[%s2881 + $0x8] sm:$0xff]
        %v2884 = vld [vmem:[%s2881 + $0x10] sm:$0xff]
        %v2885 = vld [vmem:[%s2881 + $0x18] sm:$0xff]
        %2887 = vset.pattern.permute.xlu0 0
        %2888 = vperm.xlu0 %2887, %v2882
        %v2889 = vpop.permute.xlu0 %2888
        %2892 = vset.pattern.permute.xlu0 0
        %2893 = vperm.xlu0 %2892, %v2883
        %v2894 = vpop.permute.xlu0 %2893
        %2897 = vset.pattern.permute.xlu0 0
        %2898 = vperm.xlu0 %2897, %v2884
        %v2899 = vpop.permute.xlu0 %2898
        %2902 = vset.pattern.permute.xlu0 0
        %2903 = vperm.xlu0 %2902, %v2885
        %v2904 = vpop.permute.xlu0 %2903
        %v2907 = vsel %vm2087, %v2877, 0
        %v2910 = vsel %vm2087, %v2878, 0
        %v2913 = vsel %vm2087, %v2879, 0
        %v2916 = vsel %vm2087, %v2880, 0
        %2918 = vmatprep.subr.mxu0 0.0
        %2919 = vmatpush1.msra.mxu0 0.0
        %2920 = vmatprep.subr.mxu0 0.0
        %2921 = vmatpush1.msra.mxu0 0.0
        %2922 = vmatprep.subr.mxu0 0.0
        %2923 = vmatpush1.msra.mxu0 0.0
        %2924 = vmatprep.subr.mxu0 0.0
        %2925 = vmatpush1.msra.mxu0 0.0
        %2926 = vmatprep.subr.mxu0 0.0
        %2927 = vmatpush1.msra.mxu0 0.0
        %2928 = vmatprep.subr.mxu0 0.0
        %2929 = vmatpush1.msra.mxu0 0.0
        %2930 = vmatprep.subr.mxu0 0.0
        %2931 = vmatpush1.msra.mxu0 0.0
        %2932 = vmatprep.subr.mxu0 0.0
        %2933 = vmatpush1.msra.mxu0 0.0
        %2934 = vmatprep.subr.mxu0 0.0
        %2935 = vmatpush1.msra.mxu0 0.0
        %2936 = vmatprep.subr.mxu0 0.0
        %2937 = vmatpush1.msra.mxu0 0.0
        %2938 = vmatprep.subr.mxu0 0.0
        %2939 = vmatpush1.msra.mxu0 0.0
        %2940 = vmatprep.subr.mxu0 0.0
        %2941 = vmatpush1.msra.mxu0 0.0
        %2942 = vmatprep.subr.mxu0 %v2861
        %2943 = vmatpush1.msra.mxu0 %v2860
        %2944 = vmatprep.subr.mxu0 %v2845
        %2945 = vmatpush1.msra.mxu0 %v2844
        %2946 = vmatprep.subr.mxu0 %v2829
        %2947 = vmatpush1.msra.mxu0 %v2828
        %2948 = vmatprep.subr.mxu0 %v2813
        %2949 = vmatpush1.msra.mxu0 %v2812
        %2950 = vmatprep.subr.mxu0 0.0
        %2951 = vmatpush2.msra.mxu0 0.0
        %2952 = vmatprep.subr.mxu0 0.0
        %2953 = vmatpush2.msra.mxu0 0.0
        %2954 = vmatprep.subr.mxu0 0.0
        %2955 = vmatpush2.msra.mxu0 0.0
        %2956 = vmatprep.subr.mxu0 0.0
        %2957 = vmatpush2.msra.mxu0 0.0
        %2958 = vmatprep.subr.mxu0 0.0
        %2959 = vmatpush2.msra.mxu0 0.0
        %2960 = vmatprep.subr.mxu0 0.0
        %2961 = vmatpush2.msra.mxu0 0.0
        %2962 = vmatprep.subr.mxu0 0.0
        %2963 = vmatpush2.msra.mxu0 0.0
        %2964 = vmatprep.subr.mxu0 0.0
        %2965 = vmatpush2.msra.mxu0 0.0
        %2966 = vmatprep.subr.mxu0 0.0
        %2967 = vmatpush2.msra.mxu0 0.0
        %2968 = vmatprep.subr.mxu0 0.0
        %2969 = vmatpush2.msra.mxu0 0.0
        %2970 = vmatprep.subr.mxu0 0.0
        %2971 = vmatpush2.msra.mxu0 0.0
        %2972 = vmatprep.subr.mxu0 0.0
        %2973 = vmatpush2.msra.mxu0 0.0
        %2974 = vmatprep.subr.mxu0 0.0
        %2975 = vmatpush2.msra.mxu0 0.0
        %2976 = vmatprep.subr.mxu0 0.0
        %2977 = vmatpush2.msra.mxu0 0.0
        %2978 = vmatprep.subr.mxu0 0.0
        %2979 = vmatpush2.msra.mxu0 0.0
        %2980 = vmatprep.subr.mxu0 0.0
        %2981 = vmatpush2.msra.mxu0 0.0
        %2982 = vmatprep.mubr.f32.mxu0 0.0
        %2983 = vmatmul.mubr.f32.gmra.mxu0 %v2907
        %v2984 = vpop.f32.mrf.mxu0
        %v2985 = vadd.f32 %v2889, %v2984
        %v2986 = vpop.f32.mrf.mxu0
        %v2987 = vadd.f32 %v2889, %v2986
        %2988 = vmatprep.mubr.f32.mxu0 0.0
        %2989 = vmatmul.mubr.f32.gmra.mxu0 %v2910
        %v2990 = vpop.f32.mrf.mxu0
        %v2991 = vadd.f32 %v2894, %v2990
        %v2992 = vpop.f32.mrf.mxu0
        %v2993 = vadd.f32 %v2894, %v2992
        %2994 = vmatprep.mubr.f32.mxu0 0.0
        %2995 = vmatmul.mubr.f32.gmra.mxu0 %v2913
        %v2996 = vpop.f32.mrf.mxu0
        %v2997 = vadd.f32 %v2899, %v2996
        %v2998 = vpop.f32.mrf.mxu0
        %v2999 = vadd.f32 %v2899, %v2998
        %3000 = vmatprep.mubr.f32.mxu0 0.0
        %3001 = vmatmul.mubr.f32.gmra.mxu0 %v2916
        %v3002 = vpop.f32.mrf.mxu0
        %v3003 = vadd.f32 %v2904, %v3002
        %v3004 = vpop.f32.mrf.mxu0
        %v3005 = vadd.f32 %v2904, %v3004
        %3006 = vdwg.mxu0
        %3007 = vmatprep.subr.mxu0 0.0
        %3008 = vmatpush1.msra.mxu0 0.0
        %3009 = vmatprep.subr.mxu0 0.0
        %3010 = vmatpush1.msra.mxu0 0.0
        %3011 = vmatprep.subr.mxu0 0.0
        %3012 = vmatpush1.msra.mxu0 0.0
        %3013 = vmatprep.subr.mxu0 0.0
        %3014 = vmatpush1.msra.mxu0 0.0
        %3015 = vmatprep.subr.mxu0 0.0
        %3016 = vmatpush1.msra.mxu0 0.0
        %3017 = vmatprep.subr.mxu0 0.0
        %3018 = vmatpush1.msra.mxu0 0.0
        %3019 = vmatprep.subr.mxu0 0.0
        %3020 = vmatpush1.msra.mxu0 0.0
        %3021 = vmatprep.subr.mxu0 0.0
        %3022 = vmatpush1.msra.mxu0 0.0
        %3023 = vmatprep.subr.mxu0 0.0
        %3024 = vmatpush1.msra.mxu0 0.0
        %3025 = vmatprep.subr.mxu0 0.0
        %3026 = vmatpush1.msra.mxu0 0.0
        %3027 = vmatprep.subr.mxu0 0.0
        %3028 = vmatpush1.msra.mxu0 0.0
        %3029 = vmatprep.subr.mxu0 0.0
        %3030 = vmatpush1.msra.mxu0 0.0
        %3031 = vmatprep.subr.mxu0 %v2863
        %3032 = vmatpush1.msra.mxu0 %v2862
        %3033 = vmatprep.subr.mxu0 %v2847
        %3034 = vmatpush1.msra.mxu0 %v2846
        %3035 = vmatprep.subr.mxu0 %v2831
        %3036 = vmatpush1.msra.mxu0 %v2830
        %3037 = vmatprep.subr.mxu0 %v2815
        %3038 = vmatpush1.msra.mxu0 %v2814
        %3039 = vmatprep.subr.mxu0 0.0
        %3040 = vmatpush2.msra.mxu0 0.0
        %3041 = vmatprep.subr.mxu0 0.0
        %3042 = vmatpush2.msra.mxu0 0.0
        %3043 = vmatprep.subr.mxu0 0.0
        %3044 = vmatpush2.msra.mxu0 0.0
        %3045 = vmatprep.subr.mxu0 0.0
        %3046 = vmatpush2.msra.mxu0 0.0
        %3047 = vmatprep.subr.mxu0 0.0
        %3048 = vmatpush2.msra.mxu0 0.0
        %3049 = vmatprep.subr.mxu0 0.0
        %3050 = vmatpush2.msra.mxu0 0.0
        %3051 = vmatprep.subr.mxu0 0.0
        %3052 = vmatpush2.msra.mxu0 0.0
        %3053 = vmatprep.subr.mxu0 0.0
        %3054 = vmatpush2.msra.mxu0 0.0
        %3055 = vmatprep.subr.mxu0 0.0
        %3056 = vmatpush2.msra.mxu0 0.0
        %3057 = vmatprep.subr.mxu0 0.0
        %3058 = vmatpush2.msra.mxu0 0.0
        %3059 = vmatprep.subr.mxu0 0.0
        %3060 = vmatpush2.msra.mxu0 0.0
        %3061 = vmatprep.subr.mxu0 0.0
        %3062 = vmatpush2.msra.mxu0 0.0
        %3063 = vmatprep.subr.mxu0 0.0
        %3064 = vmatpush2.msra.mxu0 0.0
        %3065 = vmatprep.subr.mxu0 0.0
        %3066 = vmatpush2.msra.mxu0 0.0
        %3067 = vmatprep.subr.mxu0 0.0
        %3068 = vmatpush2.msra.mxu0 0.0
        %3069 = vmatprep.subr.mxu0 0.0
        %3070 = vmatpush2.msra.mxu0 0.0
        %3071 = vmatprep.mubr.f32.mxu0 0.0
        %3072 = vmatmul.mubr.f32.gmra.mxu0 %v2907
        %v3073 = vpop.f32.mrf.mxu0
        %v3074 = vadd.f32 %v2889, %v3073
        %v3075 = vpop.f32.mrf.mxu0
        %v3076 = vadd.f32 %v2889, %v3075
        %3077 = vmatprep.mubr.f32.mxu0 0.0
        %3078 = vmatmul.mubr.f32.gmra.mxu0 %v2910
        %v3079 = vpop.f32.mrf.mxu0
        %v3080 = vadd.f32 %v2894, %v3079
        %v3081 = vpop.f32.mrf.mxu0
        %v3082 = vadd.f32 %v2894, %v3081
        %3083 = vmatprep.mubr.f32.mxu0 0.0
        %3084 = vmatmul.mubr.f32.gmra.mxu0 %v2913
        %v3085 = vpop.f32.mrf.mxu0
        %v3086 = vadd.f32 %v2899, %v3085
        %v3087 = vpop.f32.mrf.mxu0
        %v3088 = vadd.f32 %v2899, %v3087
        %3089 = vmatprep.mubr.f32.mxu0 0.0
        %3090 = vmatmul.mubr.f32.gmra.mxu0 %v2916
        %v3091 = vpop.f32.mrf.mxu0
        %v3092 = vadd.f32 %v2904, %v3091
        %v3093 = vpop.f32.mrf.mxu0
        %v3094 = vadd.f32 %v2904, %v3093
        %3095 = vdwg.mxu0
        %3096 = vmatprep.subr.mxu0 0.0
        %3097 = vmatpush1.msra.mxu0 0.0
        %3098 = vmatprep.subr.mxu0 0.0
        %3099 = vmatpush1.msra.mxu0 0.0
        %3100 = vmatprep.subr.mxu0 0.0
        %3101 = vmatpush1.msra.mxu0 0.0
        %3102 = vmatprep.subr.mxu0 0.0
        %3103 = vmatpush1.msra.mxu0 0.0
        %3104 = vmatprep.subr.mxu0 0.0
        %3105 = vmatpush1.msra.mxu0 0.0
        %3106 = vmatprep.subr.mxu0 0.0
        %3107 = vmatpush1.msra.mxu0 0.0
        %3108 = vmatprep.subr.mxu0 0.0
        %3109 = vmatpush1.msra.mxu0 0.0
        %3110 = vmatprep.subr.mxu0 0.0
        %3111 = vmatpush1.msra.mxu0 0.0
        %3112 = vmatprep.subr.mxu0 0.0
        %3113 = vmatpush1.msra.mxu0 0.0
        %3114 = vmatprep.subr.mxu0 0.0
        %3115 = vmatpush1.msra.mxu0 0.0
        %3116 = vmatprep.subr.mxu0 0.0
        %3117 = vmatpush1.msra.mxu0 0.0
        %3118 = vmatprep.subr.mxu0 0.0
        %3119 = vmatpush1.msra.mxu0 0.0
        %3120 = vmatprep.subr.mxu0 %v2865
        %3121 = vmatpush1.msra.mxu0 %v2864
        %3122 = vmatprep.subr.mxu0 %v2849
        %3123 = vmatpush1.msra.mxu0 %v2848
        %3124 = vmatprep.subr.mxu0 %v2833
        %3125 = vmatpush1.msra.mxu0 %v2832
        %3126 = vmatprep.subr.mxu0 %v2817
        %3127 = vmatpush1.msra.mxu0 %v2816
        %3128 = vmatprep.subr.mxu0 0.0
        %3129 = vmatpush2.msra.mxu0 0.0
        %3130 = vmatprep.subr.mxu0 0.0
        %3131 = vmatpush2.msra.mxu0 0.0
        %3132 = vmatprep.subr.mxu0 0.0
        %3133 = vmatpush2.msra.mxu0 0.0
        %3134 = vmatprep.subr.mxu0 0.0
        %3135 = vmatpush2.msra.mxu0 0.0
        %3136 = vmatprep.subr.mxu0 0.0
        %3137 = vmatpush2.msra.mxu0 0.0
        %3138 = vmatprep.subr.mxu0 0.0
        %3139 = vmatpush2.msra.mxu0 0.0
        %3140 = vmatprep.subr.mxu0 0.0
        %3141 = vmatpush2.msra.mxu0 0.0
        %3142 = vmatprep.subr.mxu0 0.0
        %3143 = vmatpush2.msra.mxu0 0.0
        %3144 = vmatprep.subr.mxu0 0.0
        %3145 = vmatpush2.msra.mxu0 0.0
        %3146 = vmatprep.subr.mxu0 0.0
        %3147 = vmatpush2.msra.mxu0 0.0
        %3148 = vmatprep.subr.mxu0 0.0
        %3149 = vmatpush2.msra.mxu0 0.0
        %3150 = vmatprep.subr.mxu0 0.0
        %3151 = vmatpush2.msra.mxu0 0.0
        %3152 = vmatprep.subr.mxu0 0.0
        %3153 = vmatpush2.msra.mxu0 0.0
        %3154 = vmatprep.subr.mxu0 0.0
        %3155 = vmatpush2.msra.mxu0 0.0
        %3156 = vmatprep.subr.mxu0 0.0
        %3157 = vmatpush2.msra.mxu0 0.0
        %3158 = vmatprep.subr.mxu0 0.0
        %3159 = vmatpush2.msra.mxu0 0.0
        %3160 = vmatprep.mubr.f32.mxu0 0.0
        %3161 = vmatmul.mubr.f32.gmra.mxu0 %v2907
        %v3162 = vpop.f32.mrf.mxu0
        %v3163 = vadd.f32 %v2889, %v3162
        %v3164 = vpop.f32.mrf.mxu0
        %v3165 = vadd.f32 %v2889, %v3164
        %3166 = vmatprep.mubr.f32.mxu0 0.0
        %3167 = vmatmul.mubr.f32.gmra.mxu0 %v2910
        %v3168 = vpop.f32.mrf.mxu0
        %v3169 = vadd.f32 %v2894, %v3168
        %v3170 = vpop.f32.mrf.mxu0
        %v3171 = vadd.f32 %v2894, %v3170
        %3172 = vmatprep.mubr.f32.mxu0 0.0
        %3173 = vmatmul.mubr.f32.gmra.mxu0 %v2913
        %v3174 = vpop.f32.mrf.mxu0
        %v3175 = vadd.f32 %v2899, %v3174
        %v3176 = vpop.f32.mrf.mxu0
        %v3177 = vadd.f32 %v2899, %v3176
        %3178 = vmatprep.mubr.f32.mxu0 0.0
        %3179 = vmatmul.mubr.f32.gmra.mxu0 %v2916
        %v3180 = vpop.f32.mrf.mxu0
        %v3181 = vadd.f32 %v2904, %v3180
        %v3182 = vpop.f32.mrf.mxu0
        %v3183 = vadd.f32 %v2904, %v3182
        %3184 = vdwg.mxu0
        %3185 = vmatprep.subr.mxu0 0.0
        %3186 = vmatpush1.msra.mxu0 0.0
        %3187 = vmatprep.subr.mxu0 0.0
        %3188 = vmatpush1.msra.mxu0 0.0
        %3189 = vmatprep.subr.mxu0 0.0
        %3190 = vmatpush1.msra.mxu0 0.0
        %3191 = vmatprep.subr.mxu0 0.0
        %3192 = vmatpush1.msra.mxu0 0.0
        %3193 = vmatprep.subr.mxu0 0.0
        %3194 = vmatpush1.msra.mxu0 0.0
        %3195 = vmatprep.subr.mxu0 0.0
        %3196 = vmatpush1.msra.mxu0 0.0
        %3197 = vmatprep.subr.mxu0 0.0
        %3198 = vmatpush1.msra.mxu0 0.0
        %3199 = vmatprep.subr.mxu0 0.0
        %3200 = vmatpush1.msra.mxu0 0.0
        %3201 = vmatprep.subr.mxu0 0.0
        %3202 = vmatpush1.msra.mxu0 0.0
        %3203 = vmatprep.subr.mxu0 0.0
        %3204 = vmatpush1.msra.mxu0 0.0
        %3205 = vmatprep.subr.mxu0 0.0
        %3206 = vmatpush1.msra.mxu0 0.0
        %3207 = vmatprep.subr.mxu0 0.0
        %3208 = vmatpush1.msra.mxu0 0.0
        %3209 = vmatprep.subr.mxu0 %v2867
        %3210 = vmatpush1.msra.mxu0 %v2866
        %3211 = vmatprep.subr.mxu0 %v2851
        %3212 = vmatpush1.msra.mxu0 %v2850
        %3213 = vmatprep.subr.mxu0 %v2835
        %3214 = vmatpush1.msra.mxu0 %v2834
        %3215 = vmatprep.subr.mxu0 %v2819
        %3216 = vmatpush1.msra.mxu0 %v2818
        %3217 = vmatprep.subr.mxu0 0.0
        %3218 = vmatpush2.msra.mxu0 0.0
        %3219 = vmatprep.subr.mxu0 0.0
        %3220 = vmatpush2.msra.mxu0 0.0
        %3221 = vmatprep.subr.mxu0 0.0
        %3222 = vmatpush2.msra.mxu0 0.0
        %3223 = vmatprep.subr.mxu0 0.0
        %3224 = vmatpush2.msra.mxu0 0.0
        %3225 = vmatprep.subr.mxu0 0.0
        %3226 = vmatpush2.msra.mxu0 0.0
        %3227 = vmatprep.subr.mxu0 0.0
        %3228 = vmatpush2.msra.mxu0 0.0
        %3229 = vmatprep.subr.mxu0 0.0
        %3230 = vmatpush2.msra.mxu0 0.0
        %3231 = vmatprep.subr.mxu0 0.0
        %3232 = vmatpush2.msra.mxu0 0.0
        %3233 = vmatprep.subr.mxu0 0.0
        %3234 = vmatpush2.msra.mxu0 0.0
        %3235 = vmatprep.subr.mxu0 0.0
        %3236 = vmatpush2.msra.mxu0 0.0
        %3237 = vmatprep.subr.mxu0 0.0
        %3238 = vmatpush2.msra.mxu0 0.0
        %3239 = vmatprep.subr.mxu0 0.0
        %3240 = vmatpush2.msra.mxu0 0.0
        %3241 = vmatprep.subr.mxu0 0.0
        %3242 = vmatpush2.msra.mxu0 0.0
        %3243 = vmatprep.subr.mxu0 0.0
        %3244 = vmatpush2.msra.mxu0 0.0
        %3245 = vmatprep.subr.mxu0 0.0
        %3246 = vmatpush2.msra.mxu0 0.0
        %3247 = vmatprep.subr.mxu0 0.0
        %3248 = vmatpush2.msra.mxu0 0.0
        %3249 = vmatprep.mubr.f32.mxu0 0.0
        %3250 = vmatmul.mubr.f32.gmra.mxu0 %v2907
        %v3251 = vpop.f32.mrf.mxu0
        %v3252 = vadd.f32 %v2889, %v3251
        %v3253 = vpop.f32.mrf.mxu0
        %v3254 = vadd.f32 %v2889, %v3253
        %3255 = vmatprep.mubr.f32.mxu0 0.0
        %3256 = vmatmul.mubr.f32.gmra.mxu0 %v2910
        %v3257 = vpop.f32.mrf.mxu0
        %v3258 = vadd.f32 %v2894, %v3257
        %v3259 = vpop.f32.mrf.mxu0
        %v3260 = vadd.f32 %v2894, %v3259
        %3261 = vmatprep.mubr.f32.mxu0 0.0
        %3262 = vmatmul.mubr.f32.gmra.mxu0 %v2913
        %v3263 = vpop.f32.mrf.mxu0
        %v3264 = vadd.f32 %v2899, %v3263
        %v3265 = vpop.f32.mrf.mxu0
        %v3266 = vadd.f32 %v2899, %v3265
        %3267 = vmatprep.mubr.f32.mxu0 0.0
        %3268 = vmatmul.mubr.f32.gmra.mxu0 %v2916
        %v3269 = vpop.f32.mrf.mxu0
        %v3270 = vadd.f32 %v2904, %v3269
        %v3271 = vpop.f32.mrf.mxu0
        %v3272 = vadd.f32 %v2904, %v3271
        %3273 = vdwg.mxu0
        %3274 = vmatprep.subr.mxu0 0.0
        %3275 = vmatpush1.msra.mxu0 0.0
        %3276 = vmatprep.subr.mxu0 0.0
        %3277 = vmatpush1.msra.mxu0 0.0
        %3278 = vmatprep.subr.mxu0 0.0
        %3279 = vmatpush1.msra.mxu0 0.0
        %3280 = vmatprep.subr.mxu0 0.0
        %3281 = vmatpush1.msra.mxu0 0.0
        %3282 = vmatprep.subr.mxu0 0.0
        %3283 = vmatpush1.msra.mxu0 0.0
        %3284 = vmatprep.subr.mxu0 0.0
        %3285 = vmatpush1.msra.mxu0 0.0
        %3286 = vmatprep.subr.mxu0 0.0
        %3287 = vmatpush1.msra.mxu0 0.0
        %3288 = vmatprep.subr.mxu0 0.0
        %3289 = vmatpush1.msra.mxu0 0.0
        %3290 = vmatprep.subr.mxu0 0.0
        %3291 = vmatpush1.msra.mxu0 0.0
        %3292 = vmatprep.subr.mxu0 0.0
        %3293 = vmatpush1.msra.mxu0 0.0
        %3294 = vmatprep.subr.mxu0 0.0
        %3295 = vmatpush1.msra.mxu0 0.0
        %3296 = vmatprep.subr.mxu0 0.0
        %3297 = vmatpush1.msra.mxu0 0.0
        %3298 = vmatprep.subr.mxu0 %v2869
        %3299 = vmatpush1.msra.mxu0 %v2868
        %3300 = vmatprep.subr.mxu0 %v2853
        %3301 = vmatpush1.msra.mxu0 %v2852
        %3302 = vmatprep.subr.mxu0 %v2837
        %3303 = vmatpush1.msra.mxu0 %v2836
        %3304 = vmatprep.subr.mxu0 %v2821
        %3305 = vmatpush1.msra.mxu0 %v2820
        %3306 = vmatprep.subr.mxu0 0.0
        %3307 = vmatpush2.msra.mxu0 0.0
        %3308 = vmatprep.subr.mxu0 0.0
        %3309 = vmatpush2.msra.mxu0 0.0
        %3310 = vmatprep.subr.mxu0 0.0
        %3311 = vmatpush2.msra.mxu0 0.0
        %3312 = vmatprep.subr.mxu0 0.0
        %3313 = vmatpush2.msra.mxu0 0.0
        %3314 = vmatprep.subr.mxu0 0.0
        %3315 = vmatpush2.msra.mxu0 0.0
        %3316 = vmatprep.subr.mxu0 0.0
        %3317 = vmatpush2.msra.mxu0 0.0
        %3318 = vmatprep.subr.mxu0 0.0
        %3319 = vmatpush2.msra.mxu0 0.0
        %3320 = vmatprep.subr.mxu0 0.0
        %3321 = vmatpush2.msra.mxu0 0.0
        %3322 = vmatprep.subr.mxu0 0.0
        %3323 = vmatpush2.msra.mxu0 0.0
        %3324 = vmatprep.subr.mxu0 0.0
        %3325 = vmatpush2.msra.mxu0 0.0
        %3326 = vmatprep.subr.mxu0 0.0
        %3327 = vmatpush2.msra.mxu0 0.0
        %3328 = vmatprep.subr.mxu0 0.0
        %3329 = vmatpush2.msra.mxu0 0.0
        %3330 = vmatprep.subr.mxu0 0.0
        %3331 = vmatpush2.msra.mxu0 0.0
        %3332 = vmatprep.subr.mxu0 0.0
        %3333 = vmatpush2.msra.mxu0 0.0
        %3334 = vmatprep.subr.mxu0 0.0
        %3335 = vmatpush2.msra.mxu0 0.0
        %3336 = vmatprep.subr.mxu0 0.0
        %3337 = vmatpush2.msra.mxu0 0.0
        %3338 = vmatprep.mubr.f32.mxu0 0.0
        %3339 = vmatmul.mubr.f32.gmra.mxu0 %v2907
        %v3340 = vpop.f32.mrf.mxu0
        %v3341 = vadd.f32 %v2889, %v3340
        %v3342 = vpop.f32.mrf.mxu0
        %v3343 = vadd.f32 %v2889, %v3342
        %3344 = vmatprep.mubr.f32.mxu0 0.0
        %3345 = vmatmul.mubr.f32.gmra.mxu0 %v2910
        %v3346 = vpop.f32.mrf.mxu0
        %v3347 = vadd.f32 %v2894, %v3346
        %v3348 = vpop.f32.mrf.mxu0
        %v3349 = vadd.f32 %v2894, %v3348
        %3350 = vmatprep.mubr.f32.mxu0 0.0
        %3351 = vmatmul.mubr.f32.gmra.mxu0 %v2913
        %v3352 = vpop.f32.mrf.mxu0
        %v3353 = vadd.f32 %v2899, %v3352
        %v3354 = vpop.f32.mrf.mxu0
        %v3355 = vadd.f32 %v2899, %v3354
        %3356 = vmatprep.mubr.f32.mxu0 0.0
        %3357 = vmatmul.mubr.f32.gmra.mxu0 %v2916
        %v3358 = vpop.f32.mrf.mxu0
        %v3359 = vadd.f32 %v2904, %v3358
        %v3360 = vpop.f32.mrf.mxu0
        %v3361 = vadd.f32 %v2904, %v3360
        %3362 = vdwg.mxu0
        %3363 = vmatprep.subr.mxu0 0.0
        %3364 = vmatpush1.msra.mxu0 0.0
        %3365 = vmatprep.subr.mxu0 0.0
        %3366 = vmatpush1.msra.mxu0 0.0
        %3367 = vmatprep.subr.mxu0 0.0
        %3368 = vmatpush1.msra.mxu0 0.0
        %3369 = vmatprep.subr.mxu0 0.0
        %3370 = vmatpush1.msra.mxu0 0.0
        %3371 = vmatprep.subr.mxu0 0.0
        %3372 = vmatpush1.msra.mxu0 0.0
        %3373 = vmatprep.subr.mxu0 0.0
        %3374 = vmatpush1.msra.mxu0 0.0
        %3375 = vmatprep.subr.mxu0 0.0
        %3376 = vmatpush1.msra.mxu0 0.0
        %3377 = vmatprep.subr.mxu0 0.0
        %3378 = vmatpush1.msra.mxu0 0.0
        %3379 = vmatprep.subr.mxu0 0.0
        %3380 = vmatpush1.msra.mxu0 0.0
        %3381 = vmatprep.subr.mxu0 0.0
        %3382 = vmatpush1.msra.mxu0 0.0
        %3383 = vmatprep.subr.mxu0 0.0
        %3384 = vmatpush1.msra.mxu0 0.0
        %3385 = vmatprep.subr.mxu0 0.0
        %3386 = vmatpush1.msra.mxu0 0.0
        %3387 = vmatprep.subr.mxu0 %v2871
        %3388 = vmatpush1.msra.mxu0 %v2870
        %3389 = vmatprep.subr.mxu0 %v2855
        %3390 = vmatpush1.msra.mxu0 %v2854
        %3391 = vmatprep.subr.mxu0 %v2839
        %3392 = vmatpush1.msra.mxu0 %v2838
        %3393 = vmatprep.subr.mxu0 %v2823
        %3394 = vmatpush1.msra.mxu0 %v2822
        %3395 = vmatprep.subr.mxu0 0.0
        %3396 = vmatpush2.msra.mxu0 0.0
        %3397 = vmatprep.subr.mxu0 0.0
        %3398 = vmatpush2.msra.mxu0 0.0
        %3399 = vmatprep.subr.mxu0 0.0
        %3400 = vmatpush2.msra.mxu0 0.0
        %3401 = vmatprep.subr.mxu0 0.0
        %3402 = vmatpush2.msra.mxu0 0.0
        %3403 = vmatprep.subr.mxu0 0.0
        %3404 = vmatpush2.msra.mxu0 0.0
        %3405 = vmatprep.subr.mxu0 0.0
        %3406 = vmatpush2.msra.mxu0 0.0
        %3407 = vmatprep.subr.mxu0 0.0
        %3408 = vmatpush2.msra.mxu0 0.0
        %3409 = vmatprep.subr.mxu0 0.0
        %3410 = vmatpush2.msra.mxu0 0.0
        %3411 = vmatprep.subr.mxu0 0.0
        %3412 = vmatpush2.msra.mxu0 0.0
        %3413 = vmatprep.subr.mxu0 0.0
        %3414 = vmatpush2.msra.mxu0 0.0
        %3415 = vmatprep.subr.mxu0 0.0
        %3416 = vmatpush2.msra.mxu0 0.0
        %3417 = vmatprep.subr.mxu0 0.0
        %3418 = vmatpush2.msra.mxu0 0.0
        %3419 = vmatprep.subr.mxu0 0.0
        %3420 = vmatpush2.msra.mxu0 0.0
        %3421 = vmatprep.subr.mxu0 0.0
        %3422 = vmatpush2.msra.mxu0 0.0
        %3423 = vmatprep.subr.mxu0 0.0
        %3424 = vmatpush2.msra.mxu0 0.0
        %3425 = vmatprep.subr.mxu0 0.0
        %3426 = vmatpush2.msra.mxu0 0.0
        %3427 = vmatprep.mubr.f32.mxu0 0.0
        %3428 = vmatmul.mubr.f32.gmra.mxu0 %v2907
        %v3429 = vpop.f32.mrf.mxu0
        %v3430 = vadd.f32 %v2889, %v3429
        %v3431 = vpop.f32.mrf.mxu0
        %v3432 = vadd.f32 %v2889, %v3431
        %3433 = vmatprep.mubr.f32.mxu0 0.0
        %3434 = vmatmul.mubr.f32.gmra.mxu0 %v2910
        %v3435 = vpop.f32.mrf.mxu0
        %v3436 = vadd.f32 %v2894, %v3435
        %v3437 = vpop.f32.mrf.mxu0
        %v3438 = vadd.f32 %v2894, %v3437
        %3439 = vmatprep.mubr.f32.mxu0 0.0
        %3440 = vmatmul.mubr.f32.gmra.mxu0 %v2913
        %v3441 = vpop.f32.mrf.mxu0
        %v3442 = vadd.f32 %v2899, %v3441
        %v3443 = vpop.f32.mrf.mxu0
        %v3444 = vadd.f32 %v2899, %v3443
        %3445 = vmatprep.mubr.f32.mxu0 0.0
        %3446 = vmatmul.mubr.f32.gmra.mxu0 %v2916
        %v3447 = vpop.f32.mrf.mxu0
        %v3448 = vadd.f32 %v2904, %v3447
        %v3449 = vpop.f32.mrf.mxu0
        %v3450 = vadd.f32 %v2904, %v3449
        %3451 = vdwg.mxu0
        %3452 = vmatprep.subr.mxu0 0.0
        %3453 = vmatpush1.msra.mxu0 0.0
        %3454 = vmatprep.subr.mxu0 0.0
        %3455 = vmatpush1.msra.mxu0 0.0
        %3456 = vmatprep.subr.mxu0 0.0
        %3457 = vmatpush1.msra.mxu0 0.0
        %3458 = vmatprep.subr.mxu0 0.0
        %3459 = vmatpush1.msra.mxu0 0.0
        %3460 = vmatprep.subr.mxu0 0.0
        %3461 = vmatpush1.msra.mxu0 0.0
        %3462 = vmatprep.subr.mxu0 0.0
        %3463 = vmatpush1.msra.mxu0 0.0
        %3464 = vmatprep.subr.mxu0 0.0
        %3465 = vmatpush1.msra.mxu0 0.0
        %3466 = vmatprep.subr.mxu0 0.0
        %3467 = vmatpush1.msra.mxu0 0.0
        %3468 = vmatprep.subr.mxu0 0.0
        %3469 = vmatpush1.msra.mxu0 0.0
        %3470 = vmatprep.subr.mxu0 0.0
        %3471 = vmatpush1.msra.mxu0 0.0
        %3472 = vmatprep.subr.mxu0 0.0
        %3473 = vmatpush1.msra.mxu0 0.0
        %3474 = vmatprep.subr.mxu0 0.0
        %3475 = vmatpush1.msra.mxu0 0.0
        %3476 = vmatprep.subr.mxu0 %v2873
        %3477 = vmatpush1.msra.mxu0 %v2872
        %3478 = vmatprep.subr.mxu0 %v2857
        %3479 = vmatpush1.msra.mxu0 %v2856
        %3480 = vmatprep.subr.mxu0 %v2841
        %3481 = vmatpush1.msra.mxu0 %v2840
        %3482 = vmatprep.subr.mxu0 %v2825
        %3483 = vmatpush1.msra.mxu0 %v2824
        %3484 = vmatprep.subr.mxu0 0.0
        %3485 = vmatpush2.msra.mxu0 0.0
        %3486 = vmatprep.subr.mxu0 0.0
        %3487 = vmatpush2.msra.mxu0 0.0
        %3488 = vmatprep.subr.mxu0 0.0
        %3489 = vmatpush2.msra.mxu0 0.0
        %3490 = vmatprep.subr.mxu0 0.0
        %3491 = vmatpush2.msra.mxu0 0.0
        %3492 = vmatprep.subr.mxu0 0.0
        %3493 = vmatpush2.msra.mxu0 0.0
        %3494 = vmatprep.subr.mxu0 0.0
        %3495 = vmatpush2.msra.mxu0 0.0
        %3496 = vmatprep.subr.mxu0 0.0
        %3497 = vmatpush2.msra.mxu0 0.0
        %3498 = vmatprep.subr.mxu0 0.0
        %3499 = vmatpush2.msra.mxu0 0.0
        %3500 = vmatprep.subr.mxu0 0.0
        %3501 = vmatpush2.msra.mxu0 0.0
        %3502 = vmatprep.subr.mxu0 0.0
        %3503 = vmatpush2.msra.mxu0 0.0
        %3504 = vmatprep.subr.mxu0 0.0
        %3505 = vmatpush2.msra.mxu0 0.0
        %3506 = vmatprep.subr.mxu0 0.0
        %3507 = vmatpush2.msra.mxu0 0.0
        %3508 = vmatprep.subr.mxu0 0.0
        %3509 = vmatpush2.msra.mxu0 0.0
        %3510 = vmatprep.subr.mxu0 0.0
        %3511 = vmatpush2.msra.mxu0 0.0
        %3512 = vmatprep.subr.mxu0 0.0
        %3513 = vmatpush2.msra.mxu0 0.0
        %3514 = vmatprep.subr.mxu0 0.0
        %3515 = vmatpush2.msra.mxu0 0.0
        %3516 = vmatprep.mubr.f32.mxu0 0.0
        %3517 = vmatmul.mubr.f32.gmra.mxu0 %v2907
        %v3518 = vpop.f32.mrf.mxu0
        %v3519 = vadd.f32 %v2889, %v3518
        %v3520 = vpop.f32.mrf.mxu0
        %v3521 = vadd.f32 %v2889, %v3520
        %3522 = vmatprep.mubr.f32.mxu0 0.0
        %3523 = vmatmul.mubr.f32.gmra.mxu0 %v2910
        %v3524 = vpop.f32.mrf.mxu0
        %v3525 = vadd.f32 %v2894, %v3524
        %v3526 = vpop.f32.mrf.mxu0
        %v3527 = vadd.f32 %v2894, %v3526
        %3528 = vmatprep.mubr.f32.mxu0 0.0
        %3529 = vmatmul.mubr.f32.gmra.mxu0 %v2913
        %v3530 = vpop.f32.mrf.mxu0
        %v3531 = vadd.f32 %v2899, %v3530
        %v3532 = vpop.f32.mrf.mxu0
        %v3533 = vadd.f32 %v2899, %v3532
        %3534 = vmatprep.mubr.f32.mxu0 0.0
        %3535 = vmatmul.mubr.f32.gmra.mxu0 %v2916
        %v3536 = vpop.f32.mrf.mxu0
        %v3537 = vadd.f32 %v2904, %v3536
        %v3538 = vpop.f32.mrf.mxu0
        %v3539 = vadd.f32 %v2904, %v3538
        %3540 = vdwg.mxu0
        %3541 = vmatprep.subr.mxu0 0.0
        %3542 = vmatpush1.msra.mxu0 0.0
        %3543 = vmatprep.subr.mxu0 0.0
        %3544 = vmatpush1.msra.mxu0 0.0
        %3545 = vmatprep.subr.mxu0 0.0
        %3546 = vmatpush1.msra.mxu0 0.0
        %3547 = vmatprep.subr.mxu0 0.0
        %3548 = vmatpush1.msra.mxu0 0.0
        %3549 = vmatprep.subr.mxu0 0.0
        %3550 = vmatpush1.msra.mxu0 0.0
        %3551 = vmatprep.subr.mxu0 0.0
        %3552 = vmatpush1.msra.mxu0 0.0
        %3553 = vmatprep.subr.mxu0 0.0
        %3554 = vmatpush1.msra.mxu0 0.0
        %3555 = vmatprep.subr.mxu0 0.0
        %3556 = vmatpush1.msra.mxu0 0.0
        %3557 = vmatprep.subr.mxu0 0.0
        %3558 = vmatpush1.msra.mxu0 0.0
        %3559 = vmatprep.subr.mxu0 0.0
        %3560 = vmatpush1.msra.mxu0 0.0
        %3561 = vmatprep.subr.mxu0 0.0
        %3562 = vmatpush1.msra.mxu0 0.0
        %3563 = vmatprep.subr.mxu0 0.0
        %3564 = vmatpush1.msra.mxu0 0.0
        %3565 = vmatprep.subr.mxu0 %v2875
        %3566 = vmatpush1.msra.mxu0 %v2874
        %3567 = vmatprep.subr.mxu0 %v2859
        %3568 = vmatpush1.msra.mxu0 %v2858
        %3569 = vmatprep.subr.mxu0 %v2843
        %3570 = vmatpush1.msra.mxu0 %v2842
        %3571 = vmatprep.subr.mxu0 %v2827
        %3572 = vmatpush1.msra.mxu0 %v2826
        %3573 = vmatprep.subr.mxu0 0.0
        %3574 = vmatpush2.msra.mxu0 0.0
        %3575 = vmatprep.subr.mxu0 0.0
        %3576 = vmatpush2.msra.mxu0 0.0
        %3577 = vmatprep.subr.mxu0 0.0
        %3578 = vmatpush2.msra.mxu0 0.0
        %3579 = vmatprep.subr.mxu0 0.0
        %3580 = vmatpush2.msra.mxu0 0.0
        %3581 = vmatprep.subr.mxu0 0.0
        %3582 = vmatpush2.msra.mxu0 0.0
        %3583 = vmatprep.subr.mxu0 0.0
        %3584 = vmatpush2.msra.mxu0 0.0
        %3585 = vmatprep.subr.mxu0 0.0
        %3586 = vmatpush2.msra.mxu0 0.0
        %3587 = vmatprep.subr.mxu0 0.0
        %3588 = vmatpush2.msra.mxu0 0.0
        %3589 = vmatprep.subr.mxu0 0.0
        %3590 = vmatpush2.msra.mxu0 0.0
        %3591 = vmatprep.subr.mxu0 0.0
        %3592 = vmatpush2.msra.mxu0 0.0
        %3593 = vmatprep.subr.mxu0 0.0
        %3594 = vmatpush2.msra.mxu0 0.0
        %3595 = vmatprep.subr.mxu0 0.0
        %3596 = vmatpush2.msra.mxu0 0.0
        %3597 = vmatprep.subr.mxu0 0.0
        %3598 = vmatpush2.msra.mxu0 0.0
        %3599 = vmatprep.subr.mxu0 0.0
        %3600 = vmatpush2.msra.mxu0 0.0
        %3601 = vmatprep.subr.mxu0 0.0
        %3602 = vmatpush2.msra.mxu0 0.0
        %3603 = vmatprep.subr.mxu0 0.0
        %3604 = vmatpush2.msra.mxu0 0.0
        %3605 = vmatprep.mubr.f32.mxu0 0.0
        %3606 = vmatmul.mubr.f32.gmra.mxu0 %v2907
        %v3607 = vpop.f32.mrf.mxu0
        %v3608 = vadd.f32 %v2889, %v3607
        %v3609 = vpop.f32.mrf.mxu0
        %v3610 = vadd.f32 %v2889, %v3609
        %3611 = vmatprep.mubr.f32.mxu0 0.0
        %3612 = vmatmul.mubr.f32.gmra.mxu0 %v2910
        %v3613 = vpop.f32.mrf.mxu0
        %v3614 = vadd.f32 %v2894, %v3613
        %v3615 = vpop.f32.mrf.mxu0
        %v3616 = vadd.f32 %v2894, %v3615
        %3617 = vmatprep.mubr.f32.mxu0 0.0
        %3618 = vmatmul.mubr.f32.gmra.mxu0 %v2913
        %v3619 = vpop.f32.mrf.mxu0
        %v3620 = vadd.f32 %v2899, %v3619
        %v3621 = vpop.f32.mrf.mxu0
        %v3622 = vadd.f32 %v2899, %v3621
        %3623 = vmatprep.mubr.f32.mxu0 0.0
        %3624 = vmatmul.mubr.f32.gmra.mxu0 %v2916
        %v3625 = vpop.f32.mrf.mxu0
        %v3626 = vadd.f32 %v2904, %v3625
        %v3627 = vpop.f32.mrf.mxu0
        %v3628 = vadd.f32 %v2904, %v3627
        %3629 = vdwg.mxu0
        %v3630 = vtanh.pop %v2985
        %v3631 = vtanh.pop %v2987
        %v3632 = vtanh.pop %v3074
        %v3633 = vtanh.pop %v3076
        %v3634 = vtanh.pop %v3163
        %v3635 = vtanh.pop %v3165
        %v3636 = vtanh.pop %v3252
        %v3637 = vtanh.pop %v3254
        %v3638 = vtanh.pop %v3341
        %v3639 = vtanh.pop %v3343
        %v3640 = vtanh.pop %v3430
        %v3641 = vtanh.pop %v3432
        %v3642 = vtanh.pop %v3519
        %v3643 = vtanh.pop %v3521
        %v3644 = vtanh.pop %v3608
        %v3645 = vtanh.pop %v3610
        %v3646 = vtanh.pop %v2991
        %v3647 = vtanh.pop %v2993
        %v3648 = vtanh.pop %v3080
        %v3649 = vtanh.pop %v3082
        %v3650 = vtanh.pop %v3169
        %v3651 = vtanh.pop %v3171
        %v3652 = vtanh.pop %v3258
        %v3653 = vtanh.pop %v3260
        %v3654 = vtanh.pop %v3347
        %v3655 = vtanh.pop %v3349
        %v3656 = vtanh.pop %v3436
        %v3657 = vtanh.pop %v3438
        %v3658 = vtanh.pop %v3525
        %v3659 = vtanh.pop %v3527
        %v3660 = vtanh.pop %v3614
        %v3661 = vtanh.pop %v3616
        %v3662 = vtanh.pop %v2997
        %v3663 = vtanh.pop %v2999
        %v3664 = vtanh.pop %v3086
        %v3665 = vtanh.pop %v3088
        %v3666 = vtanh.pop %v3175
        %v3667 = vtanh.pop %v3177
        %v3668 = vtanh.pop %v3264
        %v3669 = vtanh.pop %v3266
        %v3670 = vtanh.pop %v3353
        %v3671 = vtanh.pop %v3355
        %v3672 = vtanh.pop %v3442
        %v3673 = vtanh.pop %v3444
        %v3674 = vtanh.pop %v3531
        %v3675 = vtanh.pop %v3533
        %v3676 = vtanh.pop %v3620
        %v3677 = vtanh.pop %v3622
        %v3678 = vtanh.pop %v3003
        %v3679 = vtanh.pop %v3005
        %v3680 = vtanh.pop %v3092
        %v3681 = vtanh.pop %v3094
        %v3682 = vtanh.pop %v3181
        %v3683 = vtanh.pop %v3183
        %v3684 = vtanh.pop %v3270
        %v3685 = vtanh.pop %v3272
        %v3686 = vtanh.pop %v3359
        %v3687 = vtanh.pop %v3361
        %v3688 = vtanh.pop %v3448
        %v3689 = vtanh.pop %v3450
        %v3690 = vtanh.pop %v3537
        %v3691 = vtanh.pop %v3539
        %v3692 = vtanh.pop %v3626
        %v3693 = vtanh.pop %v3628
        %v3694 = vld [vmem:[%s4] sm:$0xff]
        %v3695 = vld [vmem:[%s4 + $0x8] sm:$0xff]
        %v3696 = vld [vmem:[%s4 + $0x10] sm:$0xff]
        %v3697 = vld [vmem:[%s4 + $0x18] sm:$0xff]
        %v3698 = vld [vmem:[%s4 + $0x20] sm:$0x1]
        %3700 = vset.pattern.permute.xlu0 0
        %3701 = vperm.xlu0 %3700, %v3694
        %v3702 = vpop.permute.xlu0 %3701
        %3705 = vset.pattern.permute.xlu0 0
        %3706 = vperm.xlu0 %3705, %v3695
        %v3707 = vpop.permute.xlu0 %3706
        %3710 = vset.pattern.permute.xlu0 0
        %3711 = vperm.xlu0 %3710, %v3696
        %v3712 = vpop.permute.xlu0 %3711
        %3715 = vset.pattern.permute.xlu0 0
        %3716 = vperm.xlu0 %3715, %v3697
        %v3717 = vpop.permute.xlu0 %3716
        %v3719 = vmul.f32 %v3702, %v3630
        %v3720 = vmul.f32 %v3702, %v3631
        %v3721 = vmul.f32 %v3702, %v3632
        %v3722 = vmul.f32 %v3702, %v3633
        %v3723 = vmul.f32 %v3702, %v3634
        %v3724 = vmul.f32 %v3702, %v3635
        %v3725 = vmul.f32 %v3702, %v3636
        %v3726 = vmul.f32 %v3702, %v3637
        %v3727 = vmul.f32 %v3702, %v3638
        %v3728 = vmul.f32 %v3702, %v3639
        %v3729 = vmul.f32 %v3702, %v3640
        %v3730 = vmul.f32 %v3702, %v3641
        %v3731 = vmul.f32 %v3702, %v3642
        %v3732 = vmul.f32 %v3702, %v3643
        %v3733 = vmul.f32 %v3702, %v3644
        %v3734 = vmul.f32 %v3702, %v3645
        %v3735 = vmul.f32 %v3707, %v3646
        %v3736 = vmul.f32 %v3707, %v3647
        %v3737 = vmul.f32 %v3707, %v3648
        %v3738 = vmul.f32 %v3707, %v3649
        %v3739 = vmul.f32 %v3707, %v3650
        %v3740 = vmul.f32 %v3707, %v3651
        %v3741 = vmul.f32 %v3707, %v3652
        %v3742 = vmul.f32 %v3707, %v3653
        %v3743 = vmul.f32 %v3707, %v3654
        %v3744 = vmul.f32 %v3707, %v3655
        %v3745 = vmul.f32 %v3707, %v3656
        %v3746 = vmul.f32 %v3707, %v3657
        %v3747 = vmul.f32 %v3707, %v3658
        %v3748 = vmul.f32 %v3707, %v3659
        %v3749 = vmul.f32 %v3707, %v3660
        %v3750 = vmul.f32 %v3707, %v3661
        %v3751 = vmul.f32 %v3712, %v3662
        %v3752 = vmul.f32 %v3712, %v3663
        %v3753 = vmul.f32 %v3712, %v3664
        %v3754 = vmul.f32 %v3712, %v3665
        %v3755 = vmul.f32 %v3712, %v3666
        %v3756 = vmul.f32 %v3712, %v3667
        %v3757 = vmul.f32 %v3712, %v3668
        %v3758 = vmul.f32 %v3712, %v3669
        %v3759 = vmul.f32 %v3712, %v3670
        %v3760 = vmul.f32 %v3712, %v3671
        %v3761 = vmul.f32 %v3712, %v3672
        %v3762 = vmul.f32 %v3712, %v3673
        %v3763 = vmul.f32 %v3712, %v3674
        %v3764 = vmul.f32 %v3712, %v3675
        %v3765 = vmul.f32 %v3712, %v3676
        %v3766 = vmul.f32 %v3712, %v3677
        %v3767 = vmul.f32 %v3717, %v3678
        %v3768 = vmul.f32 %v3717, %v3679
        %v3769 = vmul.f32 %v3717, %v3680
        %v3770 = vmul.f32 %v3717, %v3681
        %v3771 = vmul.f32 %v3717, %v3682
        %v3772 = vmul.f32 %v3717, %v3683
        %v3773 = vmul.f32 %v3717, %v3684
        %v3774 = vmul.f32 %v3717, %v3685
        %v3775 = vmul.f32 %v3717, %v3686
        %v3776 = vmul.f32 %v3717, %v3687
        %v3777 = vmul.f32 %v3717, %v3688
        %v3778 = vmul.f32 %v3717, %v3689
        %v3779 = vmul.f32 %v3717, %v3690
        %v3780 = vmul.f32 %v3717, %v3691
        %v3781 = vmul.f32 %v3717, %v3692
        %v3782 = vmul.f32 %v3717, %v3693
        %v3783 = vadd.f32 %v3719, %v3735
        %v3784 = vadd.f32 %v3783, %v3751
        %v3785 = vadd.f32 %v3784, %v3767
        %v3786 = vrot.slane %v3785, 4
        %v3787 = vadd.f32 %v3785, %v3786
        %v3788 = vrot.slane %v3787, 2
        %v3789 = vadd.f32 %v3787, %v3788
        %v3790 = vrot.slane %v3789, 1
        %v3791 = vadd.f32 %v3789, %v3790
        %v3792 = vadd.f32 %v3720, %v3736
        %v3793 = vadd.f32 %v3792, %v3752
        %v3794 = vadd.f32 %v3793, %v3768
        %v3795 = vrot.slane %v3794, 4
        %v3796 = vadd.f32 %v3794, %v3795
        %v3797 = vrot.slane %v3796, 2
        %v3798 = vadd.f32 %v3796, %v3797
        %v3799 = vrot.slane %v3798, 1
        %v3800 = vadd.f32 %v3798, %v3799
        %v3801 = vadd.f32 %v3721, %v3737
        %v3802 = vadd.f32 %v3801, %v3753
        %v3803 = vadd.f32 %v3802, %v3769
        %v3804 = vrot.slane %v3803, 4
        %v3805 = vadd.f32 %v3803, %v3804
        %v3806 = vrot.slane %v3805, 2
        %v3807 = vadd.f32 %v3805, %v3806
        %v3808 = vrot.slane %v3807, 1
        %v3809 = vadd.f32 %v3807, %v3808
        %v3810 = vadd.f32 %v3722, %v3738
        %v3811 = vadd.f32 %v3810, %v3754
        %v3812 = vadd.f32 %v3811, %v3770
        %v3813 = vrot.slane %v3812, 4
        %v3814 = vadd.f32 %v3812, %v3813
        %v3815 = vrot.slane %v3814, 2
        %v3816 = vadd.f32 %v3814, %v3815
        %v3817 = vrot.slane %v3816, 1
        %v3818 = vadd.f32 %v3816, %v3817
        %v3819 = vadd.f32 %v3723, %v3739
        %v3820 = vadd.f32 %v3819, %v3755
        %v3821 = vadd.f32 %v3820, %v3771
        %v3822 = vrot.slane %v3821, 4
        %v3823 = vadd.f32 %v3821, %v3822
        %v3824 = vrot.slane %v3823, 2
        %v3825 = vadd.f32 %v3823, %v3824
        %v3826 = vrot.slane %v3825, 1
        %v3827 = vadd.f32 %v3825, %v3826
        %v3828 = vadd.f32 %v3724, %v3740
        %v3829 = vadd.f32 %v3828, %v3756
        %v3830 = vadd.f32 %v3829, %v3772
        %v3831 = vrot.slane %v3830, 4
        %v3832 = vadd.f32 %v3830, %v3831
        %v3833 = vrot.slane %v3832, 2
        %v3834 = vadd.f32 %v3832, %v3833
        %v3835 = vrot.slane %v3834, 1
        %v3836 = vadd.f32 %v3834, %v3835
        %v3837 = vadd.f32 %v3725, %v3741
        %v3838 = vadd.f32 %v3837, %v3757
        %v3839 = vadd.f32 %v3838, %v3773
        %v3840 = vrot.slane %v3839, 4
        %v3841 = vadd.f32 %v3839, %v3840
        %v3842 = vrot.slane %v3841, 2
        %v3843 = vadd.f32 %v3841, %v3842
        %v3844 = vrot.slane %v3843, 1
        %v3845 = vadd.f32 %v3843, %v3844
        %v3846 = vadd.f32 %v3726, %v3742
        %v3847 = vadd.f32 %v3846, %v3758
        %v3848 = vadd.f32 %v3847, %v3774
        %v3849 = vrot.slane %v3848, 4
        %v3850 = vadd.f32 %v3848, %v3849
        %v3851 = vrot.slane %v3850, 2
        %v3852 = vadd.f32 %v3850, %v3851
        %v3853 = vrot.slane %v3852, 1
        %v3854 = vadd.f32 %v3852, %v3853
        %v3855 = vadd.f32 %v3727, %v3743
        %v3856 = vadd.f32 %v3855, %v3759
        %v3857 = vadd.f32 %v3856, %v3775
        %v3858 = vrot.slane %v3857, 4
        %v3859 = vadd.f32 %v3857, %v3858
        %v3860 = vrot.slane %v3859, 2
        %v3861 = vadd.f32 %v3859, %v3860
        %v3862 = vrot.slane %v3861, 1
        %v3863 = vadd.f32 %v3861, %v3862
        %v3864 = vadd.f32 %v3728, %v3744
        %v3865 = vadd.f32 %v3864, %v3760
        %v3866 = vadd.f32 %v3865, %v3776
        %v3867 = vrot.slane %v3866, 4
        %v3868 = vadd.f32 %v3866, %v3867
        %v3869 = vrot.slane %v3868, 2
        %v3870 = vadd.f32 %v3868, %v3869
        %v3871 = vrot.slane %v3870, 1
        %v3872 = vadd.f32 %v3870, %v3871
        %v3873 = vadd.f32 %v3729, %v3745
        %v3874 = vadd.f32 %v3873, %v3761
        %v3875 = vadd.f32 %v3874, %v3777
        %v3876 = vrot.slane %v3875, 4
        %v3877 = vadd.f32 %v3875, %v3876
        %v3878 = vrot.slane %v3877, 2
        %v3879 = vadd.f32 %v3877, %v3878
        %v3880 = vrot.slane %v3879, 1
        %v3881 = vadd.f32 %v3879, %v3880
        %v3882 = vadd.f32 %v3730, %v3746
        %v3883 = vadd.f32 %v3882, %v3762
        %v3884 = vadd.f32 %v3883, %v3778
        %v3885 = vrot.slane %v3884, 4
        %v3886 = vadd.f32 %v3884, %v3885
        %v3887 = vrot.slane %v3886, 2
        %v3888 = vadd.f32 %v3886, %v3887
        %v3889 = vrot.slane %v3888, 1
        %v3890 = vadd.f32 %v3888, %v3889
        %v3891 = vadd.f32 %v3731, %v3747
        %v3892 = vadd.f32 %v3891, %v3763
        %v3893 = vadd.f32 %v3892, %v3779
        %v3894 = vrot.slane %v3893, 4
        %v3895 = vadd.f32 %v3893, %v3894
        %v3896 = vrot.slane %v3895, 2
        %v3897 = vadd.f32 %v3895, %v3896
        %v3898 = vrot.slane %v3897, 1
        %v3899 = vadd.f32 %v3897, %v3898
        %v3900 = vadd.f32 %v3732, %v3748
        %v3901 = vadd.f32 %v3900, %v3764
        %v3902 = vadd.f32 %v3901, %v3780
        %v3903 = vrot.slane %v3902, 4
        %v3904 = vadd.f32 %v3902, %v3903
        %v3905 = vrot.slane %v3904, 2
        %v3906 = vadd.f32 %v3904, %v3905
        %v3907 = vrot.slane %v3906, 1
        %v3908 = vadd.f32 %v3906, %v3907
        %v3909 = vadd.f32 %v3733, %v3749
        %v3910 = vadd.f32 %v3909, %v3765
        %v3911 = vadd.f32 %v3910, %v3781
        %v3912 = vrot.slane %v3911, 4
        %v3913 = vadd.f32 %v3911, %v3912
        %v3914 = vrot.slane %v3913, 2
        %v3915 = vadd.f32 %v3913, %v3914
        %v3916 = vrot.slane %v3915, 1
        %v3917 = vadd.f32 %v3915, %v3916
        %v3918 = vadd.f32 %v3734, %v3750
        %v3919 = vadd.f32 %v3918, %v3766
        %v3920 = vadd.f32 %v3919, %v3782
        %v3921 = vrot.slane %v3920, 4
        %v3922 = vadd.f32 %v3920, %v3921
        %v3923 = vrot.slane %v3922, 2
        %v3924 = vadd.f32 %v3922, %v3923
        %v3925 = vrot.slane %v3924, 1
        %v3926 = vadd.f32 %v3924, %v3925
        %3928 = vset.pattern.permute.xlu0 0
        %3929 = vperm.xlu0 %3928, %v3698
        %v3930 = vpop.permute.xlu0 %3929
        %v3932 = vadd.f32 %v3791, %v3930
        %v3933 = vadd.f32 %v3800, %v3930
        %v3934 = vadd.f32 %v3809, %v3930
        %v3935 = vadd.f32 %v3818, %v3930
        %v3936 = vadd.f32 %v3827, %v3930
        %v3937 = vadd.f32 %v3836, %v3930
        %v3938 = vadd.f32 %v3845, %v3930
        %v3939 = vadd.f32 %v3854, %v3930
        %v3940 = vadd.f32 %v3863, %v3930
        %v3941 = vadd.f32 %v3872, %v3930
        %v3942 = vadd.f32 %v3881, %v3930
        %v3943 = vadd.f32 %v3890, %v3930
        %v3944 = vadd.f32 %v3899, %v3930
        %v3945 = vadd.f32 %v3908, %v3930
        %v3946 = vadd.f32 %v3917, %v3930
        %v3947 = vadd.f32 %v3926, %v3930
        %v3964 = vcombine.low %v3932, %v3933
        %v3965 = vcombine.low %v3934, %v3935
        %v3966 = vcombine.low %v3936, %v3937
        %v3967 = vcombine.low %v3938, %v3939
        %v3969 = vunpack.c.l.s4 1966171168
        %v3970 = vunpack.c.0.s8 %v3969
        %v3971 = vlaneseq
        %v3972 = vshrl.u32 %v3971, 7
        %v3973 = vsub.s32 %v3970, %v3972
        %v3974 = vrot.slane %v3964, %v3973
        %v3976 = vunpack.c.l.s4 1966171168
        %v3977 = vunpack.c.0.s8 %v3976
        %v3978 = vlaneseq
        %v3979 = vshrl.u32 %v3978, 7
        %v3980 = vsub.s32 %v3977, %v3979
        %v3981 = vrot.slane %v3965, %v3980
        %v3983 = vunpack.c.l.s4 1966171168
        %v3984 = vunpack.c.0.s8 %v3983
        %v3985 = vlaneseq
        %v3986 = vshrl.u32 %v3985, 7
        %v3987 = vsub.s32 %v3984, %v3986
        %v3988 = vrot.slane %v3966, %v3987
        %v3990 = vunpack.c.l.s4 1966171168
        %v3991 = vunpack.c.0.s8 %v3990
        %v3992 = vlaneseq
        %v3993 = vshrl.u32 %v3992, 7
        %v3994 = vsub.s32 %v3991, %v3993
        %v3995 = vrot.slane %v3967, %v3994
        %v3996 = vcombine.low %v3974, %v3981
        %v3997 = vcombine.low %v3988, %v3995
        %v3999 = vunpack.c.l.s4 1966171168
        %v4000 = vunpack.c.0.s8 %v3999
        %v4001 = vlaneseq
        %v4002 = vshrl.u32 %v4001, 7
        %v4003 = vsub.s32 %v4000, %v4002
        %v4004 = vrot.slane %v3996, %v4003
        %v4006 = vunpack.c.l.s4 1966171168
        %v4007 = vunpack.c.0.s8 %v4006
        %v4008 = vlaneseq
        %v4009 = vshrl.u32 %v4008, 7
        %v4010 = vsub.s32 %v4007, %v4009
        %v4011 = vrot.slane %v3997, %v4010
        %v4012 = vcombine.low %v4004, %v4011
        %v4013 = vcombine.low %v3940, %v3941
        %v4014 = vcombine.low %v3942, %v3943
        %v4015 = vcombine.low %v3944, %v3945
        %v4016 = vcombine.low %v3946, %v3947
        %v4018 = vunpack.c.l.s4 1966171168
        %v4019 = vunpack.c.0.s8 %v4018
        %v4020 = vlaneseq
        %v4021 = vshrl.u32 %v4020, 7
        %v4022 = vsub.s32 %v4019, %v4021
        %v4023 = vrot.slane %v4013, %v4022
        %v4025 = vunpack.c.l.s4 1966171168
        %v4026 = vunpack.c.0.s8 %v4025
        %v4027 = vlaneseq
        %v4028 = vshrl.u32 %v4027, 7
        %v4029 = vsub.s32 %v4026, %v4028
        %v4030 = vrot.slane %v4014, %v4029
        %v4032 = vunpack.c.l.s4 1966171168
        %v4033 = vunpack.c.0.s8 %v4032
        %v4034 = vlaneseq
        %v4035 = vshrl.u32 %v4034, 7
        %v4036 = vsub.s32 %v4033, %v4035
        %v4037 = vrot.slane %v4015, %v4036
        %v4039 = vunpack.c.l.s4 1966171168
        %v4040 = vunpack.c.0.s8 %v4039
        %v4041 = vlaneseq
        %v4042 = vshrl.u32 %v4041, 7
        %v4043 = vsub.s32 %v4040, %v4042
        %v4044 = vrot.slane %v4016, %v4043
        %v4045 = vcombine.low %v4023, %v4030
        %v4046 = vcombine.low %v4037, %v4044
        %v4048 = vunpack.c.l.s4 1966171168
        %v4049 = vunpack.c.0.s8 %v4048
        %v4050 = vlaneseq
        %v4051 = vshrl.u32 %v4050, 7
        %v4052 = vsub.s32 %v4049, %v4051
        %v4053 = vrot.slane %v4045, %v4052
        %v4055 = vunpack.c.l.s4 1966171168
        %v4056 = vunpack.c.0.s8 %v4055
        %v4057 = vlaneseq
        %v4058 = vshrl.u32 %v4057, 7
        %v4059 = vsub.s32 %v4056, %v4058
        %v4060 = vrot.slane %v4046, %v4059
        %v4061 = vcombine.low %v4053, %v4060
        %4064 = vst [vmem:[%s218] sm:$0xff] %v4012
        %4065 = vst [vmem:[%s218 + $0x8] sm:$0xff] %v4061
        %s4066 = sand.u32 %s137, 1
        %s4067 = scalar_lea.sflag [#allocation3], %s4066
        %s4068 = sand.u32 %s137, 1
        %s4069 = smul.addr %s4068, 16
        %s4070 = scalar_lea.vmem [#allocation2], %s4069
        // Predicated region
        $region41: #{tpu_custom_call.1} parent=39 // pred_check
          %p4071 = pneg %p147
        $region42: #{tpu_custom_call.1} parent=39 // pred_check_branch
          %4073 = sbr.rel (%p4071) target = $region44
        $region43: #{tpu_custom_call.1} parent=39 // pred_region
          %s4074 = smul.u32 16, %s19
          %s4076 = ssub.s32 256, 256
          %4077 = vsyncadd %s4067, %s4076
          %s4078 = smul.addr %s4074, 16
          %s4079 = scalar_lea.hbm %s5, %s4078
          %s4081 = sshll.u32 %s4070, 4
          %s4082 = int_to_ptr.vmem [resolvable:$true] %s4081
          %4084 = dma.vmem_to_hbm [thread:$0]  %s4082, 256, %s4079, %s4067
        $region44: #{tpu_custom_call.1} parent=39 // pred_fallthru
          _
      $region40: #{tpu_custom_call.1} parent=5 // pred_fallthru
        _
      %p4085 = scmp.le.s32.totalorder 2, %s14
      // Predicated region
      $region45: #{tpu_custom_call.1} parent=5 // pred_check
        %p4086 = pneg %p4085
      $region46: #{tpu_custom_call.1} parent=5 // pred_check_branch
        %4088 = sbr.rel (%p4086) target = $region48
      $region47: #{tpu_custom_call.1} parent=5 // pred_region
        %s4089 = ssub.s32 %s14, 2
        // Predicated region
        $region49: #{tpu_custom_call.1} parent=47 // pred_check
          %p4090 = pneg %p153
        $region50: #{tpu_custom_call.1} parent=47 // pred_check_branch
          %4092 = sbr.rel (%p4090) target = $region52
        $region51: #{tpu_custom_call.1} parent=47 // pred_region
          %s4093 = sand.u32 %s138, 1
          %s4094 = scalar_lea.sflag [#allocation3], %s4093
          %s4095 = sand.u32 %s138, 1
          %s4096 = smul.addr %s4095, 16
          %s4097 = scalar_lea.vmem [#allocation2], %s4096
          %4098 = dma.done %s4094, 256
        $region52: #{tpu_custom_call.1} parent=47 // pred_fallthru
          _
      $region48: #{tpu_custom_call.1} parent=5 // pred_fallthru
        _
    $region6: #{tpu_custom_call.1} parent=1 // loop_footer
      %s18 = sadd.s32 1, %s14
    $region7: #{tpu_custom_call.1} parent=1 // loop_footer_branch
      %13 = sbr.rel target = $region3
    $region8: #{tpu_custom_call.1} parent=1 // loop_exit
      _
    %4099 = vsyncpa [#allocation3], 1
    %s4100 = scalar_lea.sflag [#allocation3], 1
    %4101 = vsyncpa %s4100, 1

</llo_original>
